<compile_context>
chip_gen: v7x
topology: tpu7x:2x2x1
jax: 0.10.0
libtpu: 0.0.40
codegen_flags: <defaults>
</compile_context>

<pallas_src>
import functools

import numpy as np
import jax
import jax.numpy as jnp
from jax import lax
from jax.experimental import pallas as pl
from jax.experimental.pallas import tpu as pltpu


# -----------------------------------------------------------------------------
# Host-side replica of Surface_Event_Sample (index sampling only; its quantized
# xy output is discarded by Sample_Group.forward).
# TODO(synk): torch.randint replaced by a deterministic numpy RandomState; the
# voxel-histogram / np.unique / random resampling is data-dependent host logic
# with no clean Pallas equivalent (the original module also runs it on CPU).
# -----------------------------------------------------------------------------
def surface_event_sample_indices(xy_np, nevent, dim=(256, 256), seed=0):
    B, N, _ = xy_np.shape
    W, H = dim
    q = (xy_np * (min(dim) - 1)).astype(np.int32)
    rng = np.random.RandomState(seed)
    out = np.zeros((B, nevent), dtype=np.int32)
    for bi in range(B):
        x = q[bi, :, 0]
        y = q[bi, :, 1]
        vox = np.zeros((H, W), dtype=np.int64)
        np.add.at(vox, (y, x), 1)
        counts = vox[y, x]
        idx1 = np.where(counts == 1)[0]
        idx2 = np.where(counts > 1)[0]
        enc = x[idx2] + y[idx2] * 10000
        _, loc = np.unique(enc, return_index=True)
        idx3 = idx2[loc]
        idx_unique = np.concatenate([idx1, idx3])
        out[bi] = idx_unique[rng.randint(0, len(idx_unique), size=nevent)].astype(np.int32)
    return out


# -----------------------------------------------------------------------------
# Pallas kernel: one grid step per BATCH BLOCK (bblk batch elements per step).
# -----------------------------------------------------------------------------
def _sample_group_kernel(fps_ref, feats_ref, xyt_ref, alpha_ref, beta_ref,
                         new_xy_ref, new_ev_ref, *, radius, nsample, n_event_ch):
    f32 = jnp.float32
    i32 = jnp.int32
    hi = lax.Precision.HIGHEST

    bblk, s, _ = fps_ref.shape          # [Bblk, S, 1]
    n = feats_ref.shape[1]              # points per batch element
    cout = feats_ref.shape[2]           # Ce + C
    c_dim = xyt_ref.shape[1]            # C (coords)
    ce = n_event_ch
    ns = nsample

    all_feats = feats_ref[...]          # [Bblk, N, Cout] f32 (events ++ xy)
    xy_t = xyt_ref[...]                 # [Bblk, C, N]    f32 (pre-transposed)

    # ---- index_events(xy, fps_idx): one-hot MXU gather of the query rows ----
    lane_i = lax.broadcasted_iota(i32, (bblk, s, n), 2)                 # [Bblk,S,N]
    onehot_fps = (lane_i == fps_ref[...]).astype(f32)                   # [Bblk,S,N]
    q_feats = jnp.einsum('bsn,bnc->bsc', onehot_fps, all_feats,
                         preferred_element_type=f32, precision=hi)      # exact gather
    new_xy = q_feats[:, :, ce:ce + c_dim]                               # [Bblk,S,C]

    # ---- square_distance(new_xy, xy) = -2 q.k + |q|^2 + |k|^2 ---------------
    # Contraction dim is tiny (C=2): pure-VPU broadcast form, lane-dense over N
    # (no MXU transpose matmul needed).
    qc = new_xy[:, :, 0:1]                                              # [Bblk,S,1]
    kc = xy_t[:, 0:1, :]                                                # [Bblk,1,N]
    cross = qc * kc
    sq_new = qc * qc
    sq_all = kc * kc
    for c in range(1, c_dim):
        qc = new_xy[:, :, c:c + 1]
        kc = xy_t[:, c:c + 1, :]
        cross = cross + qc * kc
        sq_new = sq_new + qc * qc
        sq_all = sq_all + kc * kc
    sqrdists = sq_new + sq_all - 2.0 * cross                            # [Bblk,S,N]

    # ---- research_circle: peel the nsample smallest in-radius indices -------
    # No [N,N] tri matrix: slot j is the j-th smallest valid lane index,
    # extracted by a lane-min reduce on the remaining valid set; fall back to
    # the first valid point (the query itself is always within radius).
    valid = sqrdists <= f32(radius * radius)                            # [Bblk,S,N]
    lane_f = lane_i.astype(f32)
    big = f32(n)
    remaining = valid
    slot_oh = []
    oh_first = None
    for j in range(ns):
        cand = jnp.where(remaining, lane_f, big)
        first = jnp.min(cand, axis=-1, keepdims=True)                   # [Bblk,S,1]
        ohj = (lane_f == first).astype(f32)                             # one-hot (or 0s)
        if j == 0:
            oh_first = ohj
            slot_oh.append(ohj)
        else:
            slot_oh.append(jnp.where(first < big, ohj, oh_first))       # fallback
        remaining = jnp.logical_and(remaining, lane_f != first)

    # ---- grouped gather: ONE stacked MXU matmul for all slots & channels ----
    onehot_stk = jnp.concatenate(slot_oh, axis=1)                       # [Bblk, NS*S, N]
    feats = jnp.einsum('bmn,bnc->bmc', onehot_stk, all_feats,
                       preferred_element_type=f32, precision=hi)        # [Bblk, NS*S, Cout]
    # TODO(synk): precision=HIGH would halve MXU passes here once re-validated.

    # ---- Normalize('center'): mean over nsample, per-batch unbiased std -----
    slot_feats = [feats[:, j * s:(j + 1) * s, :] for j in range(ns)]    # NS x [Bblk,S,Cout]
    mean = slot_feats[0]
    for j in range(1, ns):
        mean = mean + slot_feats[j]
    mean = mean * f32(1.0 / ns)                                         # [Bblk,S,Cout]
    centered = [sf - mean for sf in slot_feats]

    sum_c = centered[0]
    sum_c2 = centered[0] * centered[0]
    for j in range(1, ns):
        sum_c = sum_c + centered[j]
        sum_c2 = sum_c2 + centered[j] * centered[j]
    tot = jnp.sum(jnp.sum(sum_c, axis=2, keepdims=True), axis=1, keepdims=True)   # [Bblk,1,1]
    ssq = jnp.sum(jnp.sum(sum_c2, axis=2, keepdims=True), axis=1, keepdims=True)  # [Bblk,1,1]
    n_el = ns * s * cout
    var = (ssq - tot * tot * f32(1.0 / n_el)) * f32(1.0 / (n_el - 1))   # torch.std (ddof=1)
    std = jnp.sqrt(jnp.maximum(var, 0.0))
    inv = 1.0 / (std + f32(1e-5))                                       # [Bblk,1,1]

    scale = alpha_ref[...] * inv                                        # [Bblk,1,Cout]
    shift = beta_ref[...]                                               # [1,Cout]
    outs = [centered[j] * scale + shift for j in range(ns)]             # NS x [Bblk,S,Cout]

    # query-major flat slab: lane chunk j*Cout..(j+1)*Cout of query s = slot j
    out_flat = jnp.concatenate(outs, axis=-1)                           # [Bblk,S,NS*Cout]
    new_ev_ref[...] = out_flat.astype(new_ev_ref.dtype)                 # single store
    new_xy_ref[...] = new_xy.astype(new_xy_ref.dtype)


def _pick_batch_block(b, n, s, ns, cout, c, vmem_budget_bytes=8 << 20):
    """Largest divisor of B whose rough per-step f32 working set fits the budget."""
    per_b = 4 * (3 * n * (cout + c) + (ns + 8) * s * n + 4 * ns * s * cout)
    cap = max(1, vmem_budget_bytes // max(per_b, 1))
    bblk = 1
    for d in range(1, b + 1):
        if b % d == 0 and d <= cap:
            bblk = d
    return bblk


def sample_group_forward(xy, events, fps_idx, alpha, beta, *, radius, nsample):
    """Sample_Group.forward given precomputed fps_idx (normalize='center')."""
    b, n, c = xy.shape
    ce = events.shape[-1]
    s = fps_idx.shape[-1]
    cout = ce + c

    fps3 = fps_idx.astype(jnp.int32).reshape(b, s, 1)
    all_feats = jnp.concatenate(
        [events.astype(jnp.float32), xy.astype(jnp.float32)], axis=-1)       # [B,N,Cout]
    xy_t = jnp.transpose(xy.astype(jnp.float32), (0, 2, 1))                  # [B,C,N]
    alpha2 = jnp.reshape(alpha, (1, cout)).astype(jnp.float32)
    beta2 = jnp.reshape(beta, (1, cout)).astype(jnp.float32)

    bblk = _pick_batch_block(b, n, s, nsample, cout, c)
    grid = (b // bblk,)

    kernel = functools.partial(_sample_group_kernel, radius=radius,
                               nsample=nsample, n_event_ch=ce)
    new_xy, new_ev_flat = pl.pallas_call(
        kernel,
        out_shape=(jax.ShapeDtypeStruct((b, s, c), jnp.float32),
                   jax.ShapeDtypeStruct((b, s, nsample * cout), jnp.float32)),
        grid_spec=pltpu.PrefetchScalarGridSpec(
            num_scalar_prefetch=0,
            grid=grid,
            in_specs=[
                pl.BlockSpec((bblk, s, 1), lambda i: (i, 0, 0)),      # fps indices (int32)
                pl.BlockSpec((bblk, n, cout), lambda i: (i, 0, 0)),   # events ++ xy
                pl.BlockSpec((bblk, c, n), lambda i: (i, 0, 0)),      # xy transposed
                pl.BlockSpec((1, cout), lambda i: (0, 0)),            # alpha
                pl.BlockSpec((1, cout), lambda i: (0, 0)),            # beta
            ],
            out_specs=[
                pl.BlockSpec((bblk, s, c), lambda i: (i, 0, 0)),
                pl.BlockSpec((bblk, s, nsample * cout), lambda i: (i, 0, 0)),
            ],
        ),
        compiler_params=pltpu.CompilerParams(
            dimension_semantics=("parallel",)),                       # megacore-shardable
    )(fps3, all_feats, xy_t, alpha2, beta2)

    # query-major slab -> PyTorch layout with a FREE reshape (no transpose pass)
    new_events = new_ev_flat.reshape(b, s, nsample, cout)
    return new_xy, new_events


# -----------------------------------------------------------------------------
# Pure-numpy reference of Sample_Group.forward (given fps_idx).
# -----------------------------------------------------------------------------
def sample_group_reference(xy, events, fps_idx, alpha, beta, radius, nsample):
    xy = np.asarray(xy, np.float32)
    events = np.asarray(events, np.float32)
    fps_idx = np.asarray(fps_idx)
    alpha = np.asarray(alpha, np.float32)
    beta = np.asarray(beta, np.float32)
    B, N, C = xy.shape
    S = fps_idx.shape[1]
    Ce = events.shape[2]
    Cout = Ce + C

    new_xy = np.stack([xy[b][fps_idx[b]] for b in range(B)], axis=0)        # [B,S,C]
    d = (-2.0 * np.einsum('bsc,bnc->bsn', new_xy, xy)
         + np.sum(new_xy ** 2, -1)[:, :, None]
         + np.sum(xy ** 2, -1)[:, None, :])
    group_idx = np.broadcast_to(np.arange(N)[None, None, :], (B, S, N)).copy()
    group_idx[d > radius ** 2] = N
    group_idx = np.sort(group_idx, axis=-1)[:, :, :nsample]
    first = group_idx[:, :, 0:1]
    group_idx = np.where(group_idx == N, np.broadcast_to(first, group_idx.shape), group_idx)

    grouped_xy = np.stack([xy[b][group_idx[b]] for b in range(B)], axis=0)      # [B,S,ns,C]
    grouped_ev = np.stack([events[b][group_idx[b]] for b in range(B)], axis=0)  # [B,S,ns,Ce]
    grouped = np.concatenate([grouped_ev, grouped_xy], axis=-1)                 # [B,S,ns,Cout]
    mean = grouped.mean(axis=2, keepdims=True)
    centered = grouped - mean
    std = centered.reshape(B, -1).std(axis=-1, ddof=1)[:, None, None, None]
    normed = centered / (std + 1e-5)
    out = alpha.reshape(1, 1, 1, Cout) * normed + beta.reshape(1, 1, 1, Cout)
    return new_xy, out.astype(np.float32)


if __name__ == "__main__":
    key = jax.random.PRNGKey(0)
    B, N = 2, 64
    Ce = 4                       # raw event feature channels
    nevent, nsample = 8, 8
    radius = 0.25
    channel = Ce + 2             # Normalize channel (events ++ xy), as in Sample_Group

    k1, k2, k3, k4 = jax.random.split(key, 4)
    xy = jax.random.uniform(k1, (B, N, 2), dtype=jnp.float32)        # coords in [0, 1)
    events = jax.random.normal(k2, (B, N, Ce), dtype=jnp.float32)
    # Normalize params (module shape [1,1,1,channel]); deterministic non-trivial init
    alpha = 1.0 + 0.1 * jax.random.normal(k3, (1, channel), dtype=jnp.float32)
    beta = 0.1 * jax.random.normal(k4, (1, channel), dtype=jnp.float32)

    xy_np = np.asarray(xy)
    fps_idx = jnp.asarray(
        surface_event_sample_indices(xy_np, nevent, dim=(256, 256), seed=0))

    new_xy, new_events = sample_group_forward(
        xy, events, fps_idx, alpha, beta, radius=radius, nsample=nsample)
    jax.block_until_ready((new_xy, new_events))

    ref_xy, ref_events = sample_group_reference(
        xy_np, np.asarray(events), np.asarray(fps_idx),
        np.asarray(alpha), np.asarray(beta), radius, nsample)

    assert new_xy.shape == (B, nevent, 2)
    assert new_events.shape == (B, nevent, nsample, channel)
    np.testing.assert_allclose(np.asarray(new_xy), ref_xy, atol=1e-5, rtol=1e-5)
    np.testing.assert_allclose(np.asarray(new_events), ref_events, atol=5e-3, rtol=1e-2)
    print("KERNEL_OK")
</pallas_src>

<mosaic_0001>
module attributes {stable_mosaic.version = 11 : i64} {
  func.func @_sample_group_kernel(%arg0: i32, %arg1: memref<2x8x1xi32, #tpu.memory_space<vmem>>, %arg2: memref<2x64x6xf32, #tpu.memory_space<vmem>>, %arg3: memref<2x2x64xf32, #tpu.memory_space<vmem>>, %arg4: memref<1x6xf32, #tpu.memory_space<vmem>>, %arg5: memref<1x6xf32, #tpu.memory_space<vmem>>, %arg6: memref<2x8x2xf32, #tpu.memory_space<vmem>>, %arg7: memref<2x8x48xf32, #tpu.memory_space<vmem>>) attributes {dimension_semantics = [#tpu.dimension_semantics<parallel>], iteration_bounds = array<i64: 1>, scalar_prefetch = 0 : i64, scratch_operands = 0 : i64, tpu.core_type = #tpu.core_type<tc>, window_params = [{transform_indices = @transform_0, window_bounds = array<i64: 2, 8, 1>}, {transform_indices = @transform_1, window_bounds = array<i64: 2, 64, 6>}, {transform_indices = @transform_2, window_bounds = array<i64: 2, 2, 64>}, {pipeline_mode = #tpu.pipeline_mode<synchronous>, transform_indices = @transform_3, window_bounds = array<i64: 1, 6>}, {pipeline_mode = #tpu.pipeline_mode<synchronous>, transform_indices = @transform_4, window_bounds = array<i64: 1, 6>}, {transform_indices = @transform_5, window_bounds = array<i64: 2, 8, 2>}, {transform_indices = @transform_6, window_bounds = array<i64: 2, 8, 48>}]} {
    %c0 = arith.constant 0 : index
    %c0_0 = arith.constant 0 : index
    %c0_1 = arith.constant 0 : index
    %0 = vector.load %arg2[%c0, %c0_0, %c0_1] : memref<2x64x6xf32, #tpu.memory_space<vmem>>, vector<2x64x6xf32>
    %c0_2 = arith.constant 0 : index
    %c0_3 = arith.constant 0 : index
    %c0_4 = arith.constant 0 : index
    %1 = vector.load %arg3[%c0_2, %c0_3, %c0_4] : memref<2x2x64xf32, #tpu.memory_space<vmem>>, vector<2x2x64xf32>
    %2 = tpu.iota {dimensions = array<i32: 2>} : vector<2x8x64xi32>
    %c0_5 = arith.constant 0 : index
    %c0_6 = arith.constant 0 : index
    %c0_7 = arith.constant 0 : index
    %3 = vector.load %arg1[%c0_5, %c0_6, %c0_7] : memref<2x8x1xi32, #tpu.memory_space<vmem>>, vector<2x8x1xi32>
    %4 = vector.broadcast %3 : vector<2x8x1xi32> to vector<2x8x64xi32>
    %5 = arith.cmpi eq, %2, %4 : vector<2x8x64xi32>
    %6 = arith.extui %5 : vector<2x8x64xi1> to vector<2x8x64xi32>
    %7 = arith.sitofp %6 : vector<2x8x64xi32> to vector<2x8x64xf32>
    "tpu.trace_start"() <{level = 10 : i32, message = "bsn,bnc->bsc"}> : () -> ()
    %cst = arith.constant dense<0.000000e+00> : vector<2x8x6xf32>
    %8 = tpu.matmul %7, %0, %cst {dimension_numbers = #tpu.dot_dimension_numbers<[2], [1], [1], [2], [0, 0, 0, 1, 1, 2], [0], [0]>, precision = #tpu.contract_precision<fp32>} : vector<2x8x64xf32>, vector<2x64x6xf32>, vector<2x8x6xf32> -> vector<2x8x6xf32>
    "tpu.trace_stop"() : () -> ()
    %9 = vector.extract_strided_slice %8 {offsets = [0, 0, 4], sizes = [2, 8, 2], strides = [1, 1, 1]} : vector<2x8x6xf32> to vector<2x8x2xf32>
    %10 = vector.extract_strided_slice %9 {offsets = [0, 0, 0], sizes = [2, 8, 1], strides = [1, 1, 1]} : vector<2x8x2xf32> to vector<2x8x1xf32>
    %11 = vector.extract_strided_slice %1 {offsets = [0, 0, 0], sizes = [2, 1, 64], strides = [1, 1, 1]} : vector<2x2x64xf32> to vector<2x1x64xf32>
    %12 = vector.broadcast %10 : vector<2x8x1xf32> to vector<2x8x64xf32>
    %13 = vector.broadcast %11 : vector<2x1x64xf32> to vector<2x8x64xf32>
    %14 = arith.mulf %12, %13 : vector<2x8x64xf32>
    %15 = arith.mulf %10, %10 : vector<2x8x1xf32>
    %16 = arith.mulf %11, %11 : vector<2x1x64xf32>
    %17 = vector.extract_strided_slice %9 {offsets = [0, 0, 1], sizes = [2, 8, 1], strides = [1, 1, 1]} : vector<2x8x2xf32> to vector<2x8x1xf32>
    %18 = vector.extract_strided_slice %1 {offsets = [0, 1, 0], sizes = [2, 1, 64], strides = [1, 1, 1]} : vector<2x2x64xf32> to vector<2x1x64xf32>
    %19 = vector.broadcast %17 : vector<2x8x1xf32> to vector<2x8x64xf32>
    %20 = vector.broadcast %18 : vector<2x1x64xf32> to vector<2x8x64xf32>
    %21 = arith.mulf %19, %20 : vector<2x8x64xf32>
    %22 = arith.addf %14, %21 : vector<2x8x64xf32>
    %23 = arith.mulf %17, %17 : vector<2x8x1xf32>
    %24 = arith.addf %15, %23 : vector<2x8x1xf32>
    %25 = arith.mulf %18, %18 : vector<2x1x64xf32>
    %26 = arith.addf %16, %25 : vector<2x1x64xf32>
    %27 = vector.broadcast %24 : vector<2x8x1xf32> to vector<2x8x64xf32>
    %28 = vector.broadcast %26 : vector<2x1x64xf32> to vector<2x8x64xf32>
    %29 = arith.addf %27, %28 : vector<2x8x64xf32>
    %cst_8 = arith.constant 2.000000e+00 : f32
    %30 = vector.broadcast %cst_8 : f32 to vector<2x8x64xf32>
    %31 = arith.mulf %30, %22 : vector<2x8x64xf32>
    %32 = arith.subf %29, %31 : vector<2x8x64xf32>
    %cst_9 = arith.constant 6.250000e-02 : f32
    %33 = vector.broadcast %cst_9 : f32 to vector<2x8x64xf32>
    %34 = arith.cmpf ole, %32, %33 : vector<2x8x64xf32>
    %35 = arith.sitofp %2 : vector<2x8x64xi32> to vector<2x8x64xf32>
    %cst_10 = arith.constant 6.400000e+01 : f32
    %36 = vector.broadcast %cst_10 : f32 to vector<2x8x64xf32>
    %37 = arith.select %34, %35, %36 : vector<2x8x64xi1>, vector<2x8x64xf32>
    %cst_11 = arith.constant dense<0x7F800000> : vector<2x8xf32>
    %38 = vector.multi_reduction <minimumf>, %37, %cst_11 [2] : vector<2x8x64xf32> to vector<2x8xf32>
    %39 = vector.shape_cast %38 : vector<2x8xf32> to vector<2x8x1xf32>
    %40 = vector.broadcast %39 : vector<2x8x1xf32> to vector<2x8x64xf32>
    %41 = arith.cmpf oeq, %35, %40 : vector<2x8x64xf32>
    %42 = arith.extui %41 : vector<2x8x64xi1> to vector<2x8x64xi32>
    %43 = arith.sitofp %42 : vector<2x8x64xi32> to vector<2x8x64xf32>
    %44 = vector.broadcast %39 : vector<2x8x1xf32> to vector<2x8x64xf32>
    %45 = arith.cmpf one, %35, %44 : vector<2x8x64xf32>
    %46 = arith.andi %34, %45 : vector<2x8x64xi1>
    %cst_12 = arith.constant 6.400000e+01 : f32
    %47 = vector.broadcast %cst_12 : f32 to vector<2x8x64xf32>
    %48 = arith.select %46, %35, %47 : vector<2x8x64xi1>, vector<2x8x64xf32>
    %cst_13 = arith.constant dense<0x7F800000> : vector<2x8xf32>
    %49 = vector.multi_reduction <minimumf>, %48, %cst_13 [2] : vector<2x8x64xf32> to vector<2x8xf32>
    %50 = vector.shape_cast %49 : vector<2x8xf32> to vector<2x8x1xf32>
    %51 = vector.broadcast %50 : vector<2x8x1xf32> to vector<2x8x64xf32>
    %52 = arith.cmpf oeq, %35, %51 : vector<2x8x64xf32>
    %53 = arith.extui %52 : vector<2x8x64xi1> to vector<2x8x64xi32>
    %54 = arith.sitofp %53 : vector<2x8x64xi32> to vector<2x8x64xf32>
    %cst_14 = arith.constant 6.400000e+01 : f32
    %55 = vector.broadcast %cst_14 : f32 to vector<2x8x1xf32>
    %56 = arith.cmpf olt, %50, %55 : vector<2x8x1xf32>
    %57 = vector.shape_cast %56 : vector<2x8x1xi1> to vector<2x8x1xi1>
    %58 = vector.broadcast %57 : vector<2x8x1xi1> to vector<2x8x64xi1>
    %59 = arith.select %58, %54, %43 : vector<2x8x64xi1>, vector<2x8x64xf32>
    %60 = vector.broadcast %50 : vector<2x8x1xf32> to vector<2x8x64xf32>
    %61 = arith.cmpf one, %35, %60 : vector<2x8x64xf32>
    %62 = arith.andi %46, %61 : vector<2x8x64xi1>
    %cst_15 = arith.constant 6.400000e+01 : f32
    %63 = vector.broadcast %cst_15 : f32 to vector<2x8x64xf32>
    %64 = arith.select %62, %35, %63 : vector<2x8x64xi1>, vector<2x8x64xf32>
    %cst_16 = arith.constant dense<0x7F800000> : vector<2x8xf32>
    %65 = vector.multi_reduction <minimumf>, %64, %cst_16 [2] : vector<2x8x64xf32> to vector<2x8xf32>
    %66 = vector.shape_cast %65 : vector<2x8xf32> to vector<2x8x1xf32>
    %67 = vector.broadcast %66 : vector<2x8x1xf32> to vector<2x8x64xf32>
    %68 = arith.cmpf oeq, %35, %67 : vector<2x8x64xf32>
    %69 = arith.extui %68 : vector<2x8x64xi1> to vector<2x8x64xi32>
    %70 = arith.sitofp %69 : vector<2x8x64xi32> to vector<2x8x64xf32>
    %cst_17 = arith.constant 6.400000e+01 : f32
    %71 = vector.broadcast %cst_17 : f32 to vector<2x8x1xf32>
    %72 = arith.cmpf olt, %66, %71 : vector<2x8x1xf32>
    %73 = vector.shape_cast %72 : vector<2x8x1xi1> to vector<2x8x1xi1>
    %74 = vector.broadcast %73 : vector<2x8x1xi1> to vector<2x8x64xi1>
    %75 = arith.select %74, %70, %43 : vector<2x8x64xi1>, vector<2x8x64xf32>
    %76 = vector.broadcast %66 : vector<2x8x1xf32> to vector<2x8x64xf32>
    %77 = arith.cmpf one, %35, %76 : vector<2x8x64xf32>
    %78 = arith.andi %62, %77 : vector<2x8x64xi1>
    %cst_18 = arith.constant 6.400000e+01 : f32
    %79 = vector.broadcast %cst_18 : f32 to vector<2x8x64xf32>
    %80 = arith.select %78, %35, %79 : vector<2x8x64xi1>, vector<2x8x64xf32>
    %cst_19 = arith.constant dense<0x7F800000> : vector<2x8xf32>
    %81 = vector.multi_reduction <minimumf>, %80, %cst_19 [2] : vector<2x8x64xf32> to vector<2x8xf32>
    %82 = vector.shape_cast %81 : vector<2x8xf32> to vector<2x8x1xf32>
    %83 = vector.broadcast %82 : vector<2x8x1xf32> to vector<2x8x64xf32>
    %84 = arith.cmpf oeq, %35, %83 : vector<2x8x64xf32>
    %85 = arith.extui %84 : vector<2x8x64xi1> to vector<2x8x64xi32>
    %86 = arith.sitofp %85 : vector<2x8x64xi32> to vector<2x8x64xf32>
    %cst_20 = arith.constant 6.400000e+01 : f32
    %87 = vector.broadcast %cst_20 : f32 to vector<2x8x1xf32>
    %88 = arith.cmpf olt, %82, %87 : vector<2x8x1xf32>
    %89 = vector.shape_cast %88 : vector<2x8x1xi1> to vector<2x8x1xi1>
    %90 = vector.broadcast %89 : vector<2x8x1xi1> to vector<2x8x64xi1>
    %91 = arith.select %90, %86, %43 : vector<2x8x64xi1>, vector<2x8x64xf32>
    %92 = vector.broadcast %82 : vector<2x8x1xf32> to vector<2x8x64xf32>
    %93 = arith.cmpf one, %35, %92 : vector<2x8x64xf32>
    %94 = arith.andi %78, %93 : vector<2x8x64xi1>
    %cst_21 = arith.constant 6.400000e+01 : f32
    %95 = vector.broadcast %cst_21 : f32 to vector<2x8x64xf32>
    %96 = arith.select %94, %35, %95 : vector<2x8x64xi1>, vector<2x8x64xf32>
    %cst_22 = arith.constant dense<0x7F800000> : vector<2x8xf32>
    %97 = vector.multi_reduction <minimumf>, %96, %cst_22 [2] : vector<2x8x64xf32> to vector<2x8xf32>
    %98 = vector.shape_cast %97 : vector<2x8xf32> to vector<2x8x1xf32>
    %99 = vector.broadcast %98 : vector<2x8x1xf32> to vector<2x8x64xf32>
    %100 = arith.cmpf oeq, %35, %99 : vector<2x8x64xf32>
    %101 = arith.extui %100 : vector<2x8x64xi1> to vector<2x8x64xi32>
    %102 = arith.sitofp %101 : vector<2x8x64xi32> to vector<2x8x64xf32>
    %cst_23 = arith.constant 6.400000e+01 : f32
    %103 = vector.broadcast %cst_23 : f32 to vector<2x8x1xf32>
    %104 = arith.cmpf olt, %98, %103 : vector<2x8x1xf32>
    %105 = vector.shape_cast %104 : vector<2x8x1xi1> to vector<2x8x1xi1>
    %106 = vector.broadcast %105 : vector<2x8x1xi1> to vector<2x8x64xi1>
    %107 = arith.select %106, %102, %43 : vector<2x8x64xi1>, vector<2x8x64xf32>
    %108 = vector.broadcast %98 : vector<2x8x1xf32> to vector<2x8x64xf32>
    %109 = arith.cmpf one, %35, %108 : vector<2x8x64xf32>
    %110 = arith.andi %94, %109 : vector<2x8x64xi1>
    %cst_24 = arith.constant 6.400000e+01 : f32
    %111 = vector.broadcast %cst_24 : f32 to vector<2x8x64xf32>
    %112 = arith.select %110, %35, %111 : vector<2x8x64xi1>, vector<2x8x64xf32>
    %cst_25 = arith.constant dense<0x7F800000> : vector<2x8xf32>
    %113 = vector.multi_reduction <minimumf>, %112, %cst_25 [2] : vector<2x8x64xf32> to vector<2x8xf32>
    %114 = vector.shape_cast %113 : vector<2x8xf32> to vector<2x8x1xf32>
    %115 = vector.broadcast %114 : vector<2x8x1xf32> to vector<2x8x64xf32>
    %116 = arith.cmpf oeq, %35, %115 : vector<2x8x64xf32>
    %117 = arith.extui %116 : vector<2x8x64xi1> to vector<2x8x64xi32>
    %118 = arith.sitofp %117 : vector<2x8x64xi32> to vector<2x8x64xf32>
    %cst_26 = arith.constant 6.400000e+01 : f32
    %119 = vector.broadcast %cst_26 : f32 to vector<2x8x1xf32>
    %120 = arith.cmpf olt, %114, %119 : vector<2x8x1xf32>
    %121 = vector.shape_cast %120 : vector<2x8x1xi1> to vector<2x8x1xi1>
    %122 = vector.broadcast %121 : vector<2x8x1xi1> to vector<2x8x64xi1>
    %123 = arith.select %122, %118, %43 : vector<2x8x64xi1>, vector<2x8x64xf32>
    %124 = vector.broadcast %114 : vector<2x8x1xf32> to vector<2x8x64xf32>
    %125 = arith.cmpf one, %35, %124 : vector<2x8x64xf32>
    %126 = arith.andi %110, %125 : vector<2x8x64xi1>
    %cst_27 = arith.constant 6.400000e+01 : f32
    %127 = vector.broadcast %cst_27 : f32 to vector<2x8x64xf32>
    %128 = arith.select %126, %35, %127 : vector<2x8x64xi1>, vector<2x8x64xf32>
    %cst_28 = arith.constant dense<0x7F800000> : vector<2x8xf32>
    %129 = vector.multi_reduction <minimumf>, %128, %cst_28 [2] : vector<2x8x64xf32> to vector<2x8xf32>
    %130 = vector.shape_cast %129 : vector<2x8xf32> to vector<2x8x1xf32>
    %131 = vector.broadcast %130 : vector<2x8x1xf32> to vector<2x8x64xf32>
    %132 = arith.cmpf oeq, %35, %131 : vector<2x8x64xf32>
    %133 = arith.extui %132 : vector<2x8x64xi1> to vector<2x8x64xi32>
    %134 = arith.sitofp %133 : vector<2x8x64xi32> to vector<2x8x64xf32>
    %cst_29 = arith.constant 6.400000e+01 : f32
    %135 = vector.broadcast %cst_29 : f32 to vector<2x8x1xf32>
    %136 = arith.cmpf olt, %130, %135 : vector<2x8x1xf32>
    %137 = vector.shape_cast %136 : vector<2x8x1xi1> to vector<2x8x1xi1>
    %138 = vector.broadcast %137 : vector<2x8x1xi1> to vector<2x8x64xi1>
    %139 = arith.select %138, %134, %43 : vector<2x8x64xi1>, vector<2x8x64xf32>
    %140 = vector.broadcast %130 : vector<2x8x1xf32> to vector<2x8x64xf32>
    %141 = arith.cmpf one, %35, %140 : vector<2x8x64xf32>
    %142 = arith.andi %126, %141 : vector<2x8x64xi1>
    %cst_30 = arith.constant 6.400000e+01 : f32
    %143 = vector.broadcast %cst_30 : f32 to vector<2x8x64xf32>
    %144 = arith.select %142, %35, %143 : vector<2x8x64xi1>, vector<2x8x64xf32>
    %cst_31 = arith.constant dense<0x7F800000> : vector<2x8xf32>
    %145 = vector.multi_reduction <minimumf>, %144, %cst_31 [2] : vector<2x8x64xf32> to vector<2x8xf32>
    %146 = vector.shape_cast %145 : vector<2x8xf32> to vector<2x8x1xf32>
    %147 = vector.broadcast %146 : vector<2x8x1xf32> to vector<2x8x64xf32>
    %148 = arith.cmpf oeq, %35, %147 : vector<2x8x64xf32>
    %149 = arith.extui %148 : vector<2x8x64xi1> to vector<2x8x64xi32>
    %150 = arith.sitofp %149 : vector<2x8x64xi32> to vector<2x8x64xf32>
    %cst_32 = arith.constant 6.400000e+01 : f32
    %151 = vector.broadcast %cst_32 : f32 to vector<2x8x1xf32>
    %152 = arith.cmpf olt, %146, %151 : vector<2x8x1xf32>
    %153 = vector.shape_cast %152 : vector<2x8x1xi1> to vector<2x8x1xi1>
    %154 = vector.broadcast %153 : vector<2x8x1xi1> to vector<2x8x64xi1>
    %155 = arith.select %154, %150, %43 : vector<2x8x64xi1>, vector<2x8x64xf32>
    %156 = tpu.concatenate %43, %59, %75, %91, %107, %123, %139, %155 in 1 : vector<2x8x64xf32>, vector<2x8x64xf32>, vector<2x8x64xf32>, vector<2x8x64xf32>, vector<2x8x64xf32>, vector<2x8x64xf32>, vector<2x8x64xf32>, vector<2x8x64xf32> -> vector<2x64x64xf32>
    "tpu.trace_start"() <{level = 10 : i32, message = "bmn,bnc->bmc"}> : () -> ()
    %cst_33 = arith.constant dense<0.000000e+00> : vector<2x64x6xf32>
    %157 = tpu.matmul %156, %0, %cst_33 {dimension_numbers = #tpu.dot_dimension_numbers<[2], [1], [1], [2], [0, 0, 0, 1, 1, 2], [0], [0]>, precision = #tpu.contract_precision<fp32>} : vector<2x64x64xf32>, vector<2x64x6xf32>, vector<2x64x6xf32> -> vector<2x64x6xf32>
    "tpu.trace_stop"() : () -> ()
    %158 = vector.extract_strided_slice %157 {offsets = [0, 0, 0], sizes = [2, 8, 6], strides = [1, 1, 1]} : vector<2x64x6xf32> to vector<2x8x6xf32>
    %159 = vector.extract_strided_slice %157 {offsets = [0, 8, 0], sizes = [2, 8, 6], strides = [1, 1, 1]} : vector<2x64x6xf32> to vector<2x8x6xf32>
    %160 = vector.extract_strided_slice %157 {offsets = [0, 16, 0], sizes = [2, 8, 6], strides = [1, 1, 1]} : vector<2x64x6xf32> to vector<2x8x6xf32>
    %161 = vector.extract_strided_slice %157 {offsets = [0, 24, 0], sizes = [2, 8, 6], strides = [1, 1, 1]} : vector<2x64x6xf32> to vector<2x8x6xf32>
    %162 = vector.extract_strided_slice %157 {offsets = [0, 32, 0], sizes = [2, 8, 6], strides = [1, 1, 1]} : vector<2x64x6xf32> to vector<2x8x6xf32>
    %163 = vector.extract_strided_slice %157 {offsets = [0, 40, 0], sizes = [2, 8, 6], strides = [1, 1, 1]} : vector<2x64x6xf32> to vector<2x8x6xf32>
    %164 = vector.extract_strided_slice %157 {offsets = [0, 48, 0], sizes = [2, 8, 6], strides = [1, 1, 1]} : vector<2x64x6xf32> to vector<2x8x6xf32>
    %165 = vector.extract_strided_slice %157 {offsets = [0, 56, 0], sizes = [2, 8, 6], strides = [1, 1, 1]} : vector<2x64x6xf32> to vector<2x8x6xf32>
    %166 = arith.addf %158, %159 : vector<2x8x6xf32>
    %167 = arith.addf %166, %160 : vector<2x8x6xf32>
    %168 = arith.addf %167, %161 : vector<2x8x6xf32>
    %169 = arith.addf %168, %162 : vector<2x8x6xf32>
    %170 = arith.addf %169, %163 : vector<2x8x6xf32>
    %171 = arith.addf %170, %164 : vector<2x8x6xf32>
    %172 = arith.addf %171, %165 : vector<2x8x6xf32>
    %cst_34 = arith.constant 1.250000e-01 : f32
    %173 = vector.broadcast %cst_34 : f32 to vector<2x8x6xf32>
    %174 = arith.mulf %172, %173 : vector<2x8x6xf32>
    %175 = arith.subf %158, %174 : vector<2x8x6xf32>
    %176 = arith.subf %159, %174 : vector<2x8x6xf32>
    %177 = arith.subf %160, %174 : vector<2x8x6xf32>
    %178 = arith.subf %161, %174 : vector<2x8x6xf32>
    %179 = arith.subf %162, %174 : vector<2x8x6xf32>
    %180 = arith.subf %163, %174 : vector<2x8x6xf32>
    %181 = arith.subf %164, %174 : vector<2x8x6xf32>
    %182 = arith.subf %165, %174 : vector<2x8x6xf32>
    %183 = arith.mulf %175, %175 : vector<2x8x6xf32>
    %184 = arith.addf %175, %176 : vector<2x8x6xf32>
    %185 = arith.mulf %176, %176 : vector<2x8x6xf32>
    %186 = arith.addf %183, %185 : vector<2x8x6xf32>
    %187 = arith.addf %184, %177 : vector<2x8x6xf32>
    %188 = arith.mulf %177, %177 : vector<2x8x6xf32>
    %189 = arith.addf %186, %188 : vector<2x8x6xf32>
    %190 = arith.addf %187, %178 : vector<2x8x6xf32>
    %191 = arith.mulf %178, %178 : vector<2x8x6xf32>
    %192 = arith.addf %189, %191 : vector<2x8x6xf32>
    %193 = arith.addf %190, %179 : vector<2x8x6xf32>
    %194 = arith.mulf %179, %179 : vector<2x8x6xf32>
    %195 = arith.addf %192, %194 : vector<2x8x6xf32>
    %196 = arith.addf %193, %180 : vector<2x8x6xf32>
    %197 = arith.mulf %180, %180 : vector<2x8x6xf32>
    %198 = arith.addf %195, %197 : vector<2x8x6xf32>
    %199 = arith.addf %196, %181 : vector<2x8x6xf32>
    %200 = arith.mulf %181, %181 : vector<2x8x6xf32>
    %201 = arith.addf %198, %200 : vector<2x8x6xf32>
    %202 = arith.addf %199, %182 : vector<2x8x6xf32>
    %203 = arith.mulf %182, %182 : vector<2x8x6xf32>
    %204 = arith.addf %201, %203 : vector<2x8x6xf32>
    %cst_35 = arith.constant dense<0.000000e+00> : vector<2x8xf32>
    %205 = vector.multi_reduction <add>, %202, %cst_35 [2] : vector<2x8x6xf32> to vector<2x8xf32>
    %206 = vector.shape_cast %205 : vector<2x8xf32> to vector<2x8x1xf32>
    %cst_36 = arith.constant dense<0.000000e+00> : vector<2x1xf32>
    %207 = vector.multi_reduction <add>, %206, %cst_36 [1] : vector<2x8x1xf32> to vector<2x1xf32>
    %208 = vector.shape_cast %207 : vector<2x1xf32> to vector<2x1x1xf32>
    %cst_37 = arith.constant dense<0.000000e+00> : vector<2x8xf32>
    %209 = vector.multi_reduction <add>, %204, %cst_37 [2] : vector<2x8x6xf32> to vector<2x8xf32>
    %210 = vector.shape_cast %209 : vector<2x8xf32> to vector<2x8x1xf32>
    %cst_38 = arith.constant dense<0.000000e+00> : vector<2x1xf32>
    %211 = vector.multi_reduction <add>, %210, %cst_38 [1] : vector<2x8x1xf32> to vector<2x1xf32>
    %212 = vector.shape_cast %211 : vector<2x1xf32> to vector<2x1x1xf32>
    %213 = arith.mulf %208, %208 : vector<2x1x1xf32>
    %cst_39 = arith.constant 0.00260416674 : f32
    %214 = vector.broadcast %cst_39 : f32 to vector<2x1x1xf32>
    %215 = arith.mulf %213, %214 : vector<2x1x1xf32>
    %216 = arith.subf %212, %215 : vector<2x1x1xf32>
    %cst_40 = arith.constant 0.0026109661 : f32
    %217 = vector.broadcast %cst_40 : f32 to vector<2x1x1xf32>
    %218 = arith.mulf %216, %217 : vector<2x1x1xf32>
    %cst_41 = arith.constant 0.000000e+00 : f32
    %219 = vector.broadcast %cst_41 : f32 to vector<2x1x1xf32>
    %220 = arith.maximumf %218, %219 : vector<2x1x1xf32>
    %221 = math.sqrt %220 : vector<2x1x1xf32>
    %cst_42 = arith.constant 9.99999974E-6 : f32
    %222 = vector.broadcast %cst_42 : f32 to vector<2x1x1xf32>
    %223 = arith.addf %221, %222 : vector<2x1x1xf32>
    %cst_43 = arith.constant 1.000000e+00 : f32
    %224 = vector.broadcast %cst_43 : f32 to vector<2x1x1xf32>
    %225 = arith.divf %224, %223 : vector<2x1x1xf32>
    %c0_44 = arith.constant 0 : index
    %c0_45 = arith.constant 0 : index
    %226 = vector.load %arg4[%c0_44, %c0_45] : memref<1x6xf32, #tpu.memory_space<vmem>>, vector<1x6xf32>
    %227 = vector.shape_cast %226 : vector<1x6xf32> to vector<1x1x6xf32>
    %228 = vector.broadcast %227 : vector<1x1x6xf32> to vector<2x1x6xf32>
    %229 = vector.broadcast %225 : vector<2x1x1xf32> to vector<2x1x6xf32>
    %230 = arith.mulf %228, %229 : vector<2x1x6xf32>
    %c0_46 = arith.constant 0 : index
    %c0_47 = arith.constant 0 : index
    %231 = vector.load %arg5[%c0_46, %c0_47] : memref<1x6xf32, #tpu.memory_space<vmem>>, vector<1x6xf32>
    %232 = vector.broadcast %230 : vector<2x1x6xf32> to vector<2x8x6xf32>
    %233 = arith.mulf %175, %232 : vector<2x8x6xf32>
    %234 = vector.shape_cast %231 : vector<1x6xf32> to vector<1x1x6xf32>
    %235 = vector.broadcast %234 : vector<1x1x6xf32> to vector<2x8x6xf32>
    %236 = arith.addf %233, %235 : vector<2x8x6xf32>
    %237 = vector.broadcast %230 : vector<2x1x6xf32> to vector<2x8x6xf32>
    %238 = arith.mulf %176, %237 : vector<2x8x6xf32>
    %239 = vector.shape_cast %231 : vector<1x6xf32> to vector<1x1x6xf32>
    %240 = vector.broadcast %239 : vector<1x1x6xf32> to vector<2x8x6xf32>
    %241 = arith.addf %238, %240 : vector<2x8x6xf32>
    %242 = vector.broadcast %230 : vector<2x1x6xf32> to vector<2x8x6xf32>
    %243 = arith.mulf %177, %242 : vector<2x8x6xf32>
    %244 = vector.shape_cast %231 : vector<1x6xf32> to vector<1x1x6xf32>
    %245 = vector.broadcast %244 : vector<1x1x6xf32> to vector<2x8x6xf32>
    %246 = arith.addf %243, %245 : vector<2x8x6xf32>
    %247 = vector.broadcast %230 : vector<2x1x6xf32> to vector<2x8x6xf32>
    %248 = arith.mulf %178, %247 : vector<2x8x6xf32>
    %249 = vector.shape_cast %231 : vector<1x6xf32> to vector<1x1x6xf32>
    %250 = vector.broadcast %249 : vector<1x1x6xf32> to vector<2x8x6xf32>
    %251 = arith.addf %248, %250 : vector<2x8x6xf32>
    %252 = vector.broadcast %230 : vector<2x1x6xf32> to vector<2x8x6xf32>
    %253 = arith.mulf %179, %252 : vector<2x8x6xf32>
    %254 = vector.shape_cast %231 : vector<1x6xf32> to vector<1x1x6xf32>
    %255 = vector.broadcast %254 : vector<1x1x6xf32> to vector<2x8x6xf32>
    %256 = arith.addf %253, %255 : vector<2x8x6xf32>
    %257 = vector.broadcast %230 : vector<2x1x6xf32> to vector<2x8x6xf32>
    %258 = arith.mulf %180, %257 : vector<2x8x6xf32>
    %259 = vector.shape_cast %231 : vector<1x6xf32> to vector<1x1x6xf32>
    %260 = vector.broadcast %259 : vector<1x1x6xf32> to vector<2x8x6xf32>
    %261 = arith.addf %258, %260 : vector<2x8x6xf32>
    %262 = vector.broadcast %230 : vector<2x1x6xf32> to vector<2x8x6xf32>
    %263 = arith.mulf %181, %262 : vector<2x8x6xf32>
    %264 = vector.shape_cast %231 : vector<1x6xf32> to vector<1x1x6xf32>
    %265 = vector.broadcast %264 : vector<1x1x6xf32> to vector<2x8x6xf32>
    %266 = arith.addf %263, %265 : vector<2x8x6xf32>
    %267 = vector.broadcast %230 : vector<2x1x6xf32> to vector<2x8x6xf32>
    %268 = arith.mulf %182, %267 : vector<2x8x6xf32>
    %269 = vector.shape_cast %231 : vector<1x6xf32> to vector<1x1x6xf32>
    %270 = vector.broadcast %269 : vector<1x1x6xf32> to vector<2x8x6xf32>
    %271 = arith.addf %268, %270 : vector<2x8x6xf32>
    %272 = tpu.concatenate %236, %241, %246, %251, %256, %261, %266, %271 in 2 : vector<2x8x6xf32>, vector<2x8x6xf32>, vector<2x8x6xf32>, vector<2x8x6xf32>, vector<2x8x6xf32>, vector<2x8x6xf32>, vector<2x8x6xf32>, vector<2x8x6xf32> -> vector<2x8x48xf32>
    %c0_48 = arith.constant 0 : index
    %c0_49 = arith.constant 0 : index
    %c0_50 = arith.constant 0 : index
    %273 = vector.load %arg7[%c0_48, %c0_49, %c0_50] : memref<2x8x48xf32, #tpu.memory_space<vmem>>, vector<2x8x48xf32>
    tpu.vector_store %arg7[%c0_48, %c0_49, %c0_50], %272 {strides = array<i32>} : memref<2x8x48xf32, #tpu.memory_space<vmem>>, vector<2x8x48xf32>,
    %c0_51 = arith.constant 0 : index
    %c0_52 = arith.constant 0 : index
    %c0_53 = arith.constant 0 : index
    %274 = vector.load %arg6[%c0_51, %c0_52, %c0_53] : memref<2x8x2xf32, #tpu.memory_space<vmem>>, vector<2x8x2xf32>
    tpu.vector_store %arg6[%c0_51, %c0_52, %c0_53], %9 {strides = array<i32>} : memref<2x8x2xf32, #tpu.memory_space<vmem>>, vector<2x8x2xf32>,
    return
  }
  func.func @transform_0(%arg0: i32) -> (i32, i32, i32) {
    %c0_i32 = arith.constant 0 : i32
    %c0_i32_0 = arith.constant 0 : i32
    %c0_i32_1 = arith.constant 0 : i32
    return %arg0, %c0_i32, %c0_i32_0 : i32, i32, i32
  }
  func.func @transform_1(%arg0: i32) -> (i32, i32, i32) {
    %c0_i32 = arith.constant 0 : i32
    %c0_i32_0 = arith.constant 0 : i32
    %c0_i32_1 = arith.constant 0 : i32
    return %arg0, %c0_i32, %c0_i32_0 : i32, i32, i32
  }
  func.func @transform_2(%arg0: i32) -> (i32, i32, i32) {
    %c0_i32 = arith.constant 0 : i32
    %c0_i32_0 = arith.constant 0 : i32
    %c0_i32_1 = arith.constant 0 : i32
    return %arg0, %c0_i32, %c0_i32_0 : i32, i32, i32
  }
  func.func @transform_3(%arg0: i32) -> (i32, i32) {
    %c0_i32 = arith.constant 0 : i32
    %c0_i32_0 = arith.constant 0 : i32
    %c0_i32_1 = arith.constant 0 : i32
    return %c0_i32, %c0_i32_0 : i32, i32
  }
  func.func @transform_4(%arg0: i32) -> (i32, i32) {
    %c0_i32 = arith.constant 0 : i32
    %c0_i32_0 = arith.constant 0 : i32
    %c0_i32_1 = arith.constant 0 : i32
    return %c0_i32, %c0_i32_0 : i32, i32
  }
  func.func @transform_5(%arg0: i32) -> (i32, i32, i32) {
    %c0_i32 = arith.constant 0 : i32
    %c0_i32_0 = arith.constant 0 : i32
    %c0_i32_1 = arith.constant 0 : i32
    return %arg0, %c0_i32, %c0_i32_0 : i32, i32, i32
  }
  func.func @transform_6(%arg0: i32) -> (i32, i32, i32) {
    %c0_i32 = arith.constant 0 : i32
    %c0_i32_0 = arith.constant 0 : i32
    %c0_i32_1 = arith.constant 0 : i32
    return %arg0, %c0_i32, %c0_i32_0 : i32, i32, i32
  }
}

</mosaic_0001>

<llo_original>
// kernel: tpu_custom_call.1
$region0: #{tpu_custom_call.1}
  #allocation0 [shape = 'u32[]', space=smem, size = 0x4, offset = 0x4, fixed_abs, tag = 'smem constant byte address 0x4 - core index']
  #allocation1 [shape = 'u32[144,128]{1,0:T(1,128)}', space=vmem, size = 0x12000, scoped, tag = 'internal scratch']
  %s0 = inlined_call_operand.vmem [shape: s32[2,8,1], index: 0, kind: input, shape index: {}]
  %s1 = inlined_call_operand.vmem [shape: f32[2,64,6], index: 1, kind: input, shape index: {}]
  %s2 = inlined_call_operand.vmem [shape: f32[2,2,64], index: 2, kind: input, shape index: {}]
  %s3 = inlined_call_operand.vmem [shape: f32[1,6], index: 3, kind: input, shape index: {}]
  %s4 = inlined_call_operand.vmem [shape: f32[1,6], index: 4, kind: input, shape index: {}]
  %s5 = inlined_call_operand.vmem [shape: f32[2,8,2], index: 5, kind: output, shape index: {0}]
  %s6 = inlined_call_operand.hbm [shape: f32[2,8,48], index: 6, kind: output, shape index: {1}]
  %7 = xla_tuple %s5, %s6
  %s8 = sld [smem:[#allocation0]]
  $region38: #{tpu_custom_call.1} parent=0
    _
  %s10 = ssub.s32 1, %s8
  %s11 = scalar_select 0, %s10, %s8
  $region1: #{tpu_custom_call.1} parent=0
    #allocation2 [shape = 'u8[8192]{0}', space=vmem, size = 0x2000, scoped, tag = 'output window, operand 1, single buffered']
    #allocation3 [shape = 's32[1]{0}', space=sflag, size = 0x4, scoped, tag = 'scoped memory for tpu_custom_call.1']
    %12 = vsyncpa [#allocation3], 0
    // Predicated region
    $region2: #{tpu_custom_call.1} parent=1 // pred_check
      _
    $region3: #{tpu_custom_call.1} parent=1 // pred_check_branch
      %14 = sbr.rel (0) target = $region5
    $region4: #{tpu_custom_call.1} parent=1 // pred_region
      _
    $region5: #{tpu_custom_call.1} parent=1 // pred_fallthru
      _
    // Predicated region
    $region6: #{tpu_custom_call.1} parent=1 // pred_check
      _
    $region7: #{tpu_custom_call.1} parent=1 // pred_check_branch
      %16 = sbr.rel (0) target = $region9
    $region8: #{tpu_custom_call.1} parent=1 // pred_region
      _
    $region9: #{tpu_custom_call.1} parent=1 // pred_fallthru
      _
    // Predicated region
    $region10: #{tpu_custom_call.1} parent=1 // pred_check
      _
    $region11: #{tpu_custom_call.1} parent=1 // pred_check_branch
      %18 = sbr.rel (0) target = $region13
    $region12: #{tpu_custom_call.1} parent=1 // pred_region
      _
    $region13: #{tpu_custom_call.1} parent=1 // pred_fallthru
      _
    // Predicated region
    $region14: #{tpu_custom_call.1} parent=1 // pred_check
      _
    $region15: #{tpu_custom_call.1} parent=1 // pred_check_branch
      %20 = sbr.rel (0) target = $region17
    $region16: #{tpu_custom_call.1} parent=1 // pred_region
      _
    $region17: #{tpu_custom_call.1} parent=1 // pred_fallthru
      _
    // Predicated region
    $region18: #{tpu_custom_call.1} parent=1 // pred_check
      _
    $region19: #{tpu_custom_call.1} parent=1 // pred_check_branch
      %22 = sbr.rel (0) target = $region21
    $region20: #{tpu_custom_call.1} parent=1 // pred_region
      _
    $region21: #{tpu_custom_call.1} parent=1 // pred_fallthru
      _
    %v23 = vld [vmem:[%s1] sm:$0xff]
    %v24 = vld [vmem:[%s1 + $0x8] sm:$0xff]
    %v25 = vld [vmem:[%s1 + $0x10] sm:$0xff]
    %v26 = vld [vmem:[%s1 + $0x18] sm:$0xff]
    %v27 = vld [vmem:[%s1 + $0x20] sm:$0xff]
    %v28 = vld [vmem:[%s1 + $0x28] sm:$0xff]
    %v29 = vld [vmem:[%s1 + $0x30] sm:$0xff]
    %v30 = vld [vmem:[%s1 + $0x38] sm:$0xff]
    %v31 = vld [vmem:[%s1 + $0x40] sm:$0xff]
    %v32 = vld [vmem:[%s1 + $0x48] sm:$0xff]
    %v33 = vld [vmem:[%s1 + $0x50] sm:$0xff]
    %v34 = vld [vmem:[%s1 + $0x58] sm:$0xff]
    %v35 = vld [vmem:[%s1 + $0x60] sm:$0xff]
    %v36 = vld [vmem:[%s1 + $0x68] sm:$0xff]
    %v37 = vld [vmem:[%s1 + $0x70] sm:$0xff]
    %v38 = vld [vmem:[%s1 + $0x78] sm:$0xff]
    %v39 = vld [vmem:[%s2] sm:$0x3]
    %v40 = vld [vmem:[%s2 + $0x2] sm:$0x3]
    %v41 = vlaneseq
    %v42 = vand.u32 %v41, 127
    %v43 = vld [vmem:[%s0] sm:$0xff]
    %v44 = vld [vmem:[%s0 + $0x8] sm:$0xff]
    %45 = vset.pattern.permute.xlu0 0
    %46 = vperm.xlu0 %45, %v43
    %v47 = vpop.permute.xlu0 %46
    %48 = vset.pattern.permute.xlu0 0
    %49 = vperm.xlu0 %48, %v44
    %v50 = vpop.permute.xlu0 %49
    %vm51 = vcmp.eq.s32.totalorder %v42, %v47
    %vm52 = vcmp.eq.s32.totalorder %v42, %v50
    %v53 = vsel %vm51, 1, 0
    %v54 = vsel %vm52, 1, 0
    %v55 = vcvt.s32.f32 %v53
    %v56 = vcvt.s32.f32 %v54
    %vm57 = vcmask 523264
    %v59 = vsel %vm57, %v55, 0
    %61 = vmatprep.subr.mxu0 0.0
    %v62 = vand.u32 %v23, 4294901760
    %63 = vmatpush1.msra.mxu0 %v62
    %64 = vmatprep.subr.mxu0 0.0
    %v65 = vand.u32 %v24, 4294901760
    %66 = vmatpush1.msra.mxu0 %v65
    %67 = vmatprep.subr.mxu0 0.0
    %v68 = vand.u32 %v25, 4294901760
    %69 = vmatpush1.msra.mxu0 %v68
    %70 = vmatprep.subr.mxu0 0.0
    %v71 = vand.u32 %v26, 4294901760
    %72 = vmatpush1.msra.mxu0 %v71
    %73 = vmatprep.subr.mxu0 0.0
    %v74 = vand.u32 %v27, 4294901760
    %75 = vmatpush1.msra.mxu0 %v74
    %76 = vmatprep.subr.mxu0 0.0
    %v77 = vand.u32 %v28, 4294901760
    %78 = vmatpush1.msra.mxu0 %v77
    %79 = vmatprep.subr.mxu0 0.0
    %v80 = vand.u32 %v29, 4294901760
    %81 = vmatpush1.msra.mxu0 %v80
    %82 = vmatprep.subr.mxu0 0.0
    %v83 = vand.u32 %v30, 4294901760
    %84 = vmatpush1.msra.mxu0 %v83
    %85 = vmatprep.subr.mxu0 0.0
    %86 = vmatpush1.msra.mxu0 0.0
    %87 = vmatprep.subr.mxu0 0.0
    %88 = vmatpush1.msra.mxu0 0.0
    %89 = vmatprep.subr.mxu0 0.0
    %90 = vmatpush1.msra.mxu0 0.0
    %91 = vmatprep.subr.mxu0 0.0
    %92 = vmatpush1.msra.mxu0 0.0
    %93 = vmatprep.subr.mxu0 0.0
    %94 = vmatpush1.msra.mxu0 0.0
    %95 = vmatprep.subr.mxu0 0.0
    %96 = vmatpush1.msra.mxu0 0.0
    %97 = vmatprep.subr.mxu0 0.0
    %98 = vmatpush1.msra.mxu0 0.0
    %99 = vmatprep.subr.mxu0 0.0
    %100 = vmatpush1.msra.mxu0 0.0
    %101 = vmatprep.subr.mxu0 0.0
    %102 = vmatpush1.msra.mxu0 0.0
    %103 = vmatprep.subr.mxu0 0.0
    %104 = vmatpush1.msra.mxu0 0.0
    %105 = vmatprep.subr.mxu0 0.0
    %106 = vmatpush1.msra.mxu0 0.0
    %107 = vmatprep.subr.mxu0 0.0
    %108 = vmatpush1.msra.mxu0 0.0
    %109 = vmatprep.subr.mxu0 0.0
    %110 = vmatpush1.msra.mxu0 0.0
    %111 = vmatprep.subr.mxu0 0.0
    %112 = vmatpush1.msra.mxu0 0.0
    %113 = vmatprep.subr.mxu0 0.0
    %114 = vmatpush1.msra.mxu0 0.0
    %115 = vmatprep.subr.mxu0 0.0
    %116 = vmatpush1.msra.mxu0 0.0
    %117 = vmatprep.subr.mxu0 0.0
    %118 = vmatpush1.msra.mxu0 0.0
    %119 = vmatprep.subr.mxu0 0.0
    %120 = vmatpush1.msra.mxu0 0.0
    %121 = vmatprep.subr.mxu0 0.0
    %122 = vmatpush1.msra.mxu0 0.0
    %123 = vmatprep.subr.mxu0 0.0
    %124 = vmatpush1.msra.mxu0 0.0
    %125 = vmatprep.subr.mxu0 0.0
    %126 = vmatpush1.msra.mxu0 0.0
    %127 = vmatprep.subr.mxu0 0.0
    %128 = vmatpush1.msra.mxu0 0.0
    %129 = vmatprep.subr.mxu0 0.0
    %130 = vmatpush1.msra.mxu0 0.0
    %131 = vmatprep.subr.mxu0 0.0
    %132 = vmatpush1.msra.mxu0 0.0
    %133 = vmatprep.mubr.f32.mxu0 0.0
    %v134 = vand.u32 %v59, 4294901760
    %v135 = vsub.f32 %v59, %v134
    %v136 = vand.u32 %v135, 4294901760
    %v137 = vsub.f32 %v135, %v136
    %v138 = vand.u32 %v137, 4294901760
    %139 = vmatmul.mubr.f32.gmra.mrb[0].mxu0 %v138
    %v140 = vpop.f32.mrb[0].mxu0
    %v141 = vadd.f32 0.0, %v140
    %v142 = vpop.f32.mrb[0].mxu0
    %143 = vdwg.mxu0
    %144 = vmatprep.subr.mxu0 0.0
    %v145 = vand.u32 %v23, 4294901760
    %v146 = vsub.f32 %v23, %v145
    %v147 = vand.u32 %v146, 4294901760
    %v148 = vsub.f32 %v146, %v147
    %v149 = vand.u32 %v148, 4294901760
    %150 = vmatpush1.msra.mxu0 %v149
    %151 = vmatprep.subr.mxu0 0.0
    %v152 = vand.u32 %v24, 4294901760
    %v153 = vsub.f32 %v24, %v152
    %v154 = vand.u32 %v153, 4294901760
    %v155 = vsub.f32 %v153, %v154
    %v156 = vand.u32 %v155, 4294901760
    %157 = vmatpush1.msra.mxu0 %v156
    %158 = vmatprep.subr.mxu0 0.0
    %v159 = vand.u32 %v25, 4294901760
    %v160 = vsub.f32 %v25, %v159
    %v161 = vand.u32 %v160, 4294901760
    %v162 = vsub.f32 %v160, %v161
    %v163 = vand.u32 %v162, 4294901760
    %164 = vmatpush1.msra.mxu0 %v163
    %165 = vmatprep.subr.mxu0 0.0
    %v166 = vand.u32 %v26, 4294901760
    %v167 = vsub.f32 %v26, %v166
    %v168 = vand.u32 %v167, 4294901760
    %v169 = vsub.f32 %v167, %v168
    %v170 = vand.u32 %v169, 4294901760
    %171 = vmatpush1.msra.mxu0 %v170
    %172 = vmatprep.subr.mxu0 0.0
    %v173 = vand.u32 %v27, 4294901760
    %v174 = vsub.f32 %v27, %v173
    %v175 = vand.u32 %v174, 4294901760
    %v176 = vsub.f32 %v174, %v175
    %v177 = vand.u32 %v176, 4294901760
    %178 = vmatpush1.msra.mxu0 %v177
    %179 = vmatprep.subr.mxu0 0.0
    %v180 = vand.u32 %v28, 4294901760
    %v181 = vsub.f32 %v28, %v180
    %v182 = vand.u32 %v181, 4294901760
    %v183 = vsub.f32 %v181, %v182
    %v184 = vand.u32 %v183, 4294901760
    %185 = vmatpush1.msra.mxu0 %v184
    %186 = vmatprep.subr.mxu0 0.0
    %v187 = vand.u32 %v29, 4294901760
    %v188 = vsub.f32 %v29, %v187
    %v189 = vand.u32 %v188, 4294901760
    %v190 = vsub.f32 %v188, %v189
    %v191 = vand.u32 %v190, 4294901760
    %192 = vmatpush1.msra.mxu0 %v191
    %193 = vmatprep.subr.mxu0 0.0
    %v194 = vand.u32 %v30, 4294901760
    %v195 = vsub.f32 %v30, %v194
    %v196 = vand.u32 %v195, 4294901760
    %v197 = vsub.f32 %v195, %v196
    %v198 = vand.u32 %v197, 4294901760
    %199 = vmatpush1.msra.mxu0 %v198
    %200 = vmatprep.subr.mxu0 0.0
    %201 = vmatpush1.msra.mxu0 0.0
    %202 = vmatprep.subr.mxu0 0.0
    %203 = vmatpush1.msra.mxu0 0.0
    %204 = vmatprep.subr.mxu0 0.0
    %205 = vmatpush1.msra.mxu0 0.0
    %206 = vmatprep.subr.mxu0 0.0
    %207 = vmatpush1.msra.mxu0 0.0
    %208 = vmatprep.subr.mxu0 0.0
    %209 = vmatpush1.msra.mxu0 0.0
    %210 = vmatprep.subr.mxu0 0.0
    %211 = vmatpush1.msra.mxu0 0.0
    %212 = vmatprep.subr.mxu0 0.0
    %213 = vmatpush1.msra.mxu0 0.0
    %214 = vmatprep.subr.mxu0 0.0
    %215 = vmatpush1.msra.mxu0 0.0
    %216 = vmatprep.subr.mxu0 0.0
    %217 = vmatpush1.msra.mxu0 0.0
    %218 = vmatprep.subr.mxu0 0.0
    %219 = vmatpush1.msra.mxu0 0.0
    %220 = vmatprep.subr.mxu0 0.0
    %221 = vmatpush1.msra.mxu0 0.0
    %222 = vmatprep.subr.mxu0 0.0
    %223 = vmatpush1.msra.mxu0 0.0
    %224 = vmatprep.subr.mxu0 0.0
    %225 = vmatpush1.msra.mxu0 0.0
    %226 = vmatprep.subr.mxu0 0.0
    %227 = vmatpush1.msra.mxu0 0.0
    %228 = vmatprep.subr.mxu0 0.0
    %229 = vmatpush1.msra.mxu0 0.0
    %230 = vmatprep.subr.mxu0 0.0
    %231 = vmatpush1.msra.mxu0 0.0
    %232 = vmatprep.subr.mxu0 0.0
    %233 = vmatpush1.msra.mxu0 0.0
    %234 = vmatprep.subr.mxu0 0.0
    %235 = vmatpush1.msra.mxu0 0.0
    %236 = vmatprep.subr.mxu0 0.0
    %237 = vmatpush1.msra.mxu0 0.0
    %238 = vmatprep.subr.mxu0 0.0
    %239 = vmatpush1.msra.mxu0 0.0
    %240 = vmatprep.subr.mxu0 0.0
    %241 = vmatpush1.msra.mxu0 0.0
    %242 = vmatprep.subr.mxu0 0.0
    %243 = vmatpush1.msra.mxu0 0.0
    %244 = vmatprep.subr.mxu0 0.0
    %245 = vmatpush1.msra.mxu0 0.0
    %246 = vmatprep.subr.mxu0 0.0
    %247 = vmatpush1.msra.mxu0 0.0
    %248 = vmatprep.mubr.f32.mxu0 0.0
    %v249 = vand.u32 %v59, 4294901760
    %250 = vmatmul.mubr.f32.gmra.mrb[0].mxu0 %v249
    %v251 = vpop.f32.mrb[0].mxu0
    %v252 = vadd.f32 %v141, %v251
    %v253 = vpop.f32.mrb[0].mxu0
    %254 = vdwg.mxu0
    %255 = vmatprep.subr.mxu0 0.0
    %v256 = vand.u32 %v23, 4294901760
    %v257 = vsub.f32 %v23, %v256
    %258 = vmatpush1.msra.mxu0 %v257
    %259 = vmatprep.subr.mxu0 0.0
    %v260 = vand.u32 %v24, 4294901760
    %v261 = vsub.f32 %v24, %v260
    %262 = vmatpush1.msra.mxu0 %v261
    %263 = vmatprep.subr.mxu0 0.0
    %v264 = vand.u32 %v25, 4294901760
    %v265 = vsub.f32 %v25, %v264
    %266 = vmatpush1.msra.mxu0 %v265
    %267 = vmatprep.subr.mxu0 0.0
    %v268 = vand.u32 %v26, 4294901760
    %v269 = vsub.f32 %v26, %v268
    %270 = vmatpush1.msra.mxu0 %v269
    %271 = vmatprep.subr.mxu0 0.0
    %v272 = vand.u32 %v27, 4294901760
    %v273 = vsub.f32 %v27, %v272
    %274 = vmatpush1.msra.mxu0 %v273
    %275 = vmatprep.subr.mxu0 0.0
    %v276 = vand.u32 %v28, 4294901760
    %v277 = vsub.f32 %v28, %v276
    %278 = vmatpush1.msra.mxu0 %v277
    %279 = vmatprep.subr.mxu0 0.0
    %v280 = vand.u32 %v29, 4294901760
    %v281 = vsub.f32 %v29, %v280
    %282 = vmatpush1.msra.mxu0 %v281
    %283 = vmatprep.subr.mxu0 0.0
    %v284 = vand.u32 %v30, 4294901760
    %v285 = vsub.f32 %v30, %v284
    %286 = vmatpush1.msra.mxu0 %v285
    %287 = vmatprep.subr.mxu0 0.0
    %288 = vmatpush1.msra.mxu0 0.0
    %289 = vmatprep.subr.mxu0 0.0
    %290 = vmatpush1.msra.mxu0 0.0
    %291 = vmatprep.subr.mxu0 0.0
    %292 = vmatpush1.msra.mxu0 0.0
    %293 = vmatprep.subr.mxu0 0.0
    %294 = vmatpush1.msra.mxu0 0.0
    %295 = vmatprep.subr.mxu0 0.0
    %296 = vmatpush1.msra.mxu0 0.0
    %297 = vmatprep.subr.mxu0 0.0
    %298 = vmatpush1.msra.mxu0 0.0
    %299 = vmatprep.subr.mxu0 0.0
    %300 = vmatpush1.msra.mxu0 0.0
    %301 = vmatprep.subr.mxu0 0.0
    %302 = vmatpush1.msra.mxu0 0.0
    %303 = vmatprep.subr.mxu0 0.0
    %304 = vmatpush1.msra.mxu0 0.0
    %305 = vmatprep.subr.mxu0 0.0
    %306 = vmatpush1.msra.mxu0 0.0
    %307 = vmatprep.subr.mxu0 0.0
    %308 = vmatpush1.msra.mxu0 0.0
    %309 = vmatprep.subr.mxu0 0.0
    %310 = vmatpush1.msra.mxu0 0.0
    %311 = vmatprep.subr.mxu0 0.0
    %312 = vmatpush1.msra.mxu0 0.0
    %313 = vmatprep.subr.mxu0 0.0
    %314 = vmatpush1.msra.mxu0 0.0
    %315 = vmatprep.subr.mxu0 0.0
    %316 = vmatpush1.msra.mxu0 0.0
    %317 = vmatprep.subr.mxu0 0.0
    %318 = vmatpush1.msra.mxu0 0.0
    %319 = vmatprep.subr.mxu0 0.0
    %320 = vmatpush1.msra.mxu0 0.0
    %321 = vmatprep.subr.mxu0 0.0
    %322 = vmatpush1.msra.mxu0 0.0
    %323 = vmatprep.subr.mxu0 0.0
    %324 = vmatpush1.msra.mxu0 0.0
    %325 = vmatprep.subr.mxu0 0.0
    %326 = vmatpush1.msra.mxu0 0.0
    %327 = vmatprep.subr.mxu0 0.0
    %328 = vmatpush1.msra.mxu0 0.0
    %329 = vmatprep.subr.mxu0 0.0
    %330 = vmatpush1.msra.mxu0 0.0
    %331 = vmatprep.subr.mxu0 0.0
    %332 = vmatpush1.msra.mxu0 0.0
    %333 = vmatprep.subr.mxu0 0.0
    %334 = vmatpush1.msra.mxu0 0.0
    %335 = vmatprep.mubr.f32.mxu0 0.0
    %v336 = vand.u32 %v59, 4294901760
    %v337 = vsub.f32 %v59, %v336
    %338 = vmatmul.mubr.f32.gmra.mrb[0].mxu0 %v337
    %v339 = vpop.f32.mrb[0].mxu0
    %v340 = vadd.f32 %v252, %v339
    %v341 = vpop.f32.mrb[0].mxu0
    %342 = vdwg.mxu0
    %343 = vmatprep.subr.mxu0 0.0
    %v344 = vand.u32 %v23, 4294901760
    %345 = vmatpush1.msra.mxu0 %v344
    %346 = vmatprep.subr.mxu0 0.0
    %v347 = vand.u32 %v24, 4294901760
    %348 = vmatpush1.msra.mxu0 %v347
    %349 = vmatprep.subr.mxu0 0.0
    %v350 = vand.u32 %v25, 4294901760
    %351 = vmatpush1.msra.mxu0 %v350
    %352 = vmatprep.subr.mxu0 0.0
    %v353 = vand.u32 %v26, 4294901760
    %354 = vmatpush1.msra.mxu0 %v353
    %355 = vmatprep.subr.mxu0 0.0
    %v356 = vand.u32 %v27, 4294901760
    %357 = vmatpush1.msra.mxu0 %v356
    %358 = vmatprep.subr.mxu0 0.0
    %v359 = vand.u32 %v28, 4294901760
    %360 = vmatpush1.msra.mxu0 %v359
    %361 = vmatprep.subr.mxu0 0.0
    %v362 = vand.u32 %v29, 4294901760
    %363 = vmatpush1.msra.mxu0 %v362
    %364 = vmatprep.subr.mxu0 0.0
    %v365 = vand.u32 %v30, 4294901760
    %366 = vmatpush1.msra.mxu0 %v365
    %367 = vmatprep.subr.mxu0 0.0
    %368 = vmatpush1.msra.mxu0 0.0
    %369 = vmatprep.subr.mxu0 0.0
    %370 = vmatpush1.msra.mxu0 0.0
    %371 = vmatprep.subr.mxu0 0.0
    %372 = vmatpush1.msra.mxu0 0.0
    %373 = vmatprep.subr.mxu0 0.0
    %374 = vmatpush1.msra.mxu0 0.0
    %375 = vmatprep.subr.mxu0 0.0
    %376 = vmatpush1.msra.mxu0 0.0
    %377 = vmatprep.subr.mxu0 0.0
    %378 = vmatpush1.msra.mxu0 0.0
    %379 = vmatprep.subr.mxu0 0.0
    %380 = vmatpush1.msra.mxu0 0.0
    %381 = vmatprep.subr.mxu0 0.0
    %382 = vmatpush1.msra.mxu0 0.0
    %383 = vmatprep.subr.mxu0 0.0
    %384 = vmatpush1.msra.mxu0 0.0
    %385 = vmatprep.subr.mxu0 0.0
    %386 = vmatpush1.msra.mxu0 0.0
    %387 = vmatprep.subr.mxu0 0.0
    %388 = vmatpush1.msra.mxu0 0.0
    %389 = vmatprep.subr.mxu0 0.0
    %390 = vmatpush1.msra.mxu0 0.0
    %391 = vmatprep.subr.mxu0 0.0
    %392 = vmatpush1.msra.mxu0 0.0
    %393 = vmatprep.subr.mxu0 0.0
    %394 = vmatpush1.msra.mxu0 0.0
    %395 = vmatprep.subr.mxu0 0.0
    %396 = vmatpush1.msra.mxu0 0.0
    %397 = vmatprep.subr.mxu0 0.0
    %398 = vmatpush1.msra.mxu0 0.0
    %399 = vmatprep.subr.mxu0 0.0
    %400 = vmatpush1.msra.mxu0 0.0
    %401 = vmatprep.subr.mxu0 0.0
    %402 = vmatpush1.msra.mxu0 0.0
    %403 = vmatprep.subr.mxu0 0.0
    %404 = vmatpush1.msra.mxu0 0.0
    %405 = vmatprep.subr.mxu0 0.0
    %406 = vmatpush1.msra.mxu0 0.0
    %407 = vmatprep.subr.mxu0 0.0
    %408 = vmatpush1.msra.mxu0 0.0
    %409 = vmatprep.subr.mxu0 0.0
    %410 = vmatpush1.msra.mxu0 0.0
    %411 = vmatprep.subr.mxu0 0.0
    %412 = vmatpush1.msra.mxu0 0.0
    %413 = vmatprep.subr.mxu0 0.0
    %414 = vmatpush1.msra.mxu0 0.0
    %415 = vmatprep.mubr.f32.mxu0 0.0
    %v416 = vand.u32 %v59, 4294901760
    %v417 = vsub.f32 %v59, %v416
    %v418 = vand.u32 %v417, 4294901760
    %419 = vmatmul.mubr.f32.gmra.mrb[0].mxu0 %v418
    %v420 = vpop.f32.mrb[0].mxu0
    %v421 = vadd.f32 %v340, %v420
    %v422 = vpop.f32.mrb[0].mxu0
    %423 = vdwg.mxu0
    %424 = vmatprep.subr.mxu0 0.0
    %v425 = vand.u32 %v23, 4294901760
    %v426 = vsub.f32 %v23, %v425
    %v427 = vand.u32 %v426, 4294901760
    %428 = vmatpush1.msra.mxu0 %v427
    %429 = vmatprep.subr.mxu0 0.0
    %v430 = vand.u32 %v24, 4294901760
    %v431 = vsub.f32 %v24, %v430
    %v432 = vand.u32 %v431, 4294901760
    %433 = vmatpush1.msra.mxu0 %v432
    %434 = vmatprep.subr.mxu0 0.0
    %v435 = vand.u32 %v25, 4294901760
    %v436 = vsub.f32 %v25, %v435
    %v437 = vand.u32 %v436, 4294901760
    %438 = vmatpush1.msra.mxu0 %v437
    %439 = vmatprep.subr.mxu0 0.0
    %v440 = vand.u32 %v26, 4294901760
    %v441 = vsub.f32 %v26, %v440
    %v442 = vand.u32 %v441, 4294901760
    %443 = vmatpush1.msra.mxu0 %v442
    %444 = vmatprep.subr.mxu0 0.0
    %v445 = vand.u32 %v27, 4294901760
    %v446 = vsub.f32 %v27, %v445
    %v447 = vand.u32 %v446, 4294901760
    %448 = vmatpush1.msra.mxu0 %v447
    %449 = vmatprep.subr.mxu0 0.0
    %v450 = vand.u32 %v28, 4294901760
    %v451 = vsub.f32 %v28, %v450
    %v452 = vand.u32 %v451, 4294901760
    %453 = vmatpush1.msra.mxu0 %v452
    %454 = vmatprep.subr.mxu0 0.0
    %v455 = vand.u32 %v29, 4294901760
    %v456 = vsub.f32 %v29, %v455
    %v457 = vand.u32 %v456, 4294901760
    %458 = vmatpush1.msra.mxu0 %v457
    %459 = vmatprep.subr.mxu0 0.0
    %v460 = vand.u32 %v30, 4294901760
    %v461 = vsub.f32 %v30, %v460
    %v462 = vand.u32 %v461, 4294901760
    %463 = vmatpush1.msra.mxu0 %v462
    %464 = vmatprep.subr.mxu0 0.0
    %465 = vmatpush1.msra.mxu0 0.0
    %466 = vmatprep.subr.mxu0 0.0
    %467 = vmatpush1.msra.mxu0 0.0
    %468 = vmatprep.subr.mxu0 0.0
    %469 = vmatpush1.msra.mxu0 0.0
    %470 = vmatprep.subr.mxu0 0.0
    %471 = vmatpush1.msra.mxu0 0.0
    %472 = vmatprep.subr.mxu0 0.0
    %473 = vmatpush1.msra.mxu0 0.0
    %474 = vmatprep.subr.mxu0 0.0
    %475 = vmatpush1.msra.mxu0 0.0
    %476 = vmatprep.subr.mxu0 0.0
    %477 = vmatpush1.msra.mxu0 0.0
    %478 = vmatprep.subr.mxu0 0.0
    %479 = vmatpush1.msra.mxu0 0.0
    %480 = vmatprep.subr.mxu0 0.0
    %481 = vmatpush1.msra.mxu0 0.0
    %482 = vmatprep.subr.mxu0 0.0
    %483 = vmatpush1.msra.mxu0 0.0
    %484 = vmatprep.subr.mxu0 0.0
    %485 = vmatpush1.msra.mxu0 0.0
    %486 = vmatprep.subr.mxu0 0.0
    %487 = vmatpush1.msra.mxu0 0.0
    %488 = vmatprep.subr.mxu0 0.0
    %489 = vmatpush1.msra.mxu0 0.0
    %490 = vmatprep.subr.mxu0 0.0
    %491 = vmatpush1.msra.mxu0 0.0
    %492 = vmatprep.subr.mxu0 0.0
    %493 = vmatpush1.msra.mxu0 0.0
    %494 = vmatprep.subr.mxu0 0.0
    %495 = vmatpush1.msra.mxu0 0.0
    %496 = vmatprep.subr.mxu0 0.0
    %497 = vmatpush1.msra.mxu0 0.0
    %498 = vmatprep.subr.mxu0 0.0
    %499 = vmatpush1.msra.mxu0 0.0
    %500 = vmatprep.subr.mxu0 0.0
    %501 = vmatpush1.msra.mxu0 0.0
    %502 = vmatprep.subr.mxu0 0.0
    %503 = vmatpush1.msra.mxu0 0.0
    %504 = vmatprep.subr.mxu0 0.0
    %505 = vmatpush1.msra.mxu0 0.0
    %506 = vmatprep.subr.mxu0 0.0
    %507 = vmatpush1.msra.mxu0 0.0
    %508 = vmatprep.subr.mxu0 0.0
    %509 = vmatpush1.msra.mxu0 0.0
    %510 = vmatprep.subr.mxu0 0.0
    %511 = vmatpush1.msra.mxu0 0.0
    %512 = vmatprep.mubr.f32.mxu0 0.0
    %v513 = vand.u32 %v59, 4294901760
    %514 = vmatmul.mubr.f32.gmra.mrb[0].mxu0 %v513
    %v515 = vpop.f32.mrb[0].mxu0
    %v516 = vadd.f32 %v421, %v515
    %v517 = vpop.f32.mrb[0].mxu0
    %518 = vdwg.mxu0
    %519 = vmatprep.subr.mxu0 0.0
    %v520 = vand.u32 %v23, 4294901760
    %521 = vmatpush1.msra.mxu0 %v520
    %522 = vmatprep.subr.mxu0 0.0
    %v523 = vand.u32 %v24, 4294901760
    %524 = vmatpush1.msra.mxu0 %v523
    %525 = vmatprep.subr.mxu0 0.0
    %v526 = vand.u32 %v25, 4294901760
    %527 = vmatpush1.msra.mxu0 %v526
    %528 = vmatprep.subr.mxu0 0.0
    %v529 = vand.u32 %v26, 4294901760
    %530 = vmatpush1.msra.mxu0 %v529
    %531 = vmatprep.subr.mxu0 0.0
    %v532 = vand.u32 %v27, 4294901760
    %533 = vmatpush1.msra.mxu0 %v532
    %534 = vmatprep.subr.mxu0 0.0
    %v535 = vand.u32 %v28, 4294901760
    %536 = vmatpush1.msra.mxu0 %v535
    %537 = vmatprep.subr.mxu0 0.0
    %v538 = vand.u32 %v29, 4294901760
    %539 = vmatpush1.msra.mxu0 %v538
    %540 = vmatprep.subr.mxu0 0.0
    %v541 = vand.u32 %v30, 4294901760
    %542 = vmatpush1.msra.mxu0 %v541
    %543 = vmatprep.subr.mxu0 0.0
    %544 = vmatpush1.msra.mxu0 0.0
    %545 = vmatprep.subr.mxu0 0.0
    %546 = vmatpush1.msra.mxu0 0.0
    %547 = vmatprep.subr.mxu0 0.0
    %548 = vmatpush1.msra.mxu0 0.0
    %549 = vmatprep.subr.mxu0 0.0
    %550 = vmatpush1.msra.mxu0 0.0
    %551 = vmatprep.subr.mxu0 0.0
    %552 = vmatpush1.msra.mxu0 0.0
    %553 = vmatprep.subr.mxu0 0.0
    %554 = vmatpush1.msra.mxu0 0.0
    %555 = vmatprep.subr.mxu0 0.0
    %556 = vmatpush1.msra.mxu0 0.0
    %557 = vmatprep.subr.mxu0 0.0
    %558 = vmatpush1.msra.mxu0 0.0
    %559 = vmatprep.subr.mxu0 0.0
    %560 = vmatpush1.msra.mxu0 0.0
    %561 = vmatprep.subr.mxu0 0.0
    %562 = vmatpush1.msra.mxu0 0.0
    %563 = vmatprep.subr.mxu0 0.0
    %564 = vmatpush1.msra.mxu0 0.0
    %565 = vmatprep.subr.mxu0 0.0
    %566 = vmatpush1.msra.mxu0 0.0
    %567 = vmatprep.subr.mxu0 0.0
    %568 = vmatpush1.msra.mxu0 0.0
    %569 = vmatprep.subr.mxu0 0.0
    %570 = vmatpush1.msra.mxu0 0.0
    %571 = vmatprep.subr.mxu0 0.0
    %572 = vmatpush1.msra.mxu0 0.0
    %573 = vmatprep.subr.mxu0 0.0
    %574 = vmatpush1.msra.mxu0 0.0
    %575 = vmatprep.subr.mxu0 0.0
    %576 = vmatpush1.msra.mxu0 0.0
    %577 = vmatprep.subr.mxu0 0.0
    %578 = vmatpush1.msra.mxu0 0.0
    %579 = vmatprep.subr.mxu0 0.0
    %580 = vmatpush1.msra.mxu0 0.0
    %581 = vmatprep.subr.mxu0 0.0
    %582 = vmatpush1.msra.mxu0 0.0
    %583 = vmatprep.subr.mxu0 0.0
    %584 = vmatpush1.msra.mxu0 0.0
    %585 = vmatprep.subr.mxu0 0.0
    %586 = vmatpush1.msra.mxu0 0.0
    %587 = vmatprep.subr.mxu0 0.0
    %588 = vmatpush1.msra.mxu0 0.0
    %589 = vmatprep.subr.mxu0 0.0
    %590 = vmatpush1.msra.mxu0 0.0
    %591 = vmatprep.mubr.f32.mxu0 0.0
    %v592 = vand.u32 %v59, 4294901760
    %593 = vmatmul.mubr.f32.gmra.mrb[0].mxu0 %v592
    %v594 = vpop.f32.mrb[0].mxu0
    %v595 = vadd.f32 %v516, %v594
    %v596 = vpop.f32.mrb[0].mxu0
    %597 = vdwg.mxu0
    %v599 = vsel %vm57, %v56, 0
    %601 = vmatprep.subr.mxu0 0.0
    %v602 = vand.u32 %v31, 4294901760
    %603 = vmatpush1.msra.mxu0 %v602
    %604 = vmatprep.subr.mxu0 0.0
    %v605 = vand.u32 %v32, 4294901760
    %606 = vmatpush1.msra.mxu0 %v605
    %607 = vmatprep.subr.mxu0 0.0
    %v608 = vand.u32 %v33, 4294901760
    %609 = vmatpush1.msra.mxu0 %v608
    %610 = vmatprep.subr.mxu0 0.0
    %v611 = vand.u32 %v34, 4294901760
    %612 = vmatpush1.msra.mxu0 %v611
    %613 = vmatprep.subr.mxu0 0.0
    %v614 = vand.u32 %v35, 4294901760
    %615 = vmatpush1.msra.mxu0 %v614
    %616 = vmatprep.subr.mxu0 0.0
    %v617 = vand.u32 %v36, 4294901760
    %618 = vmatpush1.msra.mxu0 %v617
    %619 = vmatprep.subr.mxu0 0.0
    %v620 = vand.u32 %v37, 4294901760
    %621 = vmatpush1.msra.mxu0 %v620
    %622 = vmatprep.subr.mxu0 0.0
    %v623 = vand.u32 %v38, 4294901760
    %624 = vmatpush1.msra.mxu0 %v623
    %625 = vmatprep.subr.mxu0 0.0
    %626 = vmatpush1.msra.mxu0 0.0
    %627 = vmatprep.subr.mxu0 0.0
    %628 = vmatpush1.msra.mxu0 0.0
    %629 = vmatprep.subr.mxu0 0.0
    %630 = vmatpush1.msra.mxu0 0.0
    %631 = vmatprep.subr.mxu0 0.0
    %632 = vmatpush1.msra.mxu0 0.0
    %633 = vmatprep.subr.mxu0 0.0
    %634 = vmatpush1.msra.mxu0 0.0
    %635 = vmatprep.subr.mxu0 0.0
    %636 = vmatpush1.msra.mxu0 0.0
    %637 = vmatprep.subr.mxu0 0.0
    %638 = vmatpush1.msra.mxu0 0.0
    %639 = vmatprep.subr.mxu0 0.0
    %640 = vmatpush1.msra.mxu0 0.0
    %641 = vmatprep.subr.mxu0 0.0
    %642 = vmatpush1.msra.mxu0 0.0
    %643 = vmatprep.subr.mxu0 0.0
    %644 = vmatpush1.msra.mxu0 0.0
    %645 = vmatprep.subr.mxu0 0.0
    %646 = vmatpush1.msra.mxu0 0.0
    %647 = vmatprep.subr.mxu0 0.0
    %648 = vmatpush1.msra.mxu0 0.0
    %649 = vmatprep.subr.mxu0 0.0
    %650 = vmatpush1.msra.mxu0 0.0
    %651 = vmatprep.subr.mxu0 0.0
    %652 = vmatpush1.msra.mxu0 0.0
    %653 = vmatprep.subr.mxu0 0.0
    %654 = vmatpush1.msra.mxu0 0.0
    %655 = vmatprep.subr.mxu0 0.0
    %656 = vmatpush1.msra.mxu0 0.0
    %657 = vmatprep.subr.mxu0 0.0
    %658 = vmatpush1.msra.mxu0 0.0
    %659 = vmatprep.subr.mxu0 0.0
    %660 = vmatpush1.msra.mxu0 0.0
    %661 = vmatprep.subr.mxu0 0.0
    %662 = vmatpush1.msra.mxu0 0.0
    %663 = vmatprep.subr.mxu0 0.0
    %664 = vmatpush1.msra.mxu0 0.0
    %665 = vmatprep.subr.mxu0 0.0
    %666 = vmatpush1.msra.mxu0 0.0
    %667 = vmatprep.subr.mxu0 0.0
    %668 = vmatpush1.msra.mxu0 0.0
    %669 = vmatprep.subr.mxu0 0.0
    %670 = vmatpush1.msra.mxu0 0.0
    %671 = vmatprep.subr.mxu0 0.0
    %672 = vmatpush1.msra.mxu0 0.0
    %673 = vmatprep.mubr.f32.mxu0 0.0
    %v674 = vand.u32 %v599, 4294901760
    %v675 = vsub.f32 %v599, %v674
    %v676 = vand.u32 %v675, 4294901760
    %v677 = vsub.f32 %v675, %v676
    %v678 = vand.u32 %v677, 4294901760
    %679 = vmatmul.mubr.f32.gmra.mrb[0].mxu0 %v678
    %v680 = vpop.f32.mrb[0].mxu0
    %v681 = vadd.f32 0.0, %v680
    %v682 = vpop.f32.mrb[0].mxu0
    %683 = vdwg.mxu0
    %684 = vmatprep.subr.mxu0 0.0
    %v685 = vand.u32 %v31, 4294901760
    %v686 = vsub.f32 %v31, %v685
    %v687 = vand.u32 %v686, 4294901760
    %v688 = vsub.f32 %v686, %v687
    %v689 = vand.u32 %v688, 4294901760
    %690 = vmatpush1.msra.mxu0 %v689
    %691 = vmatprep.subr.mxu0 0.0
    %v692 = vand.u32 %v32, 4294901760
    %v693 = vsub.f32 %v32, %v692
    %v694 = vand.u32 %v693, 4294901760
    %v695 = vsub.f32 %v693, %v694
    %v696 = vand.u32 %v695, 4294901760
    %697 = vmatpush1.msra.mxu0 %v696
    %698 = vmatprep.subr.mxu0 0.0
    %v699 = vand.u32 %v33, 4294901760
    %v700 = vsub.f32 %v33, %v699
    %v701 = vand.u32 %v700, 4294901760
    %v702 = vsub.f32 %v700, %v701
    %v703 = vand.u32 %v702, 4294901760
    %704 = vmatpush1.msra.mxu0 %v703
    %705 = vmatprep.subr.mxu0 0.0
    %v706 = vand.u32 %v34, 4294901760
    %v707 = vsub.f32 %v34, %v706
    %v708 = vand.u32 %v707, 4294901760
    %v709 = vsub.f32 %v707, %v708
    %v710 = vand.u32 %v709, 4294901760
    %711 = vmatpush1.msra.mxu0 %v710
    %712 = vmatprep.subr.mxu0 0.0
    %v713 = vand.u32 %v35, 4294901760
    %v714 = vsub.f32 %v35, %v713
    %v715 = vand.u32 %v714, 4294901760
    %v716 = vsub.f32 %v714, %v715
    %v717 = vand.u32 %v716, 4294901760
    %718 = vmatpush1.msra.mxu0 %v717
    %719 = vmatprep.subr.mxu0 0.0
    %v720 = vand.u32 %v36, 4294901760
    %v721 = vsub.f32 %v36, %v720
    %v722 = vand.u32 %v721, 4294901760
    %v723 = vsub.f32 %v721, %v722
    %v724 = vand.u32 %v723, 4294901760
    %725 = vmatpush1.msra.mxu0 %v724
    %726 = vmatprep.subr.mxu0 0.0
    %v727 = vand.u32 %v37, 4294901760
    %v728 = vsub.f32 %v37, %v727
    %v729 = vand.u32 %v728, 4294901760
    %v730 = vsub.f32 %v728, %v729
    %v731 = vand.u32 %v730, 4294901760
    %732 = vmatpush1.msra.mxu0 %v731
    %733 = vmatprep.subr.mxu0 0.0
    %v734 = vand.u32 %v38, 4294901760
    %v735 = vsub.f32 %v38, %v734
    %v736 = vand.u32 %v735, 4294901760
    %v737 = vsub.f32 %v735, %v736
    %v738 = vand.u32 %v737, 4294901760
    %739 = vmatpush1.msra.mxu0 %v738
    %740 = vmatprep.subr.mxu0 0.0
    %741 = vmatpush1.msra.mxu0 0.0
    %742 = vmatprep.subr.mxu0 0.0
    %743 = vmatpush1.msra.mxu0 0.0
    %744 = vmatprep.subr.mxu0 0.0
    %745 = vmatpush1.msra.mxu0 0.0
    %746 = vmatprep.subr.mxu0 0.0
    %747 = vmatpush1.msra.mxu0 0.0
    %748 = vmatprep.subr.mxu0 0.0
    %749 = vmatpush1.msra.mxu0 0.0
    %750 = vmatprep.subr.mxu0 0.0
    %751 = vmatpush1.msra.mxu0 0.0
    %752 = vmatprep.subr.mxu0 0.0
    %753 = vmatpush1.msra.mxu0 0.0
    %754 = vmatprep.subr.mxu0 0.0
    %755 = vmatpush1.msra.mxu0 0.0
    %756 = vmatprep.subr.mxu0 0.0
    %757 = vmatpush1.msra.mxu0 0.0
    %758 = vmatprep.subr.mxu0 0.0
    %759 = vmatpush1.msra.mxu0 0.0
    %760 = vmatprep.subr.mxu0 0.0
    %761 = vmatpush1.msra.mxu0 0.0
    %762 = vmatprep.subr.mxu0 0.0
    %763 = vmatpush1.msra.mxu0 0.0
    %764 = vmatprep.subr.mxu0 0.0
    %765 = vmatpush1.msra.mxu0 0.0
    %766 = vmatprep.subr.mxu0 0.0
    %767 = vmatpush1.msra.mxu0 0.0
    %768 = vmatprep.subr.mxu0 0.0
    %769 = vmatpush1.msra.mxu0 0.0
    %770 = vmatprep.subr.mxu0 0.0
    %771 = vmatpush1.msra.mxu0 0.0
    %772 = vmatprep.subr.mxu0 0.0
    %773 = vmatpush1.msra.mxu0 0.0
    %774 = vmatprep.subr.mxu0 0.0
    %775 = vmatpush1.msra.mxu0 0.0
    %776 = vmatprep.subr.mxu0 0.0
    %777 = vmatpush1.msra.mxu0 0.0
    %778 = vmatprep.subr.mxu0 0.0
    %779 = vmatpush1.msra.mxu0 0.0
    %780 = vmatprep.subr.mxu0 0.0
    %781 = vmatpush1.msra.mxu0 0.0
    %782 = vmatprep.subr.mxu0 0.0
    %783 = vmatpush1.msra.mxu0 0.0
    %784 = vmatprep.subr.mxu0 0.0
    %785 = vmatpush1.msra.mxu0 0.0
    %786 = vmatprep.subr.mxu0 0.0
    %787 = vmatpush1.msra.mxu0 0.0
    %788 = vmatprep.mubr.f32.mxu0 0.0
    %v789 = vand.u32 %v599, 4294901760
    %790 = vmatmul.mubr.f32.gmra.mrb[0].mxu0 %v789
    %v791 = vpop.f32.mrb[0].mxu0
    %v792 = vadd.f32 %v681, %v791
    %v793 = vpop.f32.mrb[0].mxu0
    %794 = vdwg.mxu0
    %795 = vmatprep.subr.mxu0 0.0
    %v796 = vand.u32 %v31, 4294901760
    %v797 = vsub.f32 %v31, %v796
    %798 = vmatpush1.msra.mxu0 %v797
    %799 = vmatprep.subr.mxu0 0.0
    %v800 = vand.u32 %v32, 4294901760
    %v801 = vsub.f32 %v32, %v800
    %802 = vmatpush1.msra.mxu0 %v801
    %803 = vmatprep.subr.mxu0 0.0
    %v804 = vand.u32 %v33, 4294901760
    %v805 = vsub.f32 %v33, %v804
    %806 = vmatpush1.msra.mxu0 %v805
    %807 = vmatprep.subr.mxu0 0.0
    %v808 = vand.u32 %v34, 4294901760
    %v809 = vsub.f32 %v34, %v808
    %810 = vmatpush1.msra.mxu0 %v809
    %811 = vmatprep.subr.mxu0 0.0
    %v812 = vand.u32 %v35, 4294901760
    %v813 = vsub.f32 %v35, %v812
    %814 = vmatpush1.msra.mxu0 %v813
    %815 = vmatprep.subr.mxu0 0.0
    %v816 = vand.u32 %v36, 4294901760
    %v817 = vsub.f32 %v36, %v816
    %818 = vmatpush1.msra.mxu0 %v817
    %819 = vmatprep.subr.mxu0 0.0
    %v820 = vand.u32 %v37, 4294901760
    %v821 = vsub.f32 %v37, %v820
    %822 = vmatpush1.msra.mxu0 %v821
    %823 = vmatprep.subr.mxu0 0.0
    %v824 = vand.u32 %v38, 4294901760
    %v825 = vsub.f32 %v38, %v824
    %826 = vmatpush1.msra.mxu0 %v825
    %827 = vmatprep.subr.mxu0 0.0
    %828 = vmatpush1.msra.mxu0 0.0
    %829 = vmatprep.subr.mxu0 0.0
    %830 = vmatpush1.msra.mxu0 0.0
    %831 = vmatprep.subr.mxu0 0.0
    %832 = vmatpush1.msra.mxu0 0.0
    %833 = vmatprep.subr.mxu0 0.0
    %834 = vmatpush1.msra.mxu0 0.0
    %835 = vmatprep.subr.mxu0 0.0
    %836 = vmatpush1.msra.mxu0 0.0
    %837 = vmatprep.subr.mxu0 0.0
    %838 = vmatpush1.msra.mxu0 0.0
    %839 = vmatprep.subr.mxu0 0.0
    %840 = vmatpush1.msra.mxu0 0.0
    %841 = vmatprep.subr.mxu0 0.0
    %842 = vmatpush1.msra.mxu0 0.0
    %843 = vmatprep.subr.mxu0 0.0
    %844 = vmatpush1.msra.mxu0 0.0
    %845 = vmatprep.subr.mxu0 0.0
    %846 = vmatpush1.msra.mxu0 0.0
    %847 = vmatprep.subr.mxu0 0.0
    %848 = vmatpush1.msra.mxu0 0.0
    %849 = vmatprep.subr.mxu0 0.0
    %850 = vmatpush1.msra.mxu0 0.0
    %851 = vmatprep.subr.mxu0 0.0
    %852 = vmatpush1.msra.mxu0 0.0
    %853 = vmatprep.subr.mxu0 0.0
    %854 = vmatpush1.msra.mxu0 0.0
    %855 = vmatprep.subr.mxu0 0.0
    %856 = vmatpush1.msra.mxu0 0.0
    %857 = vmatprep.subr.mxu0 0.0
    %858 = vmatpush1.msra.mxu0 0.0
    %859 = vmatprep.subr.mxu0 0.0
    %860 = vmatpush1.msra.mxu0 0.0
    %861 = vmatprep.subr.mxu0 0.0
    %862 = vmatpush1.msra.mxu0 0.0
    %863 = vmatprep.subr.mxu0 0.0
    %864 = vmatpush1.msra.mxu0 0.0
    %865 = vmatprep.subr.mxu0 0.0
    %866 = vmatpush1.msra.mxu0 0.0
    %867 = vmatprep.subr.mxu0 0.0
    %868 = vmatpush1.msra.mxu0 0.0
    %869 = vmatprep.subr.mxu0 0.0
    %870 = vmatpush1.msra.mxu0 0.0
    %871 = vmatprep.subr.mxu0 0.0
    %872 = vmatpush1.msra.mxu0 0.0
    %873 = vmatprep.subr.mxu0 0.0
    %874 = vmatpush1.msra.mxu0 0.0
    %875 = vmatprep.mubr.f32.mxu0 0.0
    %v876 = vand.u32 %v599, 4294901760
    %v877 = vsub.f32 %v599, %v876
    %878 = vmatmul.mubr.f32.gmra.mrb[0].mxu0 %v877
    %v879 = vpop.f32.mrb[0].mxu0
    %v880 = vadd.f32 %v792, %v879
    %v881 = vpop.f32.mrb[0].mxu0
    %882 = vdwg.mxu0
    %883 = vmatprep.subr.mxu0 0.0
    %v884 = vand.u32 %v31, 4294901760
    %885 = vmatpush1.msra.mxu0 %v884
    %886 = vmatprep.subr.mxu0 0.0
    %v887 = vand.u32 %v32, 4294901760
    %888 = vmatpush1.msra.mxu0 %v887
    %889 = vmatprep.subr.mxu0 0.0
    %v890 = vand.u32 %v33, 4294901760
    %891 = vmatpush1.msra.mxu0 %v890
    %892 = vmatprep.subr.mxu0 0.0
    %v893 = vand.u32 %v34, 4294901760
    %894 = vmatpush1.msra.mxu0 %v893
    %895 = vmatprep.subr.mxu0 0.0
    %v896 = vand.u32 %v35, 4294901760
    %897 = vmatpush1.msra.mxu0 %v896
    %898 = vmatprep.subr.mxu0 0.0
    %v899 = vand.u32 %v36, 4294901760
    %900 = vmatpush1.msra.mxu0 %v899
    %901 = vmatprep.subr.mxu0 0.0
    %v902 = vand.u32 %v37, 4294901760
    %903 = vmatpush1.msra.mxu0 %v902
    %904 = vmatprep.subr.mxu0 0.0
    %v905 = vand.u32 %v38, 4294901760
    %906 = vmatpush1.msra.mxu0 %v905
    %907 = vmatprep.subr.mxu0 0.0
    %908 = vmatpush1.msra.mxu0 0.0
    %909 = vmatprep.subr.mxu0 0.0
    %910 = vmatpush1.msra.mxu0 0.0
    %911 = vmatprep.subr.mxu0 0.0
    %912 = vmatpush1.msra.mxu0 0.0
    %913 = vmatprep.subr.mxu0 0.0
    %914 = vmatpush1.msra.mxu0 0.0
    %915 = vmatprep.subr.mxu0 0.0
    %916 = vmatpush1.msra.mxu0 0.0
    %917 = vmatprep.subr.mxu0 0.0
    %918 = vmatpush1.msra.mxu0 0.0
    %919 = vmatprep.subr.mxu0 0.0
    %920 = vmatpush1.msra.mxu0 0.0
    %921 = vmatprep.subr.mxu0 0.0
    %922 = vmatpush1.msra.mxu0 0.0
    %923 = vmatprep.subr.mxu0 0.0
    %924 = vmatpush1.msra.mxu0 0.0
    %925 = vmatprep.subr.mxu0 0.0
    %926 = vmatpush1.msra.mxu0 0.0
    %927 = vmatprep.subr.mxu0 0.0
    %928 = vmatpush1.msra.mxu0 0.0
    %929 = vmatprep.subr.mxu0 0.0
    %930 = vmatpush1.msra.mxu0 0.0
    %931 = vmatprep.subr.mxu0 0.0
    %932 = vmatpush1.msra.mxu0 0.0
    %933 = vmatprep.subr.mxu0 0.0
    %934 = vmatpush1.msra.mxu0 0.0
    %935 = vmatprep.subr.mxu0 0.0
    %936 = vmatpush1.msra.mxu0 0.0
    %937 = vmatprep.subr.mxu0 0.0
    %938 = vmatpush1.msra.mxu0 0.0
    %939 = vmatprep.subr.mxu0 0.0
    %940 = vmatpush1.msra.mxu0 0.0
    %941 = vmatprep.subr.mxu0 0.0
    %942 = vmatpush1.msra.mxu0 0.0
    %943 = vmatprep.subr.mxu0 0.0
    %944 = vmatpush1.msra.mxu0 0.0
    %945 = vmatprep.subr.mxu0 0.0
    %946 = vmatpush1.msra.mxu0 0.0
    %947 = vmatprep.subr.mxu0 0.0
    %948 = vmatpush1.msra.mxu0 0.0
    %949 = vmatprep.subr.mxu0 0.0
    %950 = vmatpush1.msra.mxu0 0.0
    %951 = vmatprep.subr.mxu0 0.0
    %952 = vmatpush1.msra.mxu0 0.0
    %953 = vmatprep.subr.mxu0 0.0
    %954 = vmatpush1.msra.mxu0 0.0
    %955 = vmatprep.mubr.f32.mxu0 0.0
    %v956 = vand.u32 %v599, 4294901760
    %v957 = vsub.f32 %v599, %v956
    %v958 = vand.u32 %v957, 4294901760
    %959 = vmatmul.mubr.f32.gmra.mrb[0].mxu0 %v958
    %v960 = vpop.f32.mrb[0].mxu0
    %v961 = vadd.f32 %v880, %v960
    %v962 = vpop.f32.mrb[0].mxu0
    %963 = vdwg.mxu0
    %964 = vmatprep.subr.mxu0 0.0
    %v965 = vand.u32 %v31, 4294901760
    %v966 = vsub.f32 %v31, %v965
    %v967 = vand.u32 %v966, 4294901760
    %968 = vmatpush1.msra.mxu0 %v967
    %969 = vmatprep.subr.mxu0 0.0
    %v970 = vand.u32 %v32, 4294901760
    %v971 = vsub.f32 %v32, %v970
    %v972 = vand.u32 %v971, 4294901760
    %973 = vmatpush1.msra.mxu0 %v972
    %974 = vmatprep.subr.mxu0 0.0
    %v975 = vand.u32 %v33, 4294901760
    %v976 = vsub.f32 %v33, %v975
    %v977 = vand.u32 %v976, 4294901760
    %978 = vmatpush1.msra.mxu0 %v977
    %979 = vmatprep.subr.mxu0 0.0
    %v980 = vand.u32 %v34, 4294901760
    %v981 = vsub.f32 %v34, %v980
    %v982 = vand.u32 %v981, 4294901760
    %983 = vmatpush1.msra.mxu0 %v982
    %984 = vmatprep.subr.mxu0 0.0
    %v985 = vand.u32 %v35, 4294901760
    %v986 = vsub.f32 %v35, %v985
    %v987 = vand.u32 %v986, 4294901760
    %988 = vmatpush1.msra.mxu0 %v987
    %989 = vmatprep.subr.mxu0 0.0
    %v990 = vand.u32 %v36, 4294901760
    %v991 = vsub.f32 %v36, %v990
    %v992 = vand.u32 %v991, 4294901760
    %993 = vmatpush1.msra.mxu0 %v992
    %994 = vmatprep.subr.mxu0 0.0
    %v995 = vand.u32 %v37, 4294901760
    %v996 = vsub.f32 %v37, %v995
    %v997 = vand.u32 %v996, 4294901760
    %998 = vmatpush1.msra.mxu0 %v997
    %999 = vmatprep.subr.mxu0 0.0
    %v1000 = vand.u32 %v38, 4294901760
    %v1001 = vsub.f32 %v38, %v1000
    %v1002 = vand.u32 %v1001, 4294901760
    %1003 = vmatpush1.msra.mxu0 %v1002
    %1004 = vmatprep.subr.mxu0 0.0
    %1005 = vmatpush1.msra.mxu0 0.0
    %1006 = vmatprep.subr.mxu0 0.0
    %1007 = vmatpush1.msra.mxu0 0.0
    %1008 = vmatprep.subr.mxu0 0.0
    %1009 = vmatpush1.msra.mxu0 0.0
    %1010 = vmatprep.subr.mxu0 0.0
    %1011 = vmatpush1.msra.mxu0 0.0
    %1012 = vmatprep.subr.mxu0 0.0
    %1013 = vmatpush1.msra.mxu0 0.0
    %1014 = vmatprep.subr.mxu0 0.0
    %1015 = vmatpush1.msra.mxu0 0.0
    %1016 = vmatprep.subr.mxu0 0.0
    %1017 = vmatpush1.msra.mxu0 0.0
    %1018 = vmatprep.subr.mxu0 0.0
    %1019 = vmatpush1.msra.mxu0 0.0
    %1020 = vmatprep.subr.mxu0 0.0
    %1021 = vmatpush1.msra.mxu0 0.0
    %1022 = vmatprep.subr.mxu0 0.0
    %1023 = vmatpush1.msra.mxu0 0.0
    %1024 = vmatprep.subr.mxu0 0.0
    %1025 = vmatpush1.msra.mxu0 0.0
    %1026 = vmatprep.subr.mxu0 0.0
    %1027 = vmatpush1.msra.mxu0 0.0
    %1028 = vmatprep.subr.mxu0 0.0
    %1029 = vmatpush1.msra.mxu0 0.0
    %1030 = vmatprep.subr.mxu0 0.0
    %1031 = vmatpush1.msra.mxu0 0.0
    %1032 = vmatprep.subr.mxu0 0.0
    %1033 = vmatpush1.msra.mxu0 0.0
    %1034 = vmatprep.subr.mxu0 0.0
    %1035 = vmatpush1.msra.mxu0 0.0
    %1036 = vmatprep.subr.mxu0 0.0
    %1037 = vmatpush1.msra.mxu0 0.0
    %1038 = vmatprep.subr.mxu0 0.0
    %1039 = vmatpush1.msra.mxu0 0.0
    %1040 = vmatprep.subr.mxu0 0.0
    %1041 = vmatpush1.msra.mxu0 0.0
    %1042 = vmatprep.subr.mxu0 0.0
    %1043 = vmatpush1.msra.mxu0 0.0
    %1044 = vmatprep.subr.mxu0 0.0
    %1045 = vmatpush1.msra.mxu0 0.0
    %1046 = vmatprep.subr.mxu0 0.0
    %1047 = vmatpush1.msra.mxu0 0.0
    %1048 = vmatprep.subr.mxu0 0.0
    %1049 = vmatpush1.msra.mxu0 0.0
    %1050 = vmatprep.subr.mxu0 0.0
    %1051 = vmatpush1.msra.mxu0 0.0
    %1052 = vmatprep.mubr.f32.mxu0 0.0
    %v1053 = vand.u32 %v599, 4294901760
    %1054 = vmatmul.mubr.f32.gmra.mrb[0].mxu0 %v1053
    %v1055 = vpop.f32.mrb[0].mxu0
    %v1056 = vadd.f32 %v961, %v1055
    %v1057 = vpop.f32.mrb[0].mxu0
    %1058 = vdwg.mxu0
    %1059 = vmatprep.subr.mxu0 0.0
    %v1060 = vand.u32 %v31, 4294901760
    %1061 = vmatpush1.msra.mxu0 %v1060
    %1062 = vmatprep.subr.mxu0 0.0
    %v1063 = vand.u32 %v32, 4294901760
    %1064 = vmatpush1.msra.mxu0 %v1063
    %1065 = vmatprep.subr.mxu0 0.0
    %v1066 = vand.u32 %v33, 4294901760
    %1067 = vmatpush1.msra.mxu0 %v1066
    %1068 = vmatprep.subr.mxu0 0.0
    %v1069 = vand.u32 %v34, 4294901760
    %1070 = vmatpush1.msra.mxu0 %v1069
    %1071 = vmatprep.subr.mxu0 0.0
    %v1072 = vand.u32 %v35, 4294901760
    %1073 = vmatpush1.msra.mxu0 %v1072
    %1074 = vmatprep.subr.mxu0 0.0
    %v1075 = vand.u32 %v36, 4294901760
    %1076 = vmatpush1.msra.mxu0 %v1075
    %1077 = vmatprep.subr.mxu0 0.0
    %v1078 = vand.u32 %v37, 4294901760
    %1079 = vmatpush1.msra.mxu0 %v1078
    %1080 = vmatprep.subr.mxu0 0.0
    %v1081 = vand.u32 %v38, 4294901760
    %1082 = vmatpush1.msra.mxu0 %v1081
    %1083 = vmatprep.subr.mxu0 0.0
    %1084 = vmatpush1.msra.mxu0 0.0
    %1085 = vmatprep.subr.mxu0 0.0
    %1086 = vmatpush1.msra.mxu0 0.0
    %1087 = vmatprep.subr.mxu0 0.0
    %1088 = vmatpush1.msra.mxu0 0.0
    %1089 = vmatprep.subr.mxu0 0.0
    %1090 = vmatpush1.msra.mxu0 0.0
    %1091 = vmatprep.subr.mxu0 0.0
    %1092 = vmatpush1.msra.mxu0 0.0
    %1093 = vmatprep.subr.mxu0 0.0
    %1094 = vmatpush1.msra.mxu0 0.0
    %1095 = vmatprep.subr.mxu0 0.0
    %1096 = vmatpush1.msra.mxu0 0.0
    %1097 = vmatprep.subr.mxu0 0.0
    %1098 = vmatpush1.msra.mxu0 0.0
    %1099 = vmatprep.subr.mxu0 0.0
    %1100 = vmatpush1.msra.mxu0 0.0
    %1101 = vmatprep.subr.mxu0 0.0
    %1102 = vmatpush1.msra.mxu0 0.0
    %1103 = vmatprep.subr.mxu0 0.0
    %1104 = vmatpush1.msra.mxu0 0.0
    %1105 = vmatprep.subr.mxu0 0.0
    %1106 = vmatpush1.msra.mxu0 0.0
    %1107 = vmatprep.subr.mxu0 0.0
    %1108 = vmatpush1.msra.mxu0 0.0
    %1109 = vmatprep.subr.mxu0 0.0
    %1110 = vmatpush1.msra.mxu0 0.0
    %1111 = vmatprep.subr.mxu0 0.0
    %1112 = vmatpush1.msra.mxu0 0.0
    %1113 = vmatprep.subr.mxu0 0.0
    %1114 = vmatpush1.msra.mxu0 0.0
    %1115 = vmatprep.subr.mxu0 0.0
    %1116 = vmatpush1.msra.mxu0 0.0
    %1117 = vmatprep.subr.mxu0 0.0
    %1118 = vmatpush1.msra.mxu0 0.0
    %1119 = vmatprep.subr.mxu0 0.0
    %1120 = vmatpush1.msra.mxu0 0.0
    %1121 = vmatprep.subr.mxu0 0.0
    %1122 = vmatpush1.msra.mxu0 0.0
    %1123 = vmatprep.subr.mxu0 0.0
    %1124 = vmatpush1.msra.mxu0 0.0
    %1125 = vmatprep.subr.mxu0 0.0
    %1126 = vmatpush1.msra.mxu0 0.0
    %1127 = vmatprep.subr.mxu0 0.0
    %1128 = vmatpush1.msra.mxu0 0.0
    %1129 = vmatprep.subr.mxu0 0.0
    %1130 = vmatpush1.msra.mxu0 0.0
    %1131 = vmatprep.mubr.f32.mxu0 0.0
    %v1132 = vand.u32 %v599, 4294901760
    %1133 = vmatmul.mubr.f32.gmra.mrb[0].mxu0 %v1132
    %v1134 = vpop.f32.mrb[0].mxu0
    %v1135 = vadd.f32 %v1056, %v1134
    %v1136 = vpop.f32.mrb[0].mxu0
    %1137 = vdwg.mxu0
    %1139 = vset.pattern.permute.xlu0 4
    %1140 = vperm.xlu0 %1139, %v595
    %v1141 = vpop.permute.xlu0 %1140
    %1144 = vset.pattern.permute.xlu0 4
    %1145 = vperm.xlu0 %1144, %v1135
    %v1146 = vpop.permute.xlu0 %1145
    %v1148 = vlaneseq
    %v1149 = vshrl.u32 %v1148, 7
    %v1150 = vsub.s32 0, %v1149
    %v1151 = vrot.slane %v39, %v1150
    %v1152 = vlaneseq
    %v1153 = vshrl.u32 %v1152, 7
    %v1154 = vsub.s32 0, %v1153
    %v1155 = vrot.slane %v40, %v1154
    %v1156 = vmul.f32 %v1141, %v1151
    %v1157 = vmul.f32 %v1146, %v1155
    %v1158 = vmul.f32 %v595, %v595
    %v1159 = vmul.f32 %v1135, %v1135
    %v1160 = vmul.f32 %v39, %v39
    %v1161 = vmul.f32 %v40, %v40
    %1162 = vset.pattern.permute.xlu0 5
    %1163 = vperm.xlu0 %1162, %v595
    %v1164 = vpop.permute.xlu0 %1163
    %1166 = vset.pattern.permute.xlu0 5
    %1167 = vperm.xlu0 %1166, %v1135
    %v1168 = vpop.permute.xlu0 %1167
    %v1170 = vlaneseq
    %v1171 = vshrl.u32 %v1170, 7
    %v1172 = vsub.s32 1, %v1171
    %v1173 = vrot.slane %v39, %v1172
    %v1174 = vlaneseq
    %v1175 = vshrl.u32 %v1174, 7
    %v1176 = vsub.s32 1, %v1175
    %v1177 = vrot.slane %v40, %v1176
    %v1178 = vmul.f32 %v1164, %v1173
    %v1179 = vmul.f32 %v1168, %v1177
    %v1180 = vadd.f32 %v1156, %v1178
    %v1181 = vadd.f32 %v1157, %v1179
    %1184 = vrot.lane.b32.xlu0 %v1158, 127
    %v1185 = vpop.permute.xlu0 %1184
    %1186 = vrot.lane.b32.xlu0 %v1159, 127
    %v1187 = vpop.permute.xlu0 %1186
    %v1190 = vadd.f32 %v1158, %v1185
    %v1191 = vadd.f32 %v1159, %v1187
    %v1194 = vrot.slane %v1160, 1
    %v1195 = vrot.slane %v1161, 1
    %v1198 = vadd.f32 %v1160, %v1194
    %v1199 = vadd.f32 %v1161, %v1195
    %1201 = vset.pattern.permute.xlu0 4
    %1202 = vperm.xlu0 %1201, %v1190
    %v1203 = vpop.permute.xlu0 %1202
    %1206 = vset.pattern.permute.xlu0 4
    %1207 = vperm.xlu0 %1206, %v1191
    %v1208 = vpop.permute.xlu0 %1207
    %v1210 = vlaneseq
    %v1211 = vshrl.u32 %v1210, 7
    %v1212 = vsub.s32 0, %v1211
    %v1213 = vrot.slane %v1198, %v1212
    %v1214 = vlaneseq
    %v1215 = vshrl.u32 %v1214, 7
    %v1216 = vsub.s32 0, %v1215
    %v1217 = vrot.slane %v1199, %v1216
    %v1218 = vadd.f32 %v1203, %v1213
    %v1219 = vadd.f32 %v1208, %v1217
    %v1220 = vmul.f32 %v1180, 2.0
    %v1221 = vmul.f32 %v1181, 2.0
    %v1222 = vsub.f32 %v1218, %v1220
    %v1223 = vsub.f32 %v1219, %v1221
    %vm1224 = vcmp.le.f32.partialorder %v1222, 0.0625
    %vm1225 = vcmp.le.f32.partialorder %v1223, 0.0625
    %v1226 = vcvt.s32.f32 %v42
    %v1227 = vsel %vm1224, %v1226, 64.0
    %v1228 = vsel %vm1225, %v1226, 64.0
    %v1229 = vsel %vm57, %v1227, inf
    %1230 = vmin.xlane.f32.xlu0 %v1229
    %v1231 = vpop.xlane.xlu0 %1230
    %v1232 = vsel %vm57, %v1228, inf
    %1233 = vmin.xlane.f32.xlu0 %v1232
    %v1234 = vpop.xlane.xlu0 %1233
    %vm1235 = vcmp.eq.f32.partialorder %v1226, %v1231
    %vm1236 = vcmp.eq.f32.partialorder %v1226, %v1234
    %v1237 = vsel %vm1235, 1, 0
    %v1238 = vsel %vm1236, 1, 0
    %v1239 = vcvt.s32.f32 %v1237
    %v1240 = vcvt.s32.f32 %v1238
    %vm1241 = vcmp.ne.f32.partialorder %v1226, %v1231
    %vm1242 = vcmp.ne.f32.partialorder %v1226, %v1234
    %vm1243 = vmand %vm1224, %vm1241
    %vm1244 = vmand %vm1225, %vm1242
    %v1245 = vsel %vm1243, %v1226, 64.0
    %v1246 = vsel %vm1244, %v1226, 64.0
    %v1247 = vsel %vm57, %v1245, inf
    %1248 = vmin.xlane.f32.xlu0 %v1247
    %v1249 = vpop.xlane.xlu0 %1248
    %v1250 = vsel %vm57, %v1246, inf
    %1251 = vmin.xlane.f32.xlu0 %v1250
    %v1252 = vpop.xlane.xlu0 %1251
    %vm1253 = vcmp.eq.f32.partialorder %v1226, %v1249
    %vm1254 = vcmp.eq.f32.partialorder %v1226, %v1252
    %v1255 = vsel %vm1253, 1, 0
    %v1256 = vsel %vm1254, 1, 0
    %v1257 = vcvt.s32.f32 %v1255
    %v1258 = vcvt.s32.f32 %v1256
    %vm1259 = vcmp.lt.f32.partialorder %v1249, 64.0
    %vm1260 = vcmp.lt.f32.partialorder %v1252, 64.0
    %v1261 = vsel %vm1259, 1, 0
    %v1262 = vsel %vm1260, 1, 0
    %vm1263 = vcmp.eq.s32.totalorder %v1261, 1
    %vm1264 = vcmp.eq.s32.totalorder %v1262, 1
    %v1265 = vsel %vm1263, %v1257, %v1239
    %v1266 = vsel %vm1264, %v1258, %v1240
    %vm1267 = vcmp.ne.f32.partialorder %v1226, %v1249
    %vm1268 = vcmp.ne.f32.partialorder %v1226, %v1252
    %vm1269 = vmand %vm1243, %vm1267
    %vm1270 = vmand %vm1244, %vm1268
    %v1271 = vsel %vm1269, %v1226, 64.0
    %v1272 = vsel %vm1270, %v1226, 64.0
    %v1273 = vsel %vm57, %v1271, inf
    %1274 = vmin.xlane.f32.xlu0 %v1273
    %v1275 = vpop.xlane.xlu0 %1274
    %v1276 = vsel %vm57, %v1272, inf
    %1277 = vmin.xlane.f32.xlu0 %v1276
    %v1278 = vpop.xlane.xlu0 %1277
    %vm1279 = vcmp.eq.f32.partialorder %v1226, %v1275
    %vm1280 = vcmp.eq.f32.partialorder %v1226, %v1278
    %v1281 = vsel %vm1279, 1, 0
    %v1282 = vsel %vm1280, 1, 0
    %v1283 = vcvt.s32.f32 %v1281
    %v1284 = vcvt.s32.f32 %v1282
    %vm1285 = vcmp.lt.f32.partialorder %v1275, 64.0
    %vm1286 = vcmp.lt.f32.partialorder %v1278, 64.0
    %v1287 = vsel %vm1285, 1, 0
    %v1288 = vsel %vm1286, 1, 0
    %vm1289 = vcmp.eq.s32.totalorder %v1287, 1
    %vm1290 = vcmp.eq.s32.totalorder %v1288, 1
    %v1291 = vsel %vm1289, %v1283, %v1239
    %v1292 = vsel %vm1290, %v1284, %v1240
    %vm1293 = vcmp.ne.f32.partialorder %v1226, %v1275
    %vm1294 = vcmp.ne.f32.partialorder %v1226, %v1278
    %vm1295 = vmand %vm1269, %vm1293
    %vm1296 = vmand %vm1270, %vm1294
    %v1297 = vsel %vm1295, %v1226, 64.0
    %v1298 = vsel %vm1296, %v1226, 64.0
    %v1299 = vsel %vm57, %v1297, inf
    %1300 = vmin.xlane.f32.xlu0 %v1299
    %v1301 = vpop.xlane.xlu0 %1300
    %v1302 = vsel %vm57, %v1298, inf
    %1303 = vmin.xlane.f32.xlu0 %v1302
    %v1304 = vpop.xlane.xlu0 %1303
    %vm1305 = vcmp.eq.f32.partialorder %v1226, %v1301
    %vm1306 = vcmp.eq.f32.partialorder %v1226, %v1304
    %v1307 = vsel %vm1305, 1, 0
    %v1308 = vsel %vm1306, 1, 0
    %v1309 = vcvt.s32.f32 %v1307
    %v1310 = vcvt.s32.f32 %v1308
    %vm1311 = vcmp.lt.f32.partialorder %v1301, 64.0
    %vm1312 = vcmp.lt.f32.partialorder %v1304, 64.0
    %v1313 = vsel %vm1311, 1, 0
    %v1314 = vsel %vm1312, 1, 0
    %vm1315 = vcmp.eq.s32.totalorder %v1313, 1
    %vm1316 = vcmp.eq.s32.totalorder %v1314, 1
    %v1317 = vsel %vm1315, %v1309, %v1239
    %v1318 = vsel %vm1316, %v1310, %v1240
    %vm1319 = vcmp.ne.f32.partialorder %v1226, %v1301
    %vm1320 = vcmp.ne.f32.partialorder %v1226, %v1304
    %vm1321 = vmand %vm1295, %vm1319
    %vm1322 = vmand %vm1296, %vm1320
    %v1323 = vsel %vm1321, %v1226, 64.0
    %v1324 = vsel %vm1322, %v1226, 64.0
    %v1325 = vsel %vm57, %v1323, inf
    %1326 = vmin.xlane.f32.xlu0 %v1325
    %v1327 = vpop.xlane.xlu0 %1326
    %v1328 = vsel %vm57, %v1324, inf
    %1329 = vmin.xlane.f32.xlu0 %v1328
    %v1330 = vpop.xlane.xlu0 %1329
    %vm1331 = vcmp.eq.f32.partialorder %v1226, %v1327
    %vm1332 = vcmp.eq.f32.partialorder %v1226, %v1330
    %v1333 = vsel %vm1331, 1, 0
    %v1334 = vsel %vm1332, 1, 0
    %v1335 = vcvt.s32.f32 %v1333
    %v1336 = vcvt.s32.f32 %v1334
    %vm1337 = vcmp.lt.f32.partialorder %v1327, 64.0
    %vm1338 = vcmp.lt.f32.partialorder %v1330, 64.0
    %v1339 = vsel %vm1337, 1, 0
    %v1340 = vsel %vm1338, 1, 0
    %vm1341 = vcmp.eq.s32.totalorder %v1339, 1
    %vm1342 = vcmp.eq.s32.totalorder %v1340, 1
    %v1343 = vsel %vm1341, %v1335, %v1239
    %v1344 = vsel %vm1342, %v1336, %v1240
    %vm1345 = vcmp.ne.f32.partialorder %v1226, %v1327
    %vm1346 = vcmp.ne.f32.partialorder %v1226, %v1330
    %vm1347 = vmand %vm1321, %vm1345
    %vm1348 = vmand %vm1322, %vm1346
    %v1349 = vsel %vm1347, %v1226, 64.0
    %v1350 = vsel %vm1348, %v1226, 64.0
    %v1351 = vsel %vm57, %v1349, inf
    %1352 = vmin.xlane.f32.xlu0 %v1351
    %v1353 = vpop.xlane.xlu0 %1352
    %v1354 = vsel %vm57, %v1350, inf
    %1355 = vmin.xlane.f32.xlu0 %v1354
    %v1356 = vpop.xlane.xlu0 %1355
    %vm1357 = vcmp.eq.f32.partialorder %v1226, %v1353
    %vm1358 = vcmp.eq.f32.partialorder %v1226, %v1356
    %v1359 = vsel %vm1357, 1, 0
    %v1360 = vsel %vm1358, 1, 0
    %v1361 = vcvt.s32.f32 %v1359
    %v1362 = vcvt.s32.f32 %v1360
    %vm1363 = vcmp.lt.f32.partialorder %v1353, 64.0
    %vm1364 = vcmp.lt.f32.partialorder %v1356, 64.0
    %v1365 = vsel %vm1363, 1, 0
    %v1366 = vsel %vm1364, 1, 0
    %vm1367 = vcmp.eq.s32.totalorder %v1365, 1
    %vm1368 = vcmp.eq.s32.totalorder %v1366, 1
    %v1369 = vsel %vm1367, %v1361, %v1239
    %v1370 = vsel %vm1368, %v1362, %v1240
    %vm1371 = vcmp.ne.f32.partialorder %v1226, %v1353
    %vm1372 = vcmp.ne.f32.partialorder %v1226, %v1356
    %vm1373 = vmand %vm1347, %vm1371
    %vm1374 = vmand %vm1348, %vm1372
    %v1375 = vsel %vm1373, %v1226, 64.0
    %v1376 = vsel %vm1374, %v1226, 64.0
    %v1377 = vsel %vm57, %v1375, inf
    %1378 = vmin.xlane.f32.xlu0 %v1377
    %v1379 = vpop.xlane.xlu0 %1378
    %v1380 = vsel %vm57, %v1376, inf
    %1381 = vmin.xlane.f32.xlu0 %v1380
    %v1382 = vpop.xlane.xlu0 %1381
    %vm1383 = vcmp.eq.f32.partialorder %v1226, %v1379
    %vm1384 = vcmp.eq.f32.partialorder %v1226, %v1382
    %v1385 = vsel %vm1383, 1, 0
    %v1386 = vsel %vm1384, 1, 0
    %v1387 = vcvt.s32.f32 %v1385
    %v1388 = vcvt.s32.f32 %v1386
    %vm1389 = vcmp.lt.f32.partialorder %v1379, 64.0
    %vm1390 = vcmp.lt.f32.partialorder %v1382, 64.0
    %v1391 = vsel %vm1389, 1, 0
    %v1392 = vsel %vm1390, 1, 0
    %vm1393 = vcmp.eq.s32.totalorder %v1391, 1
    %vm1394 = vcmp.eq.s32.totalorder %v1392, 1
    %v1395 = vsel %vm1393, %v1387, %v1239
    %v1396 = vsel %vm1394, %v1388, %v1240
    %vm1397 = vcmp.ne.f32.partialorder %v1226, %v1379
    %vm1398 = vcmp.ne.f32.partialorder %v1226, %v1382
    %vm1399 = vmand %vm1373, %vm1397
    %vm1400 = vmand %vm1374, %vm1398
    %v1401 = vsel %vm1399, %v1226, 64.0
    %v1402 = vsel %vm1400, %v1226, 64.0
    %v1403 = vsel %vm57, %v1401, inf
    %1404 = vmin.xlane.f32.xlu0 %v1403
    %v1405 = vpop.xlane.xlu0 %1404
    %v1406 = vsel %vm57, %v1402, inf
    %1407 = vmin.xlane.f32.xlu0 %v1406
    %v1408 = vpop.xlane.xlu0 %1407
    %vm1409 = vcmp.eq.f32.partialorder %v1226, %v1405
    %vm1410 = vcmp.eq.f32.partialorder %v1226, %v1408
    %v1411 = vsel %vm1409, 1, 0
    %v1412 = vsel %vm1410, 1, 0
    %v1413 = vcvt.s32.f32 %v1411
    %v1414 = vcvt.s32.f32 %v1412
    %vm1415 = vcmp.lt.f32.partialorder %v1405, 64.0
    %vm1416 = vcmp.lt.f32.partialorder %v1408, 64.0
    %v1417 = vsel %vm1415, 1, 0
    %v1418 = vsel %vm1416, 1, 0
    %vm1419 = vcmp.eq.s32.totalorder %v1417, 1
    %vm1420 = vcmp.eq.s32.totalorder %v1418, 1
    %v1421 = vsel %vm1419, %v1413, %v1239
    %v1422 = vsel %vm1420, %v1414, %v1240
    %v1424 = vsel %vm57, %v1239, 0
    %v1427 = vsel %vm57, %v1265, 0
    %v1430 = vsel %vm57, %v1291, 0
    %v1433 = vsel %vm57, %v1317, 0
    %v1436 = vsel %vm57, %v1343, 0
    %v1439 = vsel %vm57, %v1369, 0
    %v1442 = vsel %vm57, %v1395, 0
    %v1445 = vsel %vm57, %v1421, 0
    %1447 = vmatprep.subr.mxu0 0.0
    %v1448 = vand.u32 %v23, 4294901760
    %1449 = vmatpush1.msra.mxu0 %v1448
    %1450 = vmatprep.subr.mxu0 0.0
    %v1451 = vand.u32 %v24, 4294901760
    %1452 = vmatpush1.msra.mxu0 %v1451
    %1453 = vmatprep.subr.mxu0 0.0
    %v1454 = vand.u32 %v25, 4294901760
    %1455 = vmatpush1.msra.mxu0 %v1454
    %1456 = vmatprep.subr.mxu0 0.0
    %v1457 = vand.u32 %v26, 4294901760
    %1458 = vmatpush1.msra.mxu0 %v1457
    %1459 = vmatprep.subr.mxu0 0.0
    %v1460 = vand.u32 %v27, 4294901760
    %1461 = vmatpush1.msra.mxu0 %v1460
    %1462 = vmatprep.subr.mxu0 0.0
    %v1463 = vand.u32 %v28, 4294901760
    %1464 = vmatpush1.msra.mxu0 %v1463
    %1465 = vmatprep.subr.mxu0 0.0
    %v1466 = vand.u32 %v29, 4294901760
    %1467 = vmatpush1.msra.mxu0 %v1466
    %1468 = vmatprep.subr.mxu0 0.0
    %v1469 = vand.u32 %v30, 4294901760
    %1470 = vmatpush1.msra.mxu0 %v1469
    %1471 = vmatprep.subr.mxu0 0.0
    %1472 = vmatpush1.msra.mxu0 0.0
    %1473 = vmatprep.subr.mxu0 0.0
    %1474 = vmatpush1.msra.mxu0 0.0
    %1475 = vmatprep.subr.mxu0 0.0
    %1476 = vmatpush1.msra.mxu0 0.0
    %1477 = vmatprep.subr.mxu0 0.0
    %1478 = vmatpush1.msra.mxu0 0.0
    %1479 = vmatprep.subr.mxu0 0.0
    %1480 = vmatpush1.msra.mxu0 0.0
    %1481 = vmatprep.subr.mxu0 0.0
    %1482 = vmatpush1.msra.mxu0 0.0
    %1483 = vmatprep.subr.mxu0 0.0
    %1484 = vmatpush1.msra.mxu0 0.0
    %1485 = vmatprep.subr.mxu0 0.0
    %1486 = vmatpush1.msra.mxu0 0.0
    %1487 = vmatprep.subr.mxu0 0.0
    %1488 = vmatpush1.msra.mxu0 0.0
    %1489 = vmatprep.subr.mxu0 0.0
    %1490 = vmatpush1.msra.mxu0 0.0
    %1491 = vmatprep.subr.mxu0 0.0
    %1492 = vmatpush1.msra.mxu0 0.0
    %1493 = vmatprep.subr.mxu0 0.0
    %1494 = vmatpush1.msra.mxu0 0.0
    %1495 = vmatprep.subr.mxu0 0.0
    %1496 = vmatpush1.msra.mxu0 0.0
    %1497 = vmatprep.subr.mxu0 0.0
    %1498 = vmatpush1.msra.mxu0 0.0
    %1499 = vmatprep.subr.mxu0 0.0
    %1500 = vmatpush1.msra.mxu0 0.0
    %1501 = vmatprep.subr.mxu0 0.0
    %1502 = vmatpush1.msra.mxu0 0.0
    %1503 = vmatprep.subr.mxu0 0.0
    %1504 = vmatpush1.msra.mxu0 0.0
    %1505 = vmatprep.subr.mxu0 0.0
    %1506 = vmatpush1.msra.mxu0 0.0
    %1507 = vmatprep.subr.mxu0 0.0
    %1508 = vmatpush1.msra.mxu0 0.0
    %1509 = vmatprep.subr.mxu0 0.0
    %1510 = vmatpush1.msra.mxu0 0.0
    %1511 = vmatprep.subr.mxu0 0.0
    %1512 = vmatpush1.msra.mxu0 0.0
    %1513 = vmatprep.subr.mxu0 0.0
    %1514 = vmatpush1.msra.mxu0 0.0
    %1515 = vmatprep.subr.mxu0 0.0
    %1516 = vmatpush1.msra.mxu0 0.0
    %1517 = vmatprep.subr.mxu0 0.0
    %1518 = vmatpush1.msra.mxu0 0.0
    %1519 = vmatprep.mubr.f32.mxu0 0.0
    %v1520 = vand.u32 %v1424, 4294901760
    %v1521 = vsub.f32 %v1424, %v1520
    %v1522 = vand.u32 %v1521, 4294901760
    %v1523 = vsub.f32 %v1521, %v1522
    %v1524 = vand.u32 %v1523, 4294901760
    %1525 = vmatmul.mubr.f32.gmra.mrb[0].mxu0 %v1524
    %v1526 = vpop.f32.mrb[0].mxu0
    %v1527 = vadd.f32 0.0, %v1526
    %v1528 = vpop.f32.mrb[0].mxu0
    %1529 = vmatprep.mubr.f32.mxu0 0.0
    %v1530 = vand.u32 %v1427, 4294901760
    %v1531 = vsub.f32 %v1427, %v1530
    %v1532 = vand.u32 %v1531, 4294901760
    %v1533 = vsub.f32 %v1531, %v1532
    %v1534 = vand.u32 %v1533, 4294901760
    %1535 = vmatmul.mubr.f32.gmra.mrb[0].mxu0 %v1534
    %v1536 = vpop.f32.mrb[0].mxu0
    %v1537 = vadd.f32 0.0, %v1536
    %v1538 = vpop.f32.mrb[0].mxu0
    %1539 = vmatprep.mubr.f32.mxu0 0.0
    %v1540 = vand.u32 %v1430, 4294901760
    %v1541 = vsub.f32 %v1430, %v1540
    %v1542 = vand.u32 %v1541, 4294901760
    %v1543 = vsub.f32 %v1541, %v1542
    %v1544 = vand.u32 %v1543, 4294901760
    %1545 = vmatmul.mubr.f32.gmra.mrb[0].mxu0 %v1544
    %v1546 = vpop.f32.mrb[0].mxu0
    %v1547 = vadd.f32 0.0, %v1546
    %v1548 = vpop.f32.mrb[0].mxu0
    %1549 = vmatprep.mubr.f32.mxu0 0.0
    %v1550 = vand.u32 %v1433, 4294901760
    %v1551 = vsub.f32 %v1433, %v1550
    %v1552 = vand.u32 %v1551, 4294901760
    %v1553 = vsub.f32 %v1551, %v1552
    %v1554 = vand.u32 %v1553, 4294901760
    %1555 = vmatmul.mubr.f32.gmra.mrb[0].mxu0 %v1554
    %v1556 = vpop.f32.mrb[0].mxu0
    %v1557 = vadd.f32 0.0, %v1556
    %v1558 = vpop.f32.mrb[0].mxu0
    %1559 = vmatprep.mubr.f32.mxu0 0.0
    %v1560 = vand.u32 %v1436, 4294901760
    %v1561 = vsub.f32 %v1436, %v1560
    %v1562 = vand.u32 %v1561, 4294901760
    %v1563 = vsub.f32 %v1561, %v1562
    %v1564 = vand.u32 %v1563, 4294901760
    %1565 = vmatmul.mubr.f32.gmra.mrb[0].mxu0 %v1564
    %v1566 = vpop.f32.mrb[0].mxu0
    %v1567 = vadd.f32 0.0, %v1566
    %v1568 = vpop.f32.mrb[0].mxu0
    %1569 = vmatprep.mubr.f32.mxu0 0.0
    %v1570 = vand.u32 %v1439, 4294901760
    %v1571 = vsub.f32 %v1439, %v1570
    %v1572 = vand.u32 %v1571, 4294901760
    %v1573 = vsub.f32 %v1571, %v1572
    %v1574 = vand.u32 %v1573, 4294901760
    %1575 = vmatmul.mubr.f32.gmra.mrb[0].mxu0 %v1574
    %v1576 = vpop.f32.mrb[0].mxu0
    %v1577 = vadd.f32 0.0, %v1576
    %v1578 = vpop.f32.mrb[0].mxu0
    %1579 = vmatprep.mubr.f32.mxu0 0.0
    %v1580 = vand.u32 %v1442, 4294901760
    %v1581 = vsub.f32 %v1442, %v1580
    %v1582 = vand.u32 %v1581, 4294901760
    %v1583 = vsub.f32 %v1581, %v1582
    %v1584 = vand.u32 %v1583, 4294901760
    %1585 = vmatmul.mubr.f32.gmra.mrb[0].mxu0 %v1584
    %v1586 = vpop.f32.mrb[0].mxu0
    %v1587 = vadd.f32 0.0, %v1586
    %v1588 = vpop.f32.mrb[0].mxu0
    %1589 = vmatprep.mubr.f32.mxu0 0.0
    %v1590 = vand.u32 %v1445, 4294901760
    %v1591 = vsub.f32 %v1445, %v1590
    %v1592 = vand.u32 %v1591, 4294901760
    %v1593 = vsub.f32 %v1591, %v1592
    %v1594 = vand.u32 %v1593, 4294901760
    %1595 = vmatmul.mubr.f32.gmra.mrb[0].mxu0 %v1594
    %v1596 = vpop.f32.mrb[0].mxu0
    %v1597 = vadd.f32 0.0, %v1596
    %v1598 = vpop.f32.mrb[0].mxu0
    %1599 = vdwg.mxu0
    %1600 = vmatprep.subr.mxu0 0.0
    %v1601 = vand.u32 %v23, 4294901760
    %v1602 = vsub.f32 %v23, %v1601
    %v1603 = vand.u32 %v1602, 4294901760
    %v1604 = vsub.f32 %v1602, %v1603
    %v1605 = vand.u32 %v1604, 4294901760
    %1606 = vmatpush1.msra.mxu0 %v1605
    %1607 = vmatprep.subr.mxu0 0.0
    %v1608 = vand.u32 %v24, 4294901760
    %v1609 = vsub.f32 %v24, %v1608
    %v1610 = vand.u32 %v1609, 4294901760
    %v1611 = vsub.f32 %v1609, %v1610
    %v1612 = vand.u32 %v1611, 4294901760
    %1613 = vmatpush1.msra.mxu0 %v1612
    %1614 = vmatprep.subr.mxu0 0.0
    %v1615 = vand.u32 %v25, 4294901760
    %v1616 = vsub.f32 %v25, %v1615
    %v1617 = vand.u32 %v1616, 4294901760
    %v1618 = vsub.f32 %v1616, %v1617
    %v1619 = vand.u32 %v1618, 4294901760
    %1620 = vmatpush1.msra.mxu0 %v1619
    %1621 = vmatprep.subr.mxu0 0.0
    %v1622 = vand.u32 %v26, 4294901760
    %v1623 = vsub.f32 %v26, %v1622
    %v1624 = vand.u32 %v1623, 4294901760
    %v1625 = vsub.f32 %v1623, %v1624
    %v1626 = vand.u32 %v1625, 4294901760
    %1627 = vmatpush1.msra.mxu0 %v1626
    %1628 = vmatprep.subr.mxu0 0.0
    %v1629 = vand.u32 %v27, 4294901760
    %v1630 = vsub.f32 %v27, %v1629
    %v1631 = vand.u32 %v1630, 4294901760
    %v1632 = vsub.f32 %v1630, %v1631
    %v1633 = vand.u32 %v1632, 4294901760
    %1634 = vmatpush1.msra.mxu0 %v1633
    %1635 = vmatprep.subr.mxu0 0.0
    %v1636 = vand.u32 %v28, 4294901760
    %v1637 = vsub.f32 %v28, %v1636
    %v1638 = vand.u32 %v1637, 4294901760
    %v1639 = vsub.f32 %v1637, %v1638
    %v1640 = vand.u32 %v1639, 4294901760
    %1641 = vmatpush1.msra.mxu0 %v1640
    %1642 = vmatprep.subr.mxu0 0.0
    %v1643 = vand.u32 %v29, 4294901760
    %v1644 = vsub.f32 %v29, %v1643
    %v1645 = vand.u32 %v1644, 4294901760
    %v1646 = vsub.f32 %v1644, %v1645
    %v1647 = vand.u32 %v1646, 4294901760
    %1648 = vmatpush1.msra.mxu0 %v1647
    %1649 = vmatprep.subr.mxu0 0.0
    %v1650 = vand.u32 %v30, 4294901760
    %v1651 = vsub.f32 %v30, %v1650
    %v1652 = vand.u32 %v1651, 4294901760
    %v1653 = vsub.f32 %v1651, %v1652
    %v1654 = vand.u32 %v1653, 4294901760
    %1655 = vmatpush1.msra.mxu0 %v1654
    %1656 = vmatprep.subr.mxu0 0.0
    %1657 = vmatpush1.msra.mxu0 0.0
    %1658 = vmatprep.subr.mxu0 0.0
    %1659 = vmatpush1.msra.mxu0 0.0
    %1660 = vmatprep.subr.mxu0 0.0
    %1661 = vmatpush1.msra.mxu0 0.0
    %1662 = vmatprep.subr.mxu0 0.0
    %1663 = vmatpush1.msra.mxu0 0.0
    %1664 = vmatprep.subr.mxu0 0.0
    %1665 = vmatpush1.msra.mxu0 0.0
    %1666 = vmatprep.subr.mxu0 0.0
    %1667 = vmatpush1.msra.mxu0 0.0
    %1668 = vmatprep.subr.mxu0 0.0
    %1669 = vmatpush1.msra.mxu0 0.0
    %1670 = vmatprep.subr.mxu0 0.0
    %1671 = vmatpush1.msra.mxu0 0.0
    %1672 = vmatprep.subr.mxu0 0.0
    %1673 = vmatpush1.msra.mxu0 0.0
    %1674 = vmatprep.subr.mxu0 0.0
    %1675 = vmatpush1.msra.mxu0 0.0
    %1676 = vmatprep.subr.mxu0 0.0
    %1677 = vmatpush1.msra.mxu0 0.0
    %1678 = vmatprep.subr.mxu0 0.0
    %1679 = vmatpush1.msra.mxu0 0.0
    %1680 = vmatprep.subr.mxu0 0.0
    %1681 = vmatpush1.msra.mxu0 0.0
    %1682 = vmatprep.subr.mxu0 0.0
    %1683 = vmatpush1.msra.mxu0 0.0
    %1684 = vmatprep.subr.mxu0 0.0
    %1685 = vmatpush1.msra.mxu0 0.0
    %1686 = vmatprep.subr.mxu0 0.0
    %1687 = vmatpush1.msra.mxu0 0.0
    %1688 = vmatprep.subr.mxu0 0.0
    %1689 = vmatpush1.msra.mxu0 0.0
    %1690 = vmatprep.subr.mxu0 0.0
    %1691 = vmatpush1.msra.mxu0 0.0
    %1692 = vmatprep.subr.mxu0 0.0
    %1693 = vmatpush1.msra.mxu0 0.0
    %1694 = vmatprep.subr.mxu0 0.0
    %1695 = vmatpush1.msra.mxu0 0.0
    %1696 = vmatprep.subr.mxu0 0.0
    %1697 = vmatpush1.msra.mxu0 0.0
    %1698 = vmatprep.subr.mxu0 0.0
    %1699 = vmatpush1.msra.mxu0 0.0
    %1700 = vmatprep.subr.mxu0 0.0
    %1701 = vmatpush1.msra.mxu0 0.0
    %1702 = vmatprep.subr.mxu0 0.0
    %1703 = vmatpush1.msra.mxu0 0.0
    %1704 = vmatprep.mubr.f32.mxu0 0.0
    %v1705 = vand.u32 %v1424, 4294901760
    %1706 = vmatmul.mubr.f32.gmra.mrb[0].mxu0 %v1705
    %v1707 = vpop.f32.mrb[0].mxu0
    %v1708 = vadd.f32 %v1527, %v1707
    %v1709 = vpop.f32.mrb[0].mxu0
    %1710 = vmatprep.mubr.f32.mxu0 0.0
    %v1711 = vand.u32 %v1427, 4294901760
    %1712 = vmatmul.mubr.f32.gmra.mrb[0].mxu0 %v1711
    %v1713 = vpop.f32.mrb[0].mxu0
    %v1714 = vadd.f32 %v1537, %v1713
    %v1715 = vpop.f32.mrb[0].mxu0
    %1716 = vmatprep.mubr.f32.mxu0 0.0
    %v1717 = vand.u32 %v1430, 4294901760
    %1718 = vmatmul.mubr.f32.gmra.mrb[0].mxu0 %v1717
    %v1719 = vpop.f32.mrb[0].mxu0
    %v1720 = vadd.f32 %v1547, %v1719
    %v1721 = vpop.f32.mrb[0].mxu0
    %1722 = vmatprep.mubr.f32.mxu0 0.0
    %v1723 = vand.u32 %v1433, 4294901760
    %1724 = vmatmul.mubr.f32.gmra.mrb[0].mxu0 %v1723
    %v1725 = vpop.f32.mrb[0].mxu0
    %v1726 = vadd.f32 %v1557, %v1725
    %v1727 = vpop.f32.mrb[0].mxu0
    %1728 = vmatprep.mubr.f32.mxu0 0.0
    %v1729 = vand.u32 %v1436, 4294901760
    %1730 = vmatmul.mubr.f32.gmra.mrb[0].mxu0 %v1729
    %v1731 = vpop.f32.mrb[0].mxu0
    %v1732 = vadd.f32 %v1567, %v1731
    %v1733 = vpop.f32.mrb[0].mxu0
    %1734 = vmatprep.mubr.f32.mxu0 0.0
    %v1735 = vand.u32 %v1439, 4294901760
    %1736 = vmatmul.mubr.f32.gmra.mrb[0].mxu0 %v1735
    %v1737 = vpop.f32.mrb[0].mxu0
    %v1738 = vadd.f32 %v1577, %v1737
    %v1739 = vpop.f32.mrb[0].mxu0
    %1740 = vmatprep.mubr.f32.mxu0 0.0
    %v1741 = vand.u32 %v1442, 4294901760
    %1742 = vmatmul.mubr.f32.gmra.mrb[0].mxu0 %v1741
    %v1743 = vpop.f32.mrb[0].mxu0
    %v1744 = vadd.f32 %v1587, %v1743
    %v1745 = vpop.f32.mrb[0].mxu0
    %1746 = vmatprep.mubr.f32.mxu0 0.0
    %v1747 = vand.u32 %v1445, 4294901760
    %1748 = vmatmul.mubr.f32.gmra.mrb[0].mxu0 %v1747
    %v1749 = vpop.f32.mrb[0].mxu0
    %v1750 = vadd.f32 %v1597, %v1749
    %v1751 = vpop.f32.mrb[0].mxu0
    %1752 = vdwg.mxu0
    %1753 = vmatprep.subr.mxu0 0.0
    %v1754 = vand.u32 %v23, 4294901760
    %v1755 = vsub.f32 %v23, %v1754
    %1756 = vmatpush1.msra.mxu0 %v1755
    %1757 = vmatprep.subr.mxu0 0.0
    %v1758 = vand.u32 %v24, 4294901760
    %v1759 = vsub.f32 %v24, %v1758
    %1760 = vmatpush1.msra.mxu0 %v1759
    %1761 = vmatprep.subr.mxu0 0.0
    %v1762 = vand.u32 %v25, 4294901760
    %v1763 = vsub.f32 %v25, %v1762
    %1764 = vmatpush1.msra.mxu0 %v1763
    %1765 = vmatprep.subr.mxu0 0.0
    %v1766 = vand.u32 %v26, 4294901760
    %v1767 = vsub.f32 %v26, %v1766
    %1768 = vmatpush1.msra.mxu0 %v1767
    %1769 = vmatprep.subr.mxu0 0.0
    %v1770 = vand.u32 %v27, 4294901760
    %v1771 = vsub.f32 %v27, %v1770
    %1772 = vmatpush1.msra.mxu0 %v1771
    %1773 = vmatprep.subr.mxu0 0.0
    %v1774 = vand.u32 %v28, 4294901760
    %v1775 = vsub.f32 %v28, %v1774
    %1776 = vmatpush1.msra.mxu0 %v1775
    %1777 = vmatprep.subr.mxu0 0.0
    %v1778 = vand.u32 %v29, 4294901760
    %v1779 = vsub.f32 %v29, %v1778
    %1780 = vmatpush1.msra.mxu0 %v1779
    %1781 = vmatprep.subr.mxu0 0.0
    %v1782 = vand.u32 %v30, 4294901760
    %v1783 = vsub.f32 %v30, %v1782
    %1784 = vmatpush1.msra.mxu0 %v1783
    %1785 = vmatprep.subr.mxu0 0.0
    %1786 = vmatpush1.msra.mxu0 0.0
    %1787 = vmatprep.subr.mxu0 0.0
    %1788 = vmatpush1.msra.mxu0 0.0
    %1789 = vmatprep.subr.mxu0 0.0
    %1790 = vmatpush1.msra.mxu0 0.0
    %1791 = vmatprep.subr.mxu0 0.0
    %1792 = vmatpush1.msra.mxu0 0.0
    %1793 = vmatprep.subr.mxu0 0.0
    %1794 = vmatpush1.msra.mxu0 0.0
    %1795 = vmatprep.subr.mxu0 0.0
    %1796 = vmatpush1.msra.mxu0 0.0
    %1797 = vmatprep.subr.mxu0 0.0
    %1798 = vmatpush1.msra.mxu0 0.0
    %1799 = vmatprep.subr.mxu0 0.0
    %1800 = vmatpush1.msra.mxu0 0.0
    %1801 = vmatprep.subr.mxu0 0.0
    %1802 = vmatpush1.msra.mxu0 0.0
    %1803 = vmatprep.subr.mxu0 0.0
    %1804 = vmatpush1.msra.mxu0 0.0
    %1805 = vmatprep.subr.mxu0 0.0
    %1806 = vmatpush1.msra.mxu0 0.0
    %1807 = vmatprep.subr.mxu0 0.0
    %1808 = vmatpush1.msra.mxu0 0.0
    %1809 = vmatprep.subr.mxu0 0.0
    %1810 = vmatpush1.msra.mxu0 0.0
    %1811 = vmatprep.subr.mxu0 0.0
    %1812 = vmatpush1.msra.mxu0 0.0
    %1813 = vmatprep.subr.mxu0 0.0
    %1814 = vmatpush1.msra.mxu0 0.0
    %1815 = vmatprep.subr.mxu0 0.0
    %1816 = vmatpush1.msra.mxu0 0.0
    %1817 = vmatprep.subr.mxu0 0.0
    %1818 = vmatpush1.msra.mxu0 0.0
    %1819 = vmatprep.subr.mxu0 0.0
    %1820 = vmatpush1.msra.mxu0 0.0
    %1821 = vmatprep.subr.mxu0 0.0
    %1822 = vmatpush1.msra.mxu0 0.0
    %1823 = vmatprep.subr.mxu0 0.0
    %1824 = vmatpush1.msra.mxu0 0.0
    %1825 = vmatprep.subr.mxu0 0.0
    %1826 = vmatpush1.msra.mxu0 0.0
    %1827 = vmatprep.subr.mxu0 0.0
    %1828 = vmatpush1.msra.mxu0 0.0
    %1829 = vmatprep.subr.mxu0 0.0
    %1830 = vmatpush1.msra.mxu0 0.0
    %1831 = vmatprep.subr.mxu0 0.0
    %1832 = vmatpush1.msra.mxu0 0.0
    %1833 = vmatprep.mubr.f32.mxu0 0.0
    %v1834 = vand.u32 %v1424, 4294901760
    %v1835 = vsub.f32 %v1424, %v1834
    %1836 = vmatmul.mubr.f32.gmra.mrb[0].mxu0 %v1835
    %v1837 = vpop.f32.mrb[0].mxu0
    %v1838 = vadd.f32 %v1708, %v1837
    %v1839 = vpop.f32.mrb[0].mxu0
    %1840 = vmatprep.mubr.f32.mxu0 0.0
    %v1841 = vand.u32 %v1427, 4294901760
    %v1842 = vsub.f32 %v1427, %v1841
    %1843 = vmatmul.mubr.f32.gmra.mrb[0].mxu0 %v1842
    %v1844 = vpop.f32.mrb[0].mxu0
    %v1845 = vadd.f32 %v1714, %v1844
    %v1846 = vpop.f32.mrb[0].mxu0
    %1847 = vmatprep.mubr.f32.mxu0 0.0
    %v1848 = vand.u32 %v1430, 4294901760
    %v1849 = vsub.f32 %v1430, %v1848
    %1850 = vmatmul.mubr.f32.gmra.mrb[0].mxu0 %v1849
    %v1851 = vpop.f32.mrb[0].mxu0
    %v1852 = vadd.f32 %v1720, %v1851
    %v1853 = vpop.f32.mrb[0].mxu0
    %1854 = vmatprep.mubr.f32.mxu0 0.0
    %v1855 = vand.u32 %v1433, 4294901760
    %v1856 = vsub.f32 %v1433, %v1855
    %1857 = vmatmul.mubr.f32.gmra.mrb[0].mxu0 %v1856
    %v1858 = vpop.f32.mrb[0].mxu0
    %v1859 = vadd.f32 %v1726, %v1858
    %v1860 = vpop.f32.mrb[0].mxu0
    %1861 = vmatprep.mubr.f32.mxu0 0.0
    %v1862 = vand.u32 %v1436, 4294901760
    %v1863 = vsub.f32 %v1436, %v1862
    %1864 = vmatmul.mubr.f32.gmra.mrb[0].mxu0 %v1863
    %v1865 = vpop.f32.mrb[0].mxu0
    %v1866 = vadd.f32 %v1732, %v1865
    %v1867 = vpop.f32.mrb[0].mxu0
    %1868 = vmatprep.mubr.f32.mxu0 0.0
    %v1869 = vand.u32 %v1439, 4294901760
    %v1870 = vsub.f32 %v1439, %v1869
    %1871 = vmatmul.mubr.f32.gmra.mrb[0].mxu0 %v1870
    %v1872 = vpop.f32.mrb[0].mxu0
    %v1873 = vadd.f32 %v1738, %v1872
    %v1874 = vpop.f32.mrb[0].mxu0
    %1875 = vmatprep.mubr.f32.mxu0 0.0
    %v1876 = vand.u32 %v1442, 4294901760
    %v1877 = vsub.f32 %v1442, %v1876
    %1878 = vmatmul.mubr.f32.gmra.mrb[0].mxu0 %v1877
    %v1879 = vpop.f32.mrb[0].mxu0
    %v1880 = vadd.f32 %v1744, %v1879
    %v1881 = vpop.f32.mrb[0].mxu0
    %1882 = vmatprep.mubr.f32.mxu0 0.0
    %v1883 = vand.u32 %v1445, 4294901760
    %v1884 = vsub.f32 %v1445, %v1883
    %1885 = vmatmul.mubr.f32.gmra.mrb[0].mxu0 %v1884
    %v1886 = vpop.f32.mrb[0].mxu0
    %v1887 = vadd.f32 %v1750, %v1886
    %v1888 = vpop.f32.mrb[0].mxu0
    %1889 = vdwg.mxu0
    %1890 = vmatprep.subr.mxu0 0.0
    %v1891 = vand.u32 %v23, 4294901760
    %1892 = vmatpush1.msra.mxu0 %v1891
    %1893 = vmatprep.subr.mxu0 0.0
    %v1894 = vand.u32 %v24, 4294901760
    %1895 = vmatpush1.msra.mxu0 %v1894
    %1896 = vmatprep.subr.mxu0 0.0
    %v1897 = vand.u32 %v25, 4294901760
    %1898 = vmatpush1.msra.mxu0 %v1897
    %1899 = vmatprep.subr.mxu0 0.0
    %v1900 = vand.u32 %v26, 4294901760
    %1901 = vmatpush1.msra.mxu0 %v1900
    %1902 = vmatprep.subr.mxu0 0.0
    %v1903 = vand.u32 %v27, 4294901760
    %1904 = vmatpush1.msra.mxu0 %v1903
    %1905 = vmatprep.subr.mxu0 0.0
    %v1906 = vand.u32 %v28, 4294901760
    %1907 = vmatpush1.msra.mxu0 %v1906
    %1908 = vmatprep.subr.mxu0 0.0
    %v1909 = vand.u32 %v29, 4294901760
    %1910 = vmatpush1.msra.mxu0 %v1909
    %1911 = vmatprep.subr.mxu0 0.0
    %v1912 = vand.u32 %v30, 4294901760
    %1913 = vmatpush1.msra.mxu0 %v1912
    %1914 = vmatprep.subr.mxu0 0.0
    %1915 = vmatpush1.msra.mxu0 0.0
    %1916 = vmatprep.subr.mxu0 0.0
    %1917 = vmatpush1.msra.mxu0 0.0
    %1918 = vmatprep.subr.mxu0 0.0
    %1919 = vmatpush1.msra.mxu0 0.0
    %1920 = vmatprep.subr.mxu0 0.0
    %1921 = vmatpush1.msra.mxu0 0.0
    %1922 = vmatprep.subr.mxu0 0.0
    %1923 = vmatpush1.msra.mxu0 0.0
    %1924 = vmatprep.subr.mxu0 0.0
    %1925 = vmatpush1.msra.mxu0 0.0
    %1926 = vmatprep.subr.mxu0 0.0
    %1927 = vmatpush1.msra.mxu0 0.0
    %1928 = vmatprep.subr.mxu0 0.0
    %1929 = vmatpush1.msra.mxu0 0.0
    %1930 = vmatprep.subr.mxu0 0.0
    %1931 = vmatpush1.msra.mxu0 0.0
    %1932 = vmatprep.subr.mxu0 0.0
    %1933 = vmatpush1.msra.mxu0 0.0
    %1934 = vmatprep.subr.mxu0 0.0
    %1935 = vmatpush1.msra.mxu0 0.0
    %1936 = vmatprep.subr.mxu0 0.0
    %1937 = vmatpush1.msra.mxu0 0.0
    %1938 = vmatprep.subr.mxu0 0.0
    %1939 = vmatpush1.msra.mxu0 0.0
    %1940 = vmatprep.subr.mxu0 0.0
    %1941 = vmatpush1.msra.mxu0 0.0
    %1942 = vmatprep.subr.mxu0 0.0
    %1943 = vmatpush1.msra.mxu0 0.0
    %1944 = vmatprep.subr.mxu0 0.0
    %1945 = vmatpush1.msra.mxu0 0.0
    %1946 = vmatprep.subr.mxu0 0.0
    %1947 = vmatpush1.msra.mxu0 0.0
    %1948 = vmatprep.subr.mxu0 0.0
    %1949 = vmatpush1.msra.mxu0 0.0
    %1950 = vmatprep.subr.mxu0 0.0
    %1951 = vmatpush1.msra.mxu0 0.0
    %1952 = vmatprep.subr.mxu0 0.0
    %1953 = vmatpush1.msra.mxu0 0.0
    %1954 = vmatprep.subr.mxu0 0.0
    %1955 = vmatpush1.msra.mxu0 0.0
    %1956 = vmatprep.subr.mxu0 0.0
    %1957 = vmatpush1.msra.mxu0 0.0
    %1958 = vmatprep.subr.mxu0 0.0
    %1959 = vmatpush1.msra.mxu0 0.0
    %1960 = vmatprep.subr.mxu0 0.0
    %1961 = vmatpush1.msra.mxu0 0.0
    %1962 = vmatprep.mubr.f32.mxu0 0.0
    %v1963 = vand.u32 %v1424, 4294901760
    %v1964 = vsub.f32 %v1424, %v1963
    %v1965 = vand.u32 %v1964, 4294901760
    %1966 = vmatmul.mubr.f32.gmra.mrb[0].mxu0 %v1965
    %v1967 = vpop.f32.mrb[0].mxu0
    %v1968 = vadd.f32 %v1838, %v1967
    %v1969 = vpop.f32.mrb[0].mxu0
    %1970 = vmatprep.mubr.f32.mxu0 0.0
    %v1971 = vand.u32 %v1427, 4294901760
    %v1972 = vsub.f32 %v1427, %v1971
    %v1973 = vand.u32 %v1972, 4294901760
    %1974 = vmatmul.mubr.f32.gmra.mrb[0].mxu0 %v1973
    %v1975 = vpop.f32.mrb[0].mxu0
    %v1976 = vadd.f32 %v1845, %v1975
    %v1977 = vpop.f32.mrb[0].mxu0
    %1978 = vmatprep.mubr.f32.mxu0 0.0
    %v1979 = vand.u32 %v1430, 4294901760
    %v1980 = vsub.f32 %v1430, %v1979
    %v1981 = vand.u32 %v1980, 4294901760
    %1982 = vmatmul.mubr.f32.gmra.mrb[0].mxu0 %v1981
    %v1983 = vpop.f32.mrb[0].mxu0
    %v1984 = vadd.f32 %v1852, %v1983
    %v1985 = vpop.f32.mrb[0].mxu0
    %1986 = vmatprep.mubr.f32.mxu0 0.0
    %v1987 = vand.u32 %v1433, 4294901760
    %v1988 = vsub.f32 %v1433, %v1987
    %v1989 = vand.u32 %v1988, 4294901760
    %1990 = vmatmul.mubr.f32.gmra.mrb[0].mxu0 %v1989
    %v1991 = vpop.f32.mrb[0].mxu0
    %v1992 = vadd.f32 %v1859, %v1991
    %v1993 = vpop.f32.mrb[0].mxu0
    %1994 = vmatprep.mubr.f32.mxu0 0.0
    %v1995 = vand.u32 %v1436, 4294901760
    %v1996 = vsub.f32 %v1436, %v1995
    %v1997 = vand.u32 %v1996, 4294901760
    %1998 = vmatmul.mubr.f32.gmra.mrb[0].mxu0 %v1997
    %v1999 = vpop.f32.mrb[0].mxu0
    %v2000 = vadd.f32 %v1866, %v1999
    %v2001 = vpop.f32.mrb[0].mxu0
    %2002 = vmatprep.mubr.f32.mxu0 0.0
    %v2003 = vand.u32 %v1439, 4294901760
    %v2004 = vsub.f32 %v1439, %v2003
    %v2005 = vand.u32 %v2004, 4294901760
    %2006 = vmatmul.mubr.f32.gmra.mrb[0].mxu0 %v2005
    %v2007 = vpop.f32.mrb[0].mxu0
    %v2008 = vadd.f32 %v1873, %v2007
    %v2009 = vpop.f32.mrb[0].mxu0
    %2010 = vmatprep.mubr.f32.mxu0 0.0
    %v2011 = vand.u32 %v1442, 4294901760
    %v2012 = vsub.f32 %v1442, %v2011
    %v2013 = vand.u32 %v2012, 4294901760
    %2014 = vmatmul.mubr.f32.gmra.mrb[0].mxu0 %v2013
    %v2015 = vpop.f32.mrb[0].mxu0
    %v2016 = vadd.f32 %v1880, %v2015
    %v2017 = vpop.f32.mrb[0].mxu0
    %2018 = vmatprep.mubr.f32.mxu0 0.0
    %v2019 = vand.u32 %v1445, 4294901760
    %v2020 = vsub.f32 %v1445, %v2019
    %v2021 = vand.u32 %v2020, 4294901760
    %2022 = vmatmul.mubr.f32.gmra.mrb[0].mxu0 %v2021
    %v2023 = vpop.f32.mrb[0].mxu0
    %v2024 = vadd.f32 %v1887, %v2023
    %v2025 = vpop.f32.mrb[0].mxu0
    %2026 = vdwg.mxu0
    %2027 = vmatprep.subr.mxu0 0.0
    %v2028 = vand.u32 %v23, 4294901760
    %v2029 = vsub.f32 %v23, %v2028
    %v2030 = vand.u32 %v2029, 4294901760
    %2031 = vmatpush1.msra.mxu0 %v2030
    %2032 = vmatprep.subr.mxu0 0.0
    %v2033 = vand.u32 %v24, 4294901760
    %v2034 = vsub.f32 %v24, %v2033
    %v2035 = vand.u32 %v2034, 4294901760
    %2036 = vmatpush1.msra.mxu0 %v2035
    %2037 = vmatprep.subr.mxu0 0.0
    %v2038 = vand.u32 %v25, 4294901760
    %v2039 = vsub.f32 %v25, %v2038
    %v2040 = vand.u32 %v2039, 4294901760
    %2041 = vmatpush1.msra.mxu0 %v2040
    %2042 = vmatprep.subr.mxu0 0.0
    %v2043 = vand.u32 %v26, 4294901760
    %v2044 = vsub.f32 %v26, %v2043
    %v2045 = vand.u32 %v2044, 4294901760
    %2046 = vmatpush1.msra.mxu0 %v2045
    %2047 = vmatprep.subr.mxu0 0.0
    %v2048 = vand.u32 %v27, 4294901760
    %v2049 = vsub.f32 %v27, %v2048
    %v2050 = vand.u32 %v2049, 4294901760
    %2051 = vmatpush1.msra.mxu0 %v2050
    %2052 = vmatprep.subr.mxu0 0.0
    %v2053 = vand.u32 %v28, 4294901760
    %v2054 = vsub.f32 %v28, %v2053
    %v2055 = vand.u32 %v2054, 4294901760
    %2056 = vmatpush1.msra.mxu0 %v2055
    %2057 = vmatprep.subr.mxu0 0.0
    %v2058 = vand.u32 %v29, 4294901760
    %v2059 = vsub.f32 %v29, %v2058
    %v2060 = vand.u32 %v2059, 4294901760
    %2061 = vmatpush1.msra.mxu0 %v2060
    %2062 = vmatprep.subr.mxu0 0.0
    %v2063 = vand.u32 %v30, 4294901760
    %v2064 = vsub.f32 %v30, %v2063
    %v2065 = vand.u32 %v2064, 4294901760
    %2066 = vmatpush1.msra.mxu0 %v2065
    %2067 = vmatprep.subr.mxu0 0.0
    %2068 = vmatpush1.msra.mxu0 0.0
    %2069 = vmatprep.subr.mxu0 0.0
    %2070 = vmatpush1.msra.mxu0 0.0
    %2071 = vmatprep.subr.mxu0 0.0
    %2072 = vmatpush1.msra.mxu0 0.0
    %2073 = vmatprep.subr.mxu0 0.0
    %2074 = vmatpush1.msra.mxu0 0.0
    %2075 = vmatprep.subr.mxu0 0.0
    %2076 = vmatpush1.msra.mxu0 0.0
    %2077 = vmatprep.subr.mxu0 0.0
    %2078 = vmatpush1.msra.mxu0 0.0
    %2079 = vmatprep.subr.mxu0 0.0
    %2080 = vmatpush1.msra.mxu0 0.0
    %2081 = vmatprep.subr.mxu0 0.0
    %2082 = vmatpush1.msra.mxu0 0.0
    %2083 = vmatprep.subr.mxu0 0.0
    %2084 = vmatpush1.msra.mxu0 0.0
    %2085 = vmatprep.subr.mxu0 0.0
    %2086 = vmatpush1.msra.mxu0 0.0
    %2087 = vmatprep.subr.mxu0 0.0
    %2088 = vmatpush1.msra.mxu0 0.0
    %2089 = vmatprep.subr.mxu0 0.0
    %2090 = vmatpush1.msra.mxu0 0.0
    %2091 = vmatprep.subr.mxu0 0.0
    %2092 = vmatpush1.msra.mxu0 0.0
    %2093 = vmatprep.subr.mxu0 0.0
    %2094 = vmatpush1.msra.mxu0 0.0
    %2095 = vmatprep.subr.mxu0 0.0
    %2096 = vmatpush1.msra.mxu0 0.0
    %2097 = vmatprep.subr.mxu0 0.0
    %2098 = vmatpush1.msra.mxu0 0.0
    %2099 = vmatprep.subr.mxu0 0.0
    %2100 = vmatpush1.msra.mxu0 0.0
    %2101 = vmatprep.subr.mxu0 0.0
    %2102 = vmatpush1.msra.mxu0 0.0
    %2103 = vmatprep.subr.mxu0 0.0
    %2104 = vmatpush1.msra.mxu0 0.0
    %2105 = vmatprep.subr.mxu0 0.0
    %2106 = vmatpush1.msra.mxu0 0.0
    %2107 = vmatprep.subr.mxu0 0.0
    %2108 = vmatpush1.msra.mxu0 0.0
    %2109 = vmatprep.subr.mxu0 0.0
    %2110 = vmatpush1.msra.mxu0 0.0
    %2111 = vmatprep.subr.mxu0 0.0
    %2112 = vmatpush1.msra.mxu0 0.0
    %2113 = vmatprep.subr.mxu0 0.0
    %2114 = vmatpush1.msra.mxu0 0.0
    %2115 = vmatprep.mubr.f32.mxu0 0.0
    %v2116 = vand.u32 %v1424, 4294901760
    %2117 = vmatmul.mubr.f32.gmra.mrb[0].mxu0 %v2116
    %v2118 = vpop.f32.mrb[0].mxu0
    %v2119 = vadd.f32 %v1968, %v2118
    %v2120 = vpop.f32.mrb[0].mxu0
    %2121 = vmatprep.mubr.f32.mxu0 0.0
    %v2122 = vand.u32 %v1427, 4294901760
    %2123 = vmatmul.mubr.f32.gmra.mrb[0].mxu0 %v2122
    %v2124 = vpop.f32.mrb[0].mxu0
    %v2125 = vadd.f32 %v1976, %v2124
    %v2126 = vpop.f32.mrb[0].mxu0
    %2127 = vmatprep.mubr.f32.mxu0 0.0
    %v2128 = vand.u32 %v1430, 4294901760
    %2129 = vmatmul.mubr.f32.gmra.mrb[0].mxu0 %v2128
    %v2130 = vpop.f32.mrb[0].mxu0
    %v2131 = vadd.f32 %v1984, %v2130
    %v2132 = vpop.f32.mrb[0].mxu0
    %2133 = vmatprep.mubr.f32.mxu0 0.0
    %v2134 = vand.u32 %v1433, 4294901760
    %2135 = vmatmul.mubr.f32.gmra.mrb[0].mxu0 %v2134
    %v2136 = vpop.f32.mrb[0].mxu0
    %v2137 = vadd.f32 %v1992, %v2136
    %v2138 = vpop.f32.mrb[0].mxu0
    %2139 = vmatprep.mubr.f32.mxu0 0.0
    %v2140 = vand.u32 %v1436, 4294901760
    %2141 = vmatmul.mubr.f32.gmra.mrb[0].mxu0 %v2140
    %v2142 = vpop.f32.mrb[0].mxu0
    %v2143 = vadd.f32 %v2000, %v2142
    %v2144 = vpop.f32.mrb[0].mxu0
    %2145 = vmatprep.mubr.f32.mxu0 0.0
    %v2146 = vand.u32 %v1439, 4294901760
    %2147 = vmatmul.mubr.f32.gmra.mrb[0].mxu0 %v2146
    %v2148 = vpop.f32.mrb[0].mxu0
    %v2149 = vadd.f32 %v2008, %v2148
    %v2150 = vpop.f32.mrb[0].mxu0
    %2151 = vmatprep.mubr.f32.mxu0 0.0
    %v2152 = vand.u32 %v1442, 4294901760
    %2153 = vmatmul.mubr.f32.gmra.mrb[0].mxu0 %v2152
    %v2154 = vpop.f32.mrb[0].mxu0
    %v2155 = vadd.f32 %v2016, %v2154
    %v2156 = vpop.f32.mrb[0].mxu0
    %2157 = vmatprep.mubr.f32.mxu0 0.0
    %v2158 = vand.u32 %v1445, 4294901760
    %2159 = vmatmul.mubr.f32.gmra.mrb[0].mxu0 %v2158
    %v2160 = vpop.f32.mrb[0].mxu0
    %v2161 = vadd.f32 %v2024, %v2160
    %v2162 = vpop.f32.mrb[0].mxu0
    %2163 = vdwg.mxu0
    %2164 = vmatprep.subr.mxu0 0.0
    %v2165 = vand.u32 %v23, 4294901760
    %2166 = vmatpush1.msra.mxu0 %v2165
    %2167 = vmatprep.subr.mxu0 0.0
    %v2168 = vand.u32 %v24, 4294901760
    %2169 = vmatpush1.msra.mxu0 %v2168
    %2170 = vmatprep.subr.mxu0 0.0
    %v2171 = vand.u32 %v25, 4294901760
    %2172 = vmatpush1.msra.mxu0 %v2171
    %2173 = vmatprep.subr.mxu0 0.0
    %v2174 = vand.u32 %v26, 4294901760
    %2175 = vmatpush1.msra.mxu0 %v2174
    %2176 = vmatprep.subr.mxu0 0.0
    %v2177 = vand.u32 %v27, 4294901760
    %2178 = vmatpush1.msra.mxu0 %v2177
    %2179 = vmatprep.subr.mxu0 0.0
    %v2180 = vand.u32 %v28, 4294901760
    %2181 = vmatpush1.msra.mxu0 %v2180
    %2182 = vmatprep.subr.mxu0 0.0
    %v2183 = vand.u32 %v29, 4294901760
    %2184 = vmatpush1.msra.mxu0 %v2183
    %2185 = vmatprep.subr.mxu0 0.0
    %v2186 = vand.u32 %v30, 4294901760
    %2187 = vmatpush1.msra.mxu0 %v2186
    %2188 = vmatprep.subr.mxu0 0.0
    %2189 = vmatpush1.msra.mxu0 0.0
    %2190 = vmatprep.subr.mxu0 0.0
    %2191 = vmatpush1.msra.mxu0 0.0
    %2192 = vmatprep.subr.mxu0 0.0
    %2193 = vmatpush1.msra.mxu0 0.0
    %2194 = vmatprep.subr.mxu0 0.0
    %2195 = vmatpush1.msra.mxu0 0.0
    %2196 = vmatprep.subr.mxu0 0.0
    %2197 = vmatpush1.msra.mxu0 0.0
    %2198 = vmatprep.subr.mxu0 0.0
    %2199 = vmatpush1.msra.mxu0 0.0
    %2200 = vmatprep.subr.mxu0 0.0
    %2201 = vmatpush1.msra.mxu0 0.0
    %2202 = vmatprep.subr.mxu0 0.0
    %2203 = vmatpush1.msra.mxu0 0.0
    %2204 = vmatprep.subr.mxu0 0.0
    %2205 = vmatpush1.msra.mxu0 0.0
    %2206 = vmatprep.subr.mxu0 0.0
    %2207 = vmatpush1.msra.mxu0 0.0
    %2208 = vmatprep.subr.mxu0 0.0
    %2209 = vmatpush1.msra.mxu0 0.0
    %2210 = vmatprep.subr.mxu0 0.0
    %2211 = vmatpush1.msra.mxu0 0.0
    %2212 = vmatprep.subr.mxu0 0.0
    %2213 = vmatpush1.msra.mxu0 0.0
    %2214 = vmatprep.subr.mxu0 0.0
    %2215 = vmatpush1.msra.mxu0 0.0
    %2216 = vmatprep.subr.mxu0 0.0
    %2217 = vmatpush1.msra.mxu0 0.0
    %2218 = vmatprep.subr.mxu0 0.0
    %2219 = vmatpush1.msra.mxu0 0.0
    %2220 = vmatprep.subr.mxu0 0.0
    %2221 = vmatpush1.msra.mxu0 0.0
    %2222 = vmatprep.subr.mxu0 0.0
    %2223 = vmatpush1.msra.mxu0 0.0
    %2224 = vmatprep.subr.mxu0 0.0
    %2225 = vmatpush1.msra.mxu0 0.0
    %2226 = vmatprep.subr.mxu0 0.0
    %2227 = vmatpush1.msra.mxu0 0.0
    %2228 = vmatprep.subr.mxu0 0.0
    %2229 = vmatpush1.msra.mxu0 0.0
    %2230 = vmatprep.subr.mxu0 0.0
    %2231 = vmatpush1.msra.mxu0 0.0
    %2232 = vmatprep.subr.mxu0 0.0
    %2233 = vmatpush1.msra.mxu0 0.0
    %2234 = vmatprep.subr.mxu0 0.0
    %2235 = vmatpush1.msra.mxu0 0.0
    %2236 = vmatprep.mubr.f32.mxu0 0.0
    %v2237 = vand.u32 %v1424, 4294901760
    %2238 = vmatmul.mubr.f32.gmra.mrb[0].mxu0 %v2237
    %v2239 = vpop.f32.mrb[0].mxu0
    %v2240 = vadd.f32 %v2119, %v2239
    %v2241 = vpop.f32.mrb[0].mxu0
    %2242 = vmatprep.mubr.f32.mxu0 0.0
    %v2243 = vand.u32 %v1427, 4294901760
    %2244 = vmatmul.mubr.f32.gmra.mrb[0].mxu0 %v2243
    %v2245 = vpop.f32.mrb[0].mxu0
    %v2246 = vadd.f32 %v2125, %v2245
    %v2247 = vpop.f32.mrb[0].mxu0
    %2248 = vmatprep.mubr.f32.mxu0 0.0
    %v2249 = vand.u32 %v1430, 4294901760
    %2250 = vmatmul.mubr.f32.gmra.mrb[0].mxu0 %v2249
    %v2251 = vpop.f32.mrb[0].mxu0
    %v2252 = vadd.f32 %v2131, %v2251
    %v2253 = vpop.f32.mrb[0].mxu0
    %2254 = vmatprep.mubr.f32.mxu0 0.0
    %v2255 = vand.u32 %v1433, 4294901760
    %2256 = vmatmul.mubr.f32.gmra.mrb[0].mxu0 %v2255
    %v2257 = vpop.f32.mrb[0].mxu0
    %v2258 = vadd.f32 %v2137, %v2257
    %v2259 = vpop.f32.mrb[0].mxu0
    %2260 = vmatprep.mubr.f32.mxu0 0.0
    %v2261 = vand.u32 %v1436, 4294901760
    %2262 = vmatmul.mubr.f32.gmra.mrb[0].mxu0 %v2261
    %v2263 = vpop.f32.mrb[0].mxu0
    %v2264 = vadd.f32 %v2143, %v2263
    %v2265 = vpop.f32.mrb[0].mxu0
    %2266 = vmatprep.mubr.f32.mxu0 0.0
    %v2267 = vand.u32 %v1439, 4294901760
    %2268 = vmatmul.mubr.f32.gmra.mrb[0].mxu0 %v2267
    %v2269 = vpop.f32.mrb[0].mxu0
    %v2270 = vadd.f32 %v2149, %v2269
    %v2271 = vpop.f32.mrb[0].mxu0
    %2272 = vmatprep.mubr.f32.mxu0 0.0
    %v2273 = vand.u32 %v1442, 4294901760
    %2274 = vmatmul.mubr.f32.gmra.mrb[0].mxu0 %v2273
    %v2275 = vpop.f32.mrb[0].mxu0
    %v2276 = vadd.f32 %v2155, %v2275
    %v2277 = vpop.f32.mrb[0].mxu0
    %2278 = vmatprep.mubr.f32.mxu0 0.0
    %v2279 = vand.u32 %v1445, 4294901760
    %2280 = vmatmul.mubr.f32.gmra.mrb[0].mxu0 %v2279
    %v2281 = vpop.f32.mrb[0].mxu0
    %v2282 = vadd.f32 %v2161, %v2281
    %v2283 = vpop.f32.mrb[0].mxu0
    %2284 = vdwg.mxu0
    %v2286 = vsel %vm57, %v1240, 0
    %v2289 = vsel %vm57, %v1266, 0
    %v2292 = vsel %vm57, %v1292, 0
    %v2295 = vsel %vm57, %v1318, 0
    %v2298 = vsel %vm57, %v1344, 0
    %v2301 = vsel %vm57, %v1370, 0
    %v2304 = vsel %vm57, %v1396, 0
    %v2307 = vsel %vm57, %v1422, 0
    %2309 = vmatprep.subr.mxu0 0.0
    %v2310 = vand.u32 %v31, 4294901760
    %2311 = vmatpush1.msra.mxu0 %v2310
    %2312 = vmatprep.subr.mxu0 0.0
    %v2313 = vand.u32 %v32, 4294901760
    %2314 = vmatpush1.msra.mxu0 %v2313
    %2315 = vmatprep.subr.mxu0 0.0
    %v2316 = vand.u32 %v33, 4294901760
    %2317 = vmatpush1.msra.mxu0 %v2316
    %2318 = vmatprep.subr.mxu0 0.0
    %v2319 = vand.u32 %v34, 4294901760
    %2320 = vmatpush1.msra.mxu0 %v2319
    %2321 = vmatprep.subr.mxu0 0.0
    %v2322 = vand.u32 %v35, 4294901760
    %2323 = vmatpush1.msra.mxu0 %v2322
    %2324 = vmatprep.subr.mxu0 0.0
    %v2325 = vand.u32 %v36, 4294901760
    %2326 = vmatpush1.msra.mxu0 %v2325
    %2327 = vmatprep.subr.mxu0 0.0
    %v2328 = vand.u32 %v37, 4294901760
    %2329 = vmatpush1.msra.mxu0 %v2328
    %2330 = vmatprep.subr.mxu0 0.0
    %v2331 = vand.u32 %v38, 4294901760
    %2332 = vmatpush1.msra.mxu0 %v2331
    %2333 = vmatprep.subr.mxu0 0.0
    %2334 = vmatpush1.msra.mxu0 0.0
    %2335 = vmatprep.subr.mxu0 0.0
    %2336 = vmatpush1.msra.mxu0 0.0
    %2337 = vmatprep.subr.mxu0 0.0
    %2338 = vmatpush1.msra.mxu0 0.0
    %2339 = vmatprep.subr.mxu0 0.0
    %2340 = vmatpush1.msra.mxu0 0.0
    %2341 = vmatprep.subr.mxu0 0.0
    %2342 = vmatpush1.msra.mxu0 0.0
    %2343 = vmatprep.subr.mxu0 0.0
    %2344 = vmatpush1.msra.mxu0 0.0
    %2345 = vmatprep.subr.mxu0 0.0
    %2346 = vmatpush1.msra.mxu0 0.0
    %2347 = vmatprep.subr.mxu0 0.0
    %2348 = vmatpush1.msra.mxu0 0.0
    %2349 = vmatprep.subr.mxu0 0.0
    %2350 = vmatpush1.msra.mxu0 0.0
    %2351 = vmatprep.subr.mxu0 0.0
    %2352 = vmatpush1.msra.mxu0 0.0
    %2353 = vmatprep.subr.mxu0 0.0
    %2354 = vmatpush1.msra.mxu0 0.0
    %2355 = vmatprep.subr.mxu0 0.0
    %2356 = vmatpush1.msra.mxu0 0.0
    %2357 = vmatprep.subr.mxu0 0.0
    %2358 = vmatpush1.msra.mxu0 0.0
    %2359 = vmatprep.subr.mxu0 0.0
    %2360 = vmatpush1.msra.mxu0 0.0
    %2361 = vmatprep.subr.mxu0 0.0
    %2362 = vmatpush1.msra.mxu0 0.0
    %2363 = vmatprep.subr.mxu0 0.0
    %2364 = vmatpush1.msra.mxu0 0.0
    %2365 = vmatprep.subr.mxu0 0.0
    %2366 = vmatpush1.msra.mxu0 0.0
    %2367 = vmatprep.subr.mxu0 0.0
    %2368 = vmatpush1.msra.mxu0 0.0
    %2369 = vmatprep.subr.mxu0 0.0
    %2370 = vmatpush1.msra.mxu0 0.0
    %2371 = vmatprep.subr.mxu0 0.0
    %2372 = vmatpush1.msra.mxu0 0.0
    %2373 = vmatprep.subr.mxu0 0.0
    %2374 = vmatpush1.msra.mxu0 0.0
    %2375 = vmatprep.subr.mxu0 0.0
    %2376 = vmatpush1.msra.mxu0 0.0
    %2377 = vmatprep.subr.mxu0 0.0
    %2378 = vmatpush1.msra.mxu0 0.0
    %2379 = vmatprep.subr.mxu0 0.0
    %2380 = vmatpush1.msra.mxu0 0.0
    %2381 = vmatprep.mubr.f32.mxu0 0.0
    %v2382 = vand.u32 %v2286, 4294901760
    %v2383 = vsub.f32 %v2286, %v2382
    %v2384 = vand.u32 %v2383, 4294901760
    %v2385 = vsub.f32 %v2383, %v2384
    %v2386 = vand.u32 %v2385, 4294901760
    %2387 = vmatmul.mubr.f32.gmra.mrb[0].mxu0 %v2386
    %v2388 = vpop.f32.mrb[0].mxu0
    %v2389 = vadd.f32 0.0, %v2388
    %v2390 = vpop.f32.mrb[0].mxu0
    %2391 = vmatprep.mubr.f32.mxu0 0.0
    %v2392 = vand.u32 %v2289, 4294901760
    %v2393 = vsub.f32 %v2289, %v2392
    %v2394 = vand.u32 %v2393, 4294901760
    %v2395 = vsub.f32 %v2393, %v2394
    %v2396 = vand.u32 %v2395, 4294901760
    %2397 = vmatmul.mubr.f32.gmra.mrb[0].mxu0 %v2396
    %v2398 = vpop.f32.mrb[0].mxu0
    %v2399 = vadd.f32 0.0, %v2398
    %v2400 = vpop.f32.mrb[0].mxu0
    %2401 = vmatprep.mubr.f32.mxu0 0.0
    %v2402 = vand.u32 %v2292, 4294901760
    %v2403 = vsub.f32 %v2292, %v2402
    %v2404 = vand.u32 %v2403, 4294901760
    %v2405 = vsub.f32 %v2403, %v2404
    %v2406 = vand.u32 %v2405, 4294901760
    %2407 = vmatmul.mubr.f32.gmra.mrb[0].mxu0 %v2406
    %v2408 = vpop.f32.mrb[0].mxu0
    %v2409 = vadd.f32 0.0, %v2408
    %v2410 = vpop.f32.mrb[0].mxu0
    %2411 = vmatprep.mubr.f32.mxu0 0.0
    %v2412 = vand.u32 %v2295, 4294901760
    %v2413 = vsub.f32 %v2295, %v2412
    %v2414 = vand.u32 %v2413, 4294901760
    %v2415 = vsub.f32 %v2413, %v2414
    %v2416 = vand.u32 %v2415, 4294901760
    %2417 = vmatmul.mubr.f32.gmra.mrb[0].mxu0 %v2416
    %v2418 = vpop.f32.mrb[0].mxu0
    %v2419 = vadd.f32 0.0, %v2418
    %v2420 = vpop.f32.mrb[0].mxu0
    %2421 = vmatprep.mubr.f32.mxu0 0.0
    %v2422 = vand.u32 %v2298, 4294901760
    %v2423 = vsub.f32 %v2298, %v2422
    %v2424 = vand.u32 %v2423, 4294901760
    %v2425 = vsub.f32 %v2423, %v2424
    %v2426 = vand.u32 %v2425, 4294901760
    %2427 = vmatmul.mubr.f32.gmra.mrb[0].mxu0 %v2426
    %v2428 = vpop.f32.mrb[0].mxu0
    %v2429 = vadd.f32 0.0, %v2428
    %v2430 = vpop.f32.mrb[0].mxu0
    %2431 = vmatprep.mubr.f32.mxu0 0.0
    %v2432 = vand.u32 %v2301, 4294901760
    %v2433 = vsub.f32 %v2301, %v2432
    %v2434 = vand.u32 %v2433, 4294901760
    %v2435 = vsub.f32 %v2433, %v2434
    %v2436 = vand.u32 %v2435, 4294901760
    %2437 = vmatmul.mubr.f32.gmra.mrb[0].mxu0 %v2436
    %v2438 = vpop.f32.mrb[0].mxu0
    %v2439 = vadd.f32 0.0, %v2438
    %v2440 = vpop.f32.mrb[0].mxu0
    %2441 = vmatprep.mubr.f32.mxu0 0.0
    %v2442 = vand.u32 %v2304, 4294901760
    %v2443 = vsub.f32 %v2304, %v2442
    %v2444 = vand.u32 %v2443, 4294901760
    %v2445 = vsub.f32 %v2443, %v2444
    %v2446 = vand.u32 %v2445, 4294901760
    %2447 = vmatmul.mubr.f32.gmra.mrb[0].mxu0 %v2446
    %v2448 = vpop.f32.mrb[0].mxu0
    %v2449 = vadd.f32 0.0, %v2448
    %v2450 = vpop.f32.mrb[0].mxu0
    %2451 = vmatprep.mubr.f32.mxu0 0.0
    %v2452 = vand.u32 %v2307, 4294901760
    %v2453 = vsub.f32 %v2307, %v2452
    %v2454 = vand.u32 %v2453, 4294901760
    %v2455 = vsub.f32 %v2453, %v2454
    %v2456 = vand.u32 %v2455, 4294901760
    %2457 = vmatmul.mubr.f32.gmra.mrb[0].mxu0 %v2456
    %v2458 = vpop.f32.mrb[0].mxu0
    %v2459 = vadd.f32 0.0, %v2458
    %v2460 = vpop.f32.mrb[0].mxu0
    %2461 = vdwg.mxu0
    %2462 = vmatprep.subr.mxu0 0.0
    %v2463 = vand.u32 %v31, 4294901760
    %v2464 = vsub.f32 %v31, %v2463
    %v2465 = vand.u32 %v2464, 4294901760
    %v2466 = vsub.f32 %v2464, %v2465
    %v2467 = vand.u32 %v2466, 4294901760
    %2468 = vmatpush1.msra.mxu0 %v2467
    %2469 = vmatprep.subr.mxu0 0.0
    %v2470 = vand.u32 %v32, 4294901760
    %v2471 = vsub.f32 %v32, %v2470
    %v2472 = vand.u32 %v2471, 4294901760
    %v2473 = vsub.f32 %v2471, %v2472
    %v2474 = vand.u32 %v2473, 4294901760
    %2475 = vmatpush1.msra.mxu0 %v2474
    %2476 = vmatprep.subr.mxu0 0.0
    %v2477 = vand.u32 %v33, 4294901760
    %v2478 = vsub.f32 %v33, %v2477
    %v2479 = vand.u32 %v2478, 4294901760
    %v2480 = vsub.f32 %v2478, %v2479
    %v2481 = vand.u32 %v2480, 4294901760
    %2482 = vmatpush1.msra.mxu0 %v2481
    %2483 = vmatprep.subr.mxu0 0.0
    %v2484 = vand.u32 %v34, 4294901760
    %v2485 = vsub.f32 %v34, %v2484
    %v2486 = vand.u32 %v2485, 4294901760
    %v2487 = vsub.f32 %v2485, %v2486
    %v2488 = vand.u32 %v2487, 4294901760
    %2489 = vmatpush1.msra.mxu0 %v2488
    %2490 = vmatprep.subr.mxu0 0.0
    %v2491 = vand.u32 %v35, 4294901760
    %v2492 = vsub.f32 %v35, %v2491
    %v2493 = vand.u32 %v2492, 4294901760
    %v2494 = vsub.f32 %v2492, %v2493
    %v2495 = vand.u32 %v2494, 4294901760
    %2496 = vmatpush1.msra.mxu0 %v2495
    %2497 = vmatprep.subr.mxu0 0.0
    %v2498 = vand.u32 %v36, 4294901760
    %v2499 = vsub.f32 %v36, %v2498
    %v2500 = vand.u32 %v2499, 4294901760
    %v2501 = vsub.f32 %v2499, %v2500
    %v2502 = vand.u32 %v2501, 4294901760
    %2503 = vmatpush1.msra.mxu0 %v2502
    %2504 = vmatprep.subr.mxu0 0.0
    %v2505 = vand.u32 %v37, 4294901760
    %v2506 = vsub.f32 %v37, %v2505
    %v2507 = vand.u32 %v2506, 4294901760
    %v2508 = vsub.f32 %v2506, %v2507
    %v2509 = vand.u32 %v2508, 4294901760
    %2510 = vmatpush1.msra.mxu0 %v2509
    %2511 = vmatprep.subr.mxu0 0.0
    %v2512 = vand.u32 %v38, 4294901760
    %v2513 = vsub.f32 %v38, %v2512
    %v2514 = vand.u32 %v2513, 4294901760
    %v2515 = vsub.f32 %v2513, %v2514
    %v2516 = vand.u32 %v2515, 4294901760
    %2517 = vmatpush1.msra.mxu0 %v2516
    %2518 = vmatprep.subr.mxu0 0.0
    %2519 = vmatpush1.msra.mxu0 0.0
    %2520 = vmatprep.subr.mxu0 0.0
    %2521 = vmatpush1.msra.mxu0 0.0
    %2522 = vmatprep.subr.mxu0 0.0
    %2523 = vmatpush1.msra.mxu0 0.0
    %2524 = vmatprep.subr.mxu0 0.0
    %2525 = vmatpush1.msra.mxu0 0.0
    %2526 = vmatprep.subr.mxu0 0.0
    %2527 = vmatpush1.msra.mxu0 0.0
    %2528 = vmatprep.subr.mxu0 0.0
    %2529 = vmatpush1.msra.mxu0 0.0
    %2530 = vmatprep.subr.mxu0 0.0
    %2531 = vmatpush1.msra.mxu0 0.0
    %2532 = vmatprep.subr.mxu0 0.0
    %2533 = vmatpush1.msra.mxu0 0.0
    %2534 = vmatprep.subr.mxu0 0.0
    %2535 = vmatpush1.msra.mxu0 0.0
    %2536 = vmatprep.subr.mxu0 0.0
    %2537 = vmatpush1.msra.mxu0 0.0
    %2538 = vmatprep.subr.mxu0 0.0
    %2539 = vmatpush1.msra.mxu0 0.0
    %2540 = vmatprep.subr.mxu0 0.0
    %2541 = vmatpush1.msra.mxu0 0.0
    %2542 = vmatprep.subr.mxu0 0.0
    %2543 = vmatpush1.msra.mxu0 0.0
    %2544 = vmatprep.subr.mxu0 0.0
    %2545 = vmatpush1.msra.mxu0 0.0
    %2546 = vmatprep.subr.mxu0 0.0
    %2547 = vmatpush1.msra.mxu0 0.0
    %2548 = vmatprep.subr.mxu0 0.0
    %2549 = vmatpush1.msra.mxu0 0.0
    %2550 = vmatprep.subr.mxu0 0.0
    %2551 = vmatpush1.msra.mxu0 0.0
    %2552 = vmatprep.subr.mxu0 0.0
    %2553 = vmatpush1.msra.mxu0 0.0
    %2554 = vmatprep.subr.mxu0 0.0
    %2555 = vmatpush1.msra.mxu0 0.0
    %2556 = vmatprep.subr.mxu0 0.0
    %2557 = vmatpush1.msra.mxu0 0.0
    %2558 = vmatprep.subr.mxu0 0.0
    %2559 = vmatpush1.msra.mxu0 0.0
    %2560 = vmatprep.subr.mxu0 0.0
    %2561 = vmatpush1.msra.mxu0 0.0
    %2562 = vmatprep.subr.mxu0 0.0
    %2563 = vmatpush1.msra.mxu0 0.0
    %2564 = vmatprep.subr.mxu0 0.0
    %2565 = vmatpush1.msra.mxu0 0.0
    %2566 = vmatprep.mubr.f32.mxu0 0.0
    %v2567 = vand.u32 %v2286, 4294901760
    %2568 = vmatmul.mubr.f32.gmra.mrb[0].mxu0 %v2567
    %v2569 = vpop.f32.mrb[0].mxu0
    %v2570 = vadd.f32 %v2389, %v2569
    %v2571 = vpop.f32.mrb[0].mxu0
    %2572 = vmatprep.mubr.f32.mxu0 0.0
    %v2573 = vand.u32 %v2289, 4294901760
    %2574 = vmatmul.mubr.f32.gmra.mrb[0].mxu0 %v2573
    %v2575 = vpop.f32.mrb[0].mxu0
    %v2576 = vadd.f32 %v2399, %v2575
    %v2577 = vpop.f32.mrb[0].mxu0
    %2578 = vmatprep.mubr.f32.mxu0 0.0
    %v2579 = vand.u32 %v2292, 4294901760
    %2580 = vmatmul.mubr.f32.gmra.mrb[0].mxu0 %v2579
    %v2581 = vpop.f32.mrb[0].mxu0
    %v2582 = vadd.f32 %v2409, %v2581
    %v2583 = vpop.f32.mrb[0].mxu0
    %2584 = vmatprep.mubr.f32.mxu0 0.0
    %v2585 = vand.u32 %v2295, 4294901760
    %2586 = vmatmul.mubr.f32.gmra.mrb[0].mxu0 %v2585
    %v2587 = vpop.f32.mrb[0].mxu0
    %v2588 = vadd.f32 %v2419, %v2587
    %v2589 = vpop.f32.mrb[0].mxu0
    %2590 = vmatprep.mubr.f32.mxu0 0.0
    %v2591 = vand.u32 %v2298, 4294901760
    %2592 = vmatmul.mubr.f32.gmra.mrb[0].mxu0 %v2591
    %v2593 = vpop.f32.mrb[0].mxu0
    %v2594 = vadd.f32 %v2429, %v2593
    %v2595 = vpop.f32.mrb[0].mxu0
    %2596 = vmatprep.mubr.f32.mxu0 0.0
    %v2597 = vand.u32 %v2301, 4294901760
    %2598 = vmatmul.mubr.f32.gmra.mrb[0].mxu0 %v2597
    %v2599 = vpop.f32.mrb[0].mxu0
    %v2600 = vadd.f32 %v2439, %v2599
    %v2601 = vpop.f32.mrb[0].mxu0
    %2602 = vmatprep.mubr.f32.mxu0 0.0
    %v2603 = vand.u32 %v2304, 4294901760
    %2604 = vmatmul.mubr.f32.gmra.mrb[0].mxu0 %v2603
    %v2605 = vpop.f32.mrb[0].mxu0
    %v2606 = vadd.f32 %v2449, %v2605
    %v2607 = vpop.f32.mrb[0].mxu0
    %2608 = vmatprep.mubr.f32.mxu0 0.0
    %v2609 = vand.u32 %v2307, 4294901760
    %2610 = vmatmul.mubr.f32.gmra.mrb[0].mxu0 %v2609
    %v2611 = vpop.f32.mrb[0].mxu0
    %v2612 = vadd.f32 %v2459, %v2611
    %v2613 = vpop.f32.mrb[0].mxu0
    %2614 = vdwg.mxu0
    %2615 = vmatprep.subr.mxu0 0.0
    %v2616 = vand.u32 %v31, 4294901760
    %v2617 = vsub.f32 %v31, %v2616
    %2618 = vmatpush1.msra.mxu0 %v2617
    %2619 = vmatprep.subr.mxu0 0.0
    %v2620 = vand.u32 %v32, 4294901760
    %v2621 = vsub.f32 %v32, %v2620
    %2622 = vmatpush1.msra.mxu0 %v2621
    %2623 = vmatprep.subr.mxu0 0.0
    %v2624 = vand.u32 %v33, 4294901760
    %v2625 = vsub.f32 %v33, %v2624
    %2626 = vmatpush1.msra.mxu0 %v2625
    %2627 = vmatprep.subr.mxu0 0.0
    %v2628 = vand.u32 %v34, 4294901760
    %v2629 = vsub.f32 %v34, %v2628
    %2630 = vmatpush1.msra.mxu0 %v2629
    %2631 = vmatprep.subr.mxu0 0.0
    %v2632 = vand.u32 %v35, 4294901760
    %v2633 = vsub.f32 %v35, %v2632
    %2634 = vmatpush1.msra.mxu0 %v2633
    %2635 = vmatprep.subr.mxu0 0.0
    %v2636 = vand.u32 %v36, 4294901760
    %v2637 = vsub.f32 %v36, %v2636
    %2638 = vmatpush1.msra.mxu0 %v2637
    %2639 = vmatprep.subr.mxu0 0.0
    %v2640 = vand.u32 %v37, 4294901760
    %v2641 = vsub.f32 %v37, %v2640
    %2642 = vmatpush1.msra.mxu0 %v2641
    %2643 = vmatprep.subr.mxu0 0.0
    %v2644 = vand.u32 %v38, 4294901760
    %v2645 = vsub.f32 %v38, %v2644
    %2646 = vmatpush1.msra.mxu0 %v2645
    %2647 = vmatprep.subr.mxu0 0.0
    %2648 = vmatpush1.msra.mxu0 0.0
    %2649 = vmatprep.subr.mxu0 0.0
    %2650 = vmatpush1.msra.mxu0 0.0
    %2651 = vmatprep.subr.mxu0 0.0
    %2652 = vmatpush1.msra.mxu0 0.0
    %2653 = vmatprep.subr.mxu0 0.0
    %2654 = vmatpush1.msra.mxu0 0.0
    %2655 = vmatprep.subr.mxu0 0.0
    %2656 = vmatpush1.msra.mxu0 0.0
    %2657 = vmatprep.subr.mxu0 0.0
    %2658 = vmatpush1.msra.mxu0 0.0
    %2659 = vmatprep.subr.mxu0 0.0
    %2660 = vmatpush1.msra.mxu0 0.0
    %2661 = vmatprep.subr.mxu0 0.0
    %2662 = vmatpush1.msra.mxu0 0.0
    %2663 = vmatprep.subr.mxu0 0.0
    %2664 = vmatpush1.msra.mxu0 0.0
    %2665 = vmatprep.subr.mxu0 0.0
    %2666 = vmatpush1.msra.mxu0 0.0
    %2667 = vmatprep.subr.mxu0 0.0
    %2668 = vmatpush1.msra.mxu0 0.0
    %2669 = vmatprep.subr.mxu0 0.0
    %2670 = vmatpush1.msra.mxu0 0.0
    %2671 = vmatprep.subr.mxu0 0.0
    %2672 = vmatpush1.msra.mxu0 0.0
    %2673 = vmatprep.subr.mxu0 0.0
    %2674 = vmatpush1.msra.mxu0 0.0
    %2675 = vmatprep.subr.mxu0 0.0
    %2676 = vmatpush1.msra.mxu0 0.0
    %2677 = vmatprep.subr.mxu0 0.0
    %2678 = vmatpush1.msra.mxu0 0.0
    %2679 = vmatprep.subr.mxu0 0.0
    %2680 = vmatpush1.msra.mxu0 0.0
    %2681 = vmatprep.subr.mxu0 0.0
    %2682 = vmatpush1.msra.mxu0 0.0
    %2683 = vmatprep.subr.mxu0 0.0
    %2684 = vmatpush1.msra.mxu0 0.0
    %2685 = vmatprep.subr.mxu0 0.0
    %2686 = vmatpush1.msra.mxu0 0.0
    %2687 = vmatprep.subr.mxu0 0.0
    %2688 = vmatpush1.msra.mxu0 0.0
    %2689 = vmatprep.subr.mxu0 0.0
    %2690 = vmatpush1.msra.mxu0 0.0
    %2691 = vmatprep.subr.mxu0 0.0
    %2692 = vmatpush1.msra.mxu0 0.0
    %2693 = vmatprep.subr.mxu0 0.0
    %2694 = vmatpush1.msra.mxu0 0.0
    %2695 = vmatprep.mubr.f32.mxu0 0.0
    %v2696 = vand.u32 %v2286, 4294901760
    %v2697 = vsub.f32 %v2286, %v2696
    %2698 = vmatmul.mubr.f32.gmra.mrb[0].mxu0 %v2697
    %v2699 = vpop.f32.mrb[0].mxu0
    %v2700 = vadd.f32 %v2570, %v2699
    %v2701 = vpop.f32.mrb[0].mxu0
    %2702 = vmatprep.mubr.f32.mxu0 0.0
    %v2703 = vand.u32 %v2289, 4294901760
    %v2704 = vsub.f32 %v2289, %v2703
    %2705 = vmatmul.mubr.f32.gmra.mrb[0].mxu0 %v2704
    %v2706 = vpop.f32.mrb[0].mxu0
    %v2707 = vadd.f32 %v2576, %v2706
    %v2708 = vpop.f32.mrb[0].mxu0
    %2709 = vmatprep.mubr.f32.mxu0 0.0
    %v2710 = vand.u32 %v2292, 4294901760
    %v2711 = vsub.f32 %v2292, %v2710
    %2712 = vmatmul.mubr.f32.gmra.mrb[0].mxu0 %v2711
    %v2713 = vpop.f32.mrb[0].mxu0
    %v2714 = vadd.f32 %v2582, %v2713
    %v2715 = vpop.f32.mrb[0].mxu0
    %2716 = vmatprep.mubr.f32.mxu0 0.0
    %v2717 = vand.u32 %v2295, 4294901760
    %v2718 = vsub.f32 %v2295, %v2717
    %2719 = vmatmul.mubr.f32.gmra.mrb[0].mxu0 %v2718
    %v2720 = vpop.f32.mrb[0].mxu0
    %v2721 = vadd.f32 %v2588, %v2720
    %v2722 = vpop.f32.mrb[0].mxu0
    %2723 = vmatprep.mubr.f32.mxu0 0.0
    %v2724 = vand.u32 %v2298, 4294901760
    %v2725 = vsub.f32 %v2298, %v2724
    %2726 = vmatmul.mubr.f32.gmra.mrb[0].mxu0 %v2725
    %v2727 = vpop.f32.mrb[0].mxu0
    %v2728 = vadd.f32 %v2594, %v2727
    %v2729 = vpop.f32.mrb[0].mxu0
    %2730 = vmatprep.mubr.f32.mxu0 0.0
    %v2731 = vand.u32 %v2301, 4294901760
    %v2732 = vsub.f32 %v2301, %v2731
    %2733 = vmatmul.mubr.f32.gmra.mrb[0].mxu0 %v2732
    %v2734 = vpop.f32.mrb[0].mxu0
    %v2735 = vadd.f32 %v2600, %v2734
    %v2736 = vpop.f32.mrb[0].mxu0
    %2737 = vmatprep.mubr.f32.mxu0 0.0
    %v2738 = vand.u32 %v2304, 4294901760
    %v2739 = vsub.f32 %v2304, %v2738
    %2740 = vmatmul.mubr.f32.gmra.mrb[0].mxu0 %v2739
    %v2741 = vpop.f32.mrb[0].mxu0
    %v2742 = vadd.f32 %v2606, %v2741
    %v2743 = vpop.f32.mrb[0].mxu0
    %2744 = vmatprep.mubr.f32.mxu0 0.0
    %v2745 = vand.u32 %v2307, 4294901760
    %v2746 = vsub.f32 %v2307, %v2745
    %2747 = vmatmul.mubr.f32.gmra.mrb[0].mxu0 %v2746
    %v2748 = vpop.f32.mrb[0].mxu0
    %v2749 = vadd.f32 %v2612, %v2748
    %v2750 = vpop.f32.mrb[0].mxu0
    %2751 = vdwg.mxu0
    %2752 = vmatprep.subr.mxu0 0.0
    %v2753 = vand.u32 %v31, 4294901760
    %2754 = vmatpush1.msra.mxu0 %v2753
    %2755 = vmatprep.subr.mxu0 0.0
    %v2756 = vand.u32 %v32, 4294901760
    %2757 = vmatpush1.msra.mxu0 %v2756
    %2758 = vmatprep.subr.mxu0 0.0
    %v2759 = vand.u32 %v33, 4294901760
    %2760 = vmatpush1.msra.mxu0 %v2759
    %2761 = vmatprep.subr.mxu0 0.0
    %v2762 = vand.u32 %v34, 4294901760
    %2763 = vmatpush1.msra.mxu0 %v2762
    %2764 = vmatprep.subr.mxu0 0.0
    %v2765 = vand.u32 %v35, 4294901760
    %2766 = vmatpush1.msra.mxu0 %v2765
    %2767 = vmatprep.subr.mxu0 0.0
    %v2768 = vand.u32 %v36, 4294901760
    %2769 = vmatpush1.msra.mxu0 %v2768
    %2770 = vmatprep.subr.mxu0 0.0
    %v2771 = vand.u32 %v37, 4294901760
    %2772 = vmatpush1.msra.mxu0 %v2771
    %2773 = vmatprep.subr.mxu0 0.0
    %v2774 = vand.u32 %v38, 4294901760
    %2775 = vmatpush1.msra.mxu0 %v2774
    %2776 = vmatprep.subr.mxu0 0.0
    %2777 = vmatpush1.msra.mxu0 0.0
    %2778 = vmatprep.subr.mxu0 0.0
    %2779 = vmatpush1.msra.mxu0 0.0
    %2780 = vmatprep.subr.mxu0 0.0
    %2781 = vmatpush1.msra.mxu0 0.0
    %2782 = vmatprep.subr.mxu0 0.0
    %2783 = vmatpush1.msra.mxu0 0.0
    %2784 = vmatprep.subr.mxu0 0.0
    %2785 = vmatpush1.msra.mxu0 0.0
    %2786 = vmatprep.subr.mxu0 0.0
    %2787 = vmatpush1.msra.mxu0 0.0
    %2788 = vmatprep.subr.mxu0 0.0
    %2789 = vmatpush1.msra.mxu0 0.0
    %2790 = vmatprep.subr.mxu0 0.0
    %2791 = vmatpush1.msra.mxu0 0.0
    %2792 = vmatprep.subr.mxu0 0.0
    %2793 = vmatpush1.msra.mxu0 0.0
    %2794 = vmatprep.subr.mxu0 0.0
    %2795 = vmatpush1.msra.mxu0 0.0
    %2796 = vmatprep.subr.mxu0 0.0
    %2797 = vmatpush1.msra.mxu0 0.0
    %2798 = vmatprep.subr.mxu0 0.0
    %2799 = vmatpush1.msra.mxu0 0.0
    %2800 = vmatprep.subr.mxu0 0.0
    %2801 = vmatpush1.msra.mxu0 0.0
    %2802 = vmatprep.subr.mxu0 0.0
    %2803 = vmatpush1.msra.mxu0 0.0
    %2804 = vmatprep.subr.mxu0 0.0
    %2805 = vmatpush1.msra.mxu0 0.0
    %2806 = vmatprep.subr.mxu0 0.0
    %2807 = vmatpush1.msra.mxu0 0.0
    %2808 = vmatprep.subr.mxu0 0.0
    %2809 = vmatpush1.msra.mxu0 0.0
    %2810 = vmatprep.subr.mxu0 0.0
    %2811 = vmatpush1.msra.mxu0 0.0
    %2812 = vmatprep.subr.mxu0 0.0
    %2813 = vmatpush1.msra.mxu0 0.0
    %2814 = vmatprep.subr.mxu0 0.0
    %2815 = vmatpush1.msra.mxu0 0.0
    %2816 = vmatprep.subr.mxu0 0.0
    %2817 = vmatpush1.msra.mxu0 0.0
    %2818 = vmatprep.subr.mxu0 0.0
    %2819 = vmatpush1.msra.mxu0 0.0
    %2820 = vmatprep.subr.mxu0 0.0
    %2821 = vmatpush1.msra.mxu0 0.0
    %2822 = vmatprep.subr.mxu0 0.0
    %2823 = vmatpush1.msra.mxu0 0.0
    %2824 = vmatprep.mubr.f32.mxu0 0.0
    %v2825 = vand.u32 %v2286, 4294901760
    %v2826 = vsub.f32 %v2286, %v2825
    %v2827 = vand.u32 %v2826, 4294901760
    %2828 = vmatmul.mubr.f32.gmra.mrb[0].mxu0 %v2827
    %v2829 = vpop.f32.mrb[0].mxu0
    %v2830 = vadd.f32 %v2700, %v2829
    %v2831 = vpop.f32.mrb[0].mxu0
    %2832 = vmatprep.mubr.f32.mxu0 0.0
    %v2833 = vand.u32 %v2289, 4294901760
    %v2834 = vsub.f32 %v2289, %v2833
    %v2835 = vand.u32 %v2834, 4294901760
    %2836 = vmatmul.mubr.f32.gmra.mrb[0].mxu0 %v2835
    %v2837 = vpop.f32.mrb[0].mxu0
    %v2838 = vadd.f32 %v2707, %v2837
    %v2839 = vpop.f32.mrb[0].mxu0
    %2840 = vmatprep.mubr.f32.mxu0 0.0
    %v2841 = vand.u32 %v2292, 4294901760
    %v2842 = vsub.f32 %v2292, %v2841
    %v2843 = vand.u32 %v2842, 4294901760
    %2844 = vmatmul.mubr.f32.gmra.mrb[0].mxu0 %v2843
    %v2845 = vpop.f32.mrb[0].mxu0
    %v2846 = vadd.f32 %v2714, %v2845
    %v2847 = vpop.f32.mrb[0].mxu0
    %2848 = vmatprep.mubr.f32.mxu0 0.0
    %v2849 = vand.u32 %v2295, 4294901760
    %v2850 = vsub.f32 %v2295, %v2849
    %v2851 = vand.u32 %v2850, 4294901760
    %2852 = vmatmul.mubr.f32.gmra.mrb[0].mxu0 %v2851
    %v2853 = vpop.f32.mrb[0].mxu0
    %v2854 = vadd.f32 %v2721, %v2853
    %v2855 = vpop.f32.mrb[0].mxu0
    %2856 = vmatprep.mubr.f32.mxu0 0.0
    %v2857 = vand.u32 %v2298, 4294901760
    %v2858 = vsub.f32 %v2298, %v2857
    %v2859 = vand.u32 %v2858, 4294901760
    %2860 = vmatmul.mubr.f32.gmra.mrb[0].mxu0 %v2859
    %v2861 = vpop.f32.mrb[0].mxu0
    %v2862 = vadd.f32 %v2728, %v2861
    %v2863 = vpop.f32.mrb[0].mxu0
    %2864 = vmatprep.mubr.f32.mxu0 0.0
    %v2865 = vand.u32 %v2301, 4294901760
    %v2866 = vsub.f32 %v2301, %v2865
    %v2867 = vand.u32 %v2866, 4294901760
    %2868 = vmatmul.mubr.f32.gmra.mrb[0].mxu0 %v2867
    %v2869 = vpop.f32.mrb[0].mxu0
    %v2870 = vadd.f32 %v2735, %v2869
    %v2871 = vpop.f32.mrb[0].mxu0
    %2872 = vmatprep.mubr.f32.mxu0 0.0
    %v2873 = vand.u32 %v2304, 4294901760
    %v2874 = vsub.f32 %v2304, %v2873
    %v2875 = vand.u32 %v2874, 4294901760
    %2876 = vmatmul.mubr.f32.gmra.mrb[0].mxu0 %v2875
    %v2877 = vpop.f32.mrb[0].mxu0
    %v2878 = vadd.f32 %v2742, %v2877
    %v2879 = vpop.f32.mrb[0].mxu0
    %2880 = vmatprep.mubr.f32.mxu0 0.0
    %v2881 = vand.u32 %v2307, 4294901760
    %v2882 = vsub.f32 %v2307, %v2881
    %v2883 = vand.u32 %v2882, 4294901760
    %2884 = vmatmul.mubr.f32.gmra.mrb[0].mxu0 %v2883
    %v2885 = vpop.f32.mrb[0].mxu0
    %v2886 = vadd.f32 %v2749, %v2885
    %v2887 = vpop.f32.mrb[0].mxu0
    %2888 = vdwg.mxu0
    %2889 = vmatprep.subr.mxu0 0.0
    %v2890 = vand.u32 %v31, 4294901760
    %v2891 = vsub.f32 %v31, %v2890
    %v2892 = vand.u32 %v2891, 4294901760
    %2893 = vmatpush1.msra.mxu0 %v2892
    %2894 = vmatprep.subr.mxu0 0.0
    %v2895 = vand.u32 %v32, 4294901760
    %v2896 = vsub.f32 %v32, %v2895
    %v2897 = vand.u32 %v2896, 4294901760
    %2898 = vmatpush1.msra.mxu0 %v2897
    %2899 = vmatprep.subr.mxu0 0.0
    %v2900 = vand.u32 %v33, 4294901760
    %v2901 = vsub.f32 %v33, %v2900
    %v2902 = vand.u32 %v2901, 4294901760
    %2903 = vmatpush1.msra.mxu0 %v2902
    %2904 = vmatprep.subr.mxu0 0.0
    %v2905 = vand.u32 %v34, 4294901760
    %v2906 = vsub.f32 %v34, %v2905
    %v2907 = vand.u32 %v2906, 4294901760
    %2908 = vmatpush1.msra.mxu0 %v2907
    %2909 = vmatprep.subr.mxu0 0.0
    %v2910 = vand.u32 %v35, 4294901760
    %v2911 = vsub.f32 %v35, %v2910
    %v2912 = vand.u32 %v2911, 4294901760
    %2913 = vmatpush1.msra.mxu0 %v2912
    %2914 = vmatprep.subr.mxu0 0.0
    %v2915 = vand.u32 %v36, 4294901760
    %v2916 = vsub.f32 %v36, %v2915
    %v2917 = vand.u32 %v2916, 4294901760
    %2918 = vmatpush1.msra.mxu0 %v2917
    %2919 = vmatprep.subr.mxu0 0.0
    %v2920 = vand.u32 %v37, 4294901760
    %v2921 = vsub.f32 %v37, %v2920
    %v2922 = vand.u32 %v2921, 4294901760
    %2923 = vmatpush1.msra.mxu0 %v2922
    %2924 = vmatprep.subr.mxu0 0.0
    %v2925 = vand.u32 %v38, 4294901760
    %v2926 = vsub.f32 %v38, %v2925
    %v2927 = vand.u32 %v2926, 4294901760
    %2928 = vmatpush1.msra.mxu0 %v2927
    %2929 = vmatprep.subr.mxu0 0.0
    %2930 = vmatpush1.msra.mxu0 0.0
    %2931 = vmatprep.subr.mxu0 0.0
    %2932 = vmatpush1.msra.mxu0 0.0
    %2933 = vmatprep.subr.mxu0 0.0
    %2934 = vmatpush1.msra.mxu0 0.0
    %2935 = vmatprep.subr.mxu0 0.0
    %2936 = vmatpush1.msra.mxu0 0.0
    %2937 = vmatprep.subr.mxu0 0.0
    %2938 = vmatpush1.msra.mxu0 0.0
    %2939 = vmatprep.subr.mxu0 0.0
    %2940 = vmatpush1.msra.mxu0 0.0
    %2941 = vmatprep.subr.mxu0 0.0
    %2942 = vmatpush1.msra.mxu0 0.0
    %2943 = vmatprep.subr.mxu0 0.0
    %2944 = vmatpush1.msra.mxu0 0.0
    %2945 = vmatprep.subr.mxu0 0.0
    %2946 = vmatpush1.msra.mxu0 0.0
    %2947 = vmatprep.subr.mxu0 0.0
    %2948 = vmatpush1.msra.mxu0 0.0
    %2949 = vmatprep.subr.mxu0 0.0
    %2950 = vmatpush1.msra.mxu0 0.0
    %2951 = vmatprep.subr.mxu0 0.0
    %2952 = vmatpush1.msra.mxu0 0.0
    %2953 = vmatprep.subr.mxu0 0.0
    %2954 = vmatpush1.msra.mxu0 0.0
    %2955 = vmatprep.subr.mxu0 0.0
    %2956 = vmatpush1.msra.mxu0 0.0
    %2957 = vmatprep.subr.mxu0 0.0
    %2958 = vmatpush1.msra.mxu0 0.0
    %2959 = vmatprep.subr.mxu0 0.0
    %2960 = vmatpush1.msra.mxu0 0.0
    %2961 = vmatprep.subr.mxu0 0.0
    %2962 = vmatpush1.msra.mxu0 0.0
    %2963 = vmatprep.subr.mxu0 0.0
    %2964 = vmatpush1.msra.mxu0 0.0
    %2965 = vmatprep.subr.mxu0 0.0
    %2966 = vmatpush1.msra.mxu0 0.0
    %2967 = vmatprep.subr.mxu0 0.0
    %2968 = vmatpush1.msra.mxu0 0.0
    %2969 = vmatprep.subr.mxu0 0.0
    %2970 = vmatpush1.msra.mxu0 0.0
    %2971 = vmatprep.subr.mxu0 0.0
    %2972 = vmatpush1.msra.mxu0 0.0
    %2973 = vmatprep.subr.mxu0 0.0
    %2974 = vmatpush1.msra.mxu0 0.0
    %2975 = vmatprep.subr.mxu0 0.0
    %2976 = vmatpush1.msra.mxu0 0.0
    %2977 = vmatprep.mubr.f32.mxu0 0.0
    %v2978 = vand.u32 %v2286, 4294901760
    %2979 = vmatmul.mubr.f32.gmra.mrb[0].mxu0 %v2978
    %v2980 = vpop.f32.mrb[0].mxu0
    %v2981 = vadd.f32 %v2830, %v2980
    %v2982 = vpop.f32.mrb[0].mxu0
    %2983 = vmatprep.mubr.f32.mxu0 0.0
    %v2984 = vand.u32 %v2289, 4294901760
    %2985 = vmatmul.mubr.f32.gmra.mrb[0].mxu0 %v2984
    %v2986 = vpop.f32.mrb[0].mxu0
    %v2987 = vadd.f32 %v2838, %v2986
    %v2988 = vpop.f32.mrb[0].mxu0
    %2989 = vmatprep.mubr.f32.mxu0 0.0
    %v2990 = vand.u32 %v2292, 4294901760
    %2991 = vmatmul.mubr.f32.gmra.mrb[0].mxu0 %v2990
    %v2992 = vpop.f32.mrb[0].mxu0
    %v2993 = vadd.f32 %v2846, %v2992
    %v2994 = vpop.f32.mrb[0].mxu0
    %2995 = vmatprep.mubr.f32.mxu0 0.0
    %v2996 = vand.u32 %v2295, 4294901760
    %2997 = vmatmul.mubr.f32.gmra.mrb[0].mxu0 %v2996
    %v2998 = vpop.f32.mrb[0].mxu0
    %v2999 = vadd.f32 %v2854, %v2998
    %v3000 = vpop.f32.mrb[0].mxu0
    %3001 = vmatprep.mubr.f32.mxu0 0.0
    %v3002 = vand.u32 %v2298, 4294901760
    %3003 = vmatmul.mubr.f32.gmra.mrb[0].mxu0 %v3002
    %v3004 = vpop.f32.mrb[0].mxu0
    %v3005 = vadd.f32 %v2862, %v3004
    %v3006 = vpop.f32.mrb[0].mxu0
    %3007 = vmatprep.mubr.f32.mxu0 0.0
    %v3008 = vand.u32 %v2301, 4294901760
    %3009 = vmatmul.mubr.f32.gmra.mrb[0].mxu0 %v3008
    %v3010 = vpop.f32.mrb[0].mxu0
    %v3011 = vadd.f32 %v2870, %v3010
    %v3012 = vpop.f32.mrb[0].mxu0
    %3013 = vmatprep.mubr.f32.mxu0 0.0
    %v3014 = vand.u32 %v2304, 4294901760
    %3015 = vmatmul.mubr.f32.gmra.mrb[0].mxu0 %v3014
    %v3016 = vpop.f32.mrb[0].mxu0
    %v3017 = vadd.f32 %v2878, %v3016
    %v3018 = vpop.f32.mrb[0].mxu0
    %3019 = vmatprep.mubr.f32.mxu0 0.0
    %v3020 = vand.u32 %v2307, 4294901760
    %3021 = vmatmul.mubr.f32.gmra.mrb[0].mxu0 %v3020
    %v3022 = vpop.f32.mrb[0].mxu0
    %v3023 = vadd.f32 %v2886, %v3022
    %v3024 = vpop.f32.mrb[0].mxu0
    %3025 = vdwg.mxu0
    %3026 = vmatprep.subr.mxu0 0.0
    %v3027 = vand.u32 %v31, 4294901760
    %3028 = vmatpush1.msra.mxu0 %v3027
    %3029 = vmatprep.subr.mxu0 0.0
    %v3030 = vand.u32 %v32, 4294901760
    %3031 = vmatpush1.msra.mxu0 %v3030
    %3032 = vmatprep.subr.mxu0 0.0
    %v3033 = vand.u32 %v33, 4294901760
    %3034 = vmatpush1.msra.mxu0 %v3033
    %3035 = vmatprep.subr.mxu0 0.0
    %v3036 = vand.u32 %v34, 4294901760
    %3037 = vmatpush1.msra.mxu0 %v3036
    %3038 = vmatprep.subr.mxu0 0.0
    %v3039 = vand.u32 %v35, 4294901760
    %3040 = vmatpush1.msra.mxu0 %v3039
    %3041 = vmatprep.subr.mxu0 0.0
    %v3042 = vand.u32 %v36, 4294901760
    %3043 = vmatpush1.msra.mxu0 %v3042
    %3044 = vmatprep.subr.mxu0 0.0
    %v3045 = vand.u32 %v37, 4294901760
    %3046 = vmatpush1.msra.mxu0 %v3045
    %3047 = vmatprep.subr.mxu0 0.0
    %v3048 = vand.u32 %v38, 4294901760
    %3049 = vmatpush1.msra.mxu0 %v3048
    %3050 = vmatprep.subr.mxu0 0.0
    %3051 = vmatpush1.msra.mxu0 0.0
    %3052 = vmatprep.subr.mxu0 0.0
    %3053 = vmatpush1.msra.mxu0 0.0
    %3054 = vmatprep.subr.mxu0 0.0
    %3055 = vmatpush1.msra.mxu0 0.0
    %3056 = vmatprep.subr.mxu0 0.0
    %3057 = vmatpush1.msra.mxu0 0.0
    %3058 = vmatprep.subr.mxu0 0.0
    %3059 = vmatpush1.msra.mxu0 0.0
    %3060 = vmatprep.subr.mxu0 0.0
    %3061 = vmatpush1.msra.mxu0 0.0
    %3062 = vmatprep.subr.mxu0 0.0
    %3063 = vmatpush1.msra.mxu0 0.0
    %3064 = vmatprep.subr.mxu0 0.0
    %3065 = vmatpush1.msra.mxu0 0.0
    %3066 = vmatprep.subr.mxu0 0.0
    %3067 = vmatpush1.msra.mxu0 0.0
    %3068 = vmatprep.subr.mxu0 0.0
    %3069 = vmatpush1.msra.mxu0 0.0
    %3070 = vmatprep.subr.mxu0 0.0
    %3071 = vmatpush1.msra.mxu0 0.0
    %3072 = vmatprep.subr.mxu0 0.0
    %3073 = vmatpush1.msra.mxu0 0.0
    %3074 = vmatprep.subr.mxu0 0.0
    %3075 = vmatpush1.msra.mxu0 0.0
    %3076 = vmatprep.subr.mxu0 0.0
    %3077 = vmatpush1.msra.mxu0 0.0
    %3078 = vmatprep.subr.mxu0 0.0
    %3079 = vmatpush1.msra.mxu0 0.0
    %3080 = vmatprep.subr.mxu0 0.0
    %3081 = vmatpush1.msra.mxu0 0.0
    %3082 = vmatprep.subr.mxu0 0.0
    %3083 = vmatpush1.msra.mxu0 0.0
    %3084 = vmatprep.subr.mxu0 0.0
    %3085 = vmatpush1.msra.mxu0 0.0
    %3086 = vmatprep.subr.mxu0 0.0
    %3087 = vmatpush1.msra.mxu0 0.0
    %3088 = vmatprep.subr.mxu0 0.0
    %3089 = vmatpush1.msra.mxu0 0.0
    %3090 = vmatprep.subr.mxu0 0.0
    %3091 = vmatpush1.msra.mxu0 0.0
    %3092 = vmatprep.subr.mxu0 0.0
    %3093 = vmatpush1.msra.mxu0 0.0
    %3094 = vmatprep.subr.mxu0 0.0
    %3095 = vmatpush1.msra.mxu0 0.0
    %3096 = vmatprep.subr.mxu0 0.0
    %3097 = vmatpush1.msra.mxu0 0.0
    %3098 = vmatprep.mubr.f32.mxu0 0.0
    %v3099 = vand.u32 %v2286, 4294901760
    %3100 = vmatmul.mubr.f32.gmra.mrb[0].mxu0 %v3099
    %v3101 = vpop.f32.mrb[0].mxu0
    %v3102 = vadd.f32 %v2981, %v3101
    %v3103 = vpop.f32.mrb[0].mxu0
    %3104 = vmatprep.mubr.f32.mxu0 0.0
    %v3105 = vand.u32 %v2289, 4294901760
    %3106 = vmatmul.mubr.f32.gmra.mrb[0].mxu0 %v3105
    %v3107 = vpop.f32.mrb[0].mxu0
    %v3108 = vadd.f32 %v2987, %v3107
    %v3109 = vpop.f32.mrb[0].mxu0
    %3110 = vmatprep.mubr.f32.mxu0 0.0
    %v3111 = vand.u32 %v2292, 4294901760
    %3112 = vmatmul.mubr.f32.gmra.mrb[0].mxu0 %v3111
    %v3113 = vpop.f32.mrb[0].mxu0
    %v3114 = vadd.f32 %v2993, %v3113
    %v3115 = vpop.f32.mrb[0].mxu0
    %3116 = vmatprep.mubr.f32.mxu0 0.0
    %v3117 = vand.u32 %v2295, 4294901760
    %3118 = vmatmul.mubr.f32.gmra.mrb[0].mxu0 %v3117
    %v3119 = vpop.f32.mrb[0].mxu0
    %v3120 = vadd.f32 %v2999, %v3119
    %v3121 = vpop.f32.mrb[0].mxu0
    %3122 = vmatprep.mubr.f32.mxu0 0.0
    %v3123 = vand.u32 %v2298, 4294901760
    %3124 = vmatmul.mubr.f32.gmra.mrb[0].mxu0 %v3123
    %v3125 = vpop.f32.mrb[0].mxu0
    %v3126 = vadd.f32 %v3005, %v3125
    %v3127 = vpop.f32.mrb[0].mxu0
    %3128 = vmatprep.mubr.f32.mxu0 0.0
    %v3129 = vand.u32 %v2301, 4294901760
    %3130 = vmatmul.mubr.f32.gmra.mrb[0].mxu0 %v3129
    %v3131 = vpop.f32.mrb[0].mxu0
    %v3132 = vadd.f32 %v3011, %v3131
    %v3133 = vpop.f32.mrb[0].mxu0
    %3134 = vmatprep.mubr.f32.mxu0 0.0
    %v3135 = vand.u32 %v2304, 4294901760
    %3136 = vmatmul.mubr.f32.gmra.mrb[0].mxu0 %v3135
    %v3137 = vpop.f32.mrb[0].mxu0
    %v3138 = vadd.f32 %v3017, %v3137
    %v3139 = vpop.f32.mrb[0].mxu0
    %3140 = vmatprep.mubr.f32.mxu0 0.0
    %v3141 = vand.u32 %v2307, 4294901760
    %3142 = vmatmul.mubr.f32.gmra.mrb[0].mxu0 %v3141
    %v3143 = vpop.f32.mrb[0].mxu0
    %v3144 = vadd.f32 %v3023, %v3143
    %v3145 = vpop.f32.mrb[0].mxu0
    %3146 = vdwg.mxu0
    %v3147 = vadd.f32 %v2240, %v2246
    %v3148 = vadd.f32 %v3102, %v3108
    %v3149 = vadd.f32 %v3147, %v2252
    %v3150 = vadd.f32 %v3148, %v3114
    %v3151 = vadd.f32 %v3149, %v2258
    %v3152 = vadd.f32 %v3150, %v3120
    %v3153 = vadd.f32 %v3151, %v2264
    %v3154 = vadd.f32 %v3152, %v3126
    %v3155 = vadd.f32 %v3153, %v2270
    %v3156 = vadd.f32 %v3154, %v3132
    %v3157 = vadd.f32 %v3155, %v2276
    %v3158 = vadd.f32 %v3156, %v3138
    %v3159 = vadd.f32 %v3157, %v2282
    %v3160 = vadd.f32 %v3158, %v3144
    %v3161 = vmul.f32 %v3159, 0.125
    %v3162 = vmul.f32 %v3160, 0.125
    %v3163 = vsub.f32 %v2240, %v3161
    %v3164 = vsub.f32 %v3102, %v3162
    %v3165 = vsub.f32 %v2246, %v3161
    %v3166 = vsub.f32 %v3108, %v3162
    %v3167 = vsub.f32 %v2252, %v3161
    %v3168 = vsub.f32 %v3114, %v3162
    %v3169 = vsub.f32 %v2258, %v3161
    %v3170 = vsub.f32 %v3120, %v3162
    %v3171 = vsub.f32 %v2264, %v3161
    %v3172 = vsub.f32 %v3126, %v3162
    %v3173 = vsub.f32 %v2270, %v3161
    %v3174 = vsub.f32 %v3132, %v3162
    %v3175 = vsub.f32 %v2276, %v3161
    %v3176 = vsub.f32 %v3138, %v3162
    %v3177 = vsub.f32 %v2282, %v3161
    %v3178 = vsub.f32 %v3144, %v3162
    %v3179 = vmul.f32 %v3163, %v3163
    %v3180 = vmul.f32 %v3164, %v3164
    %v3181 = vadd.f32 %v3163, %v3165
    %v3182 = vadd.f32 %v3164, %v3166
    %v3183 = vmul.f32 %v3165, %v3165
    %v3184 = vmul.f32 %v3166, %v3166
    %v3185 = vadd.f32 %v3179, %v3183
    %v3186 = vadd.f32 %v3180, %v3184
    %v3187 = vadd.f32 %v3181, %v3167
    %v3188 = vadd.f32 %v3182, %v3168
    %v3189 = vmul.f32 %v3167, %v3167
    %v3190 = vmul.f32 %v3168, %v3168
    %v3191 = vadd.f32 %v3185, %v3189
    %v3192 = vadd.f32 %v3186, %v3190
    %v3193 = vadd.f32 %v3187, %v3169
    %v3194 = vadd.f32 %v3188, %v3170
    %v3195 = vmul.f32 %v3169, %v3169
    %v3196 = vmul.f32 %v3170, %v3170
    %v3197 = vadd.f32 %v3191, %v3195
    %v3198 = vadd.f32 %v3192, %v3196
    %v3199 = vadd.f32 %v3193, %v3171
    %v3200 = vadd.f32 %v3194, %v3172
    %v3201 = vmul.f32 %v3171, %v3171
    %v3202 = vmul.f32 %v3172, %v3172
    %v3203 = vadd.f32 %v3197, %v3201
    %v3204 = vadd.f32 %v3198, %v3202
    %v3205 = vadd.f32 %v3199, %v3173
    %v3206 = vadd.f32 %v3200, %v3174
    %v3207 = vmul.f32 %v3173, %v3173
    %v3208 = vmul.f32 %v3174, %v3174
    %v3209 = vadd.f32 %v3203, %v3207
    %v3210 = vadd.f32 %v3204, %v3208
    %v3211 = vadd.f32 %v3205, %v3175
    %v3212 = vadd.f32 %v3206, %v3176
    %v3213 = vmul.f32 %v3175, %v3175
    %v3214 = vmul.f32 %v3176, %v3176
    %v3215 = vadd.f32 %v3209, %v3213
    %v3216 = vadd.f32 %v3210, %v3214
    %v3217 = vadd.f32 %v3211, %v3177
    %v3218 = vadd.f32 %v3212, %v3178
    %v3219 = vmul.f32 %v3177, %v3177
    %v3220 = vmul.f32 %v3178, %v3178
    %v3221 = vadd.f32 %v3215, %v3219
    %v3222 = vadd.f32 %v3216, %v3220
    %vm3223 = vcmask 48128
    %v3224 = vsel %vm3223, %v3217, 0.0
    %3225 = vadd.xlane.f32.xlu0 %v3224
    %v3226 = vpop.xlane.xlu0 %3225
    %v3227 = vsel %vm3223, %v3218, 0.0
    %3228 = vadd.xlane.f32.xlu0 %v3227
    %v3229 = vpop.xlane.xlu0 %3228
    %v3230 = vrot.slane %v3226, 4
    %v3231 = vadd.f32 %v3226, %v3230
    %v3232 = vrot.slane %v3231, 2
    %v3233 = vadd.f32 %v3231, %v3232
    %v3234 = vrot.slane %v3233, 1
    %v3235 = vadd.f32 %v3233, %v3234
    %v3236 = vrot.slane %v3229, 4
    %v3237 = vadd.f32 %v3229, %v3236
    %v3238 = vrot.slane %v3237, 2
    %v3239 = vadd.f32 %v3237, %v3238
    %v3240 = vrot.slane %v3239, 1
    %v3241 = vadd.f32 %v3239, %v3240
    %v3242 = vsel %vm3223, %v3221, 0.0
    %3243 = vadd.xlane.f32.xlu0 %v3242
    %v3244 = vpop.xlane.xlu0 %3243
    %v3245 = vsel %vm3223, %v3222, 0.0
    %3246 = vadd.xlane.f32.xlu0 %v3245
    %v3247 = vpop.xlane.xlu0 %3246
    %v3248 = vrot.slane %v3244, 4
    %v3249 = vadd.f32 %v3244, %v3248
    %v3250 = vrot.slane %v3249, 2
    %v3251 = vadd.f32 %v3249, %v3250
    %v3252 = vrot.slane %v3251, 1
    %v3253 = vadd.f32 %v3251, %v3252
    %v3254 = vrot.slane %v3247, 4
    %v3255 = vadd.f32 %v3247, %v3254
    %v3256 = vrot.slane %v3255, 2
    %v3257 = vadd.f32 %v3255, %v3256
    %v3258 = vrot.slane %v3257, 1
    %v3259 = vadd.f32 %v3257, %v3258
    %v3260 = vmul.f32 %v3235, %v3235
    %v3261 = vmul.f32 %v3241, %v3241
    %v3262 = vmul.f32 %v3260, 0.0026041667
    %v3263 = vmul.f32 %v3261, 0.0026041667
    %v3264 = vsub.f32 %v3253, %v3262
    %v3265 = vsub.f32 %v3259, %v3263
    %v3266 = vmul.f32 %v3264, 0.002610966
    %v3267 = vmul.f32 %v3265, 0.002610966
    %v3268 = vmax.f32 %v3266, 0.0
    %v3269 = vmax.f32 %v3267, 0.0
    %v3270 = vrsqrt.pop %v3268
    %v3271 = vmul.f32 %v3268, %v3270
    %vm3272 = vcmp.eq.f32.partialorder %v3268, inf
    %v3273 = vsel %vm3272, %v3268, %v3271
    %vm3274 = vcmp.eq.f32.partialorder %v3268, 0.0
    %v3275 = vand.u32 %v3268, 2147483648
    %v3276 = vsel %vm3274, %v3275, %v3273
    %v3277 = vrsqrt.pop %v3269
    %v3278 = vmul.f32 %v3269, %v3277
    %vm3279 = vcmp.eq.f32.partialorder %v3269, inf
    %v3280 = vsel %vm3279, %v3269, %v3278
    %vm3281 = vcmp.eq.f32.partialorder %v3269, 0.0
    %v3282 = vand.u32 %v3269, 2147483648
    %v3283 = vsel %vm3281, %v3282, %v3280
    %v3284 = vadd.f32 %v3276, 1e-05
    %v3285 = vadd.f32 %v3283, 1e-05
    %v3286 = vrcp.pop %v3284
    %v3287 = vmul.f32 1.0, %v3286
    %v3288 = vrcp.pop %v3285
    %v3289 = vmul.f32 1.0, %v3288
    %v3290 = vld [vmem:[%s3] sm:$0x1]
    %v3291 = vmul.f32 %v3290, %v3287
    %v3292 = vmul.f32 %v3290, %v3289
    %v3293 = vld [vmem:[%s4] sm:$0x1]
    %v3296 = vlaneseq
    %v3297 = vshrl.u32 %v3296, 7
    %v3298 = vsub.s32 0, %v3297
    %v3299 = vrot.slane %v3291, %v3298
    %v3300 = vlaneseq
    %v3301 = vshrl.u32 %v3300, 7
    %v3302 = vsub.s32 0, %v3301
    %v3303 = vrot.slane %v3292, %v3302
    %v3306 = vmul.f32 %v3163, %v3299
    %v3307 = vmul.f32 %v3164, %v3303
    %v3309 = vlaneseq
    %v3310 = vshrl.u32 %v3309, 7
    %v3311 = vsub.s32 0, %v3310
    %v3312 = vrot.slane %v3293, %v3311
    %v3314 = vadd.f32 %v3306, %v3312
    %v3315 = vadd.f32 %v3307, %v3312
    %v3316 = vmul.f32 %v3165, %v3299
    %v3317 = vmul.f32 %v3166, %v3303
    %v3318 = vadd.f32 %v3316, %v3312
    %v3319 = vadd.f32 %v3317, %v3312
    %v3320 = vmul.f32 %v3167, %v3299
    %v3321 = vmul.f32 %v3168, %v3303
    %v3322 = vadd.f32 %v3320, %v3312
    %v3323 = vadd.f32 %v3321, %v3312
    %v3324 = vmul.f32 %v3169, %v3299
    %v3325 = vmul.f32 %v3170, %v3303
    %v3326 = vadd.f32 %v3324, %v3312
    %v3327 = vadd.f32 %v3325, %v3312
    %v3328 = vmul.f32 %v3171, %v3299
    %v3329 = vmul.f32 %v3172, %v3303
    %v3330 = vadd.f32 %v3328, %v3312
    %v3331 = vadd.f32 %v3329, %v3312
    %v3332 = vmul.f32 %v3173, %v3299
    %v3333 = vmul.f32 %v3174, %v3303
    %v3334 = vadd.f32 %v3332, %v3312
    %v3335 = vadd.f32 %v3333, %v3312
    %v3336 = vmul.f32 %v3175, %v3299
    %v3337 = vmul.f32 %v3176, %v3303
    %v3338 = vadd.f32 %v3336, %v3312
    %v3339 = vadd.f32 %v3337, %v3312
    %v3340 = vmul.f32 %v3177, %v3299
    %v3341 = vmul.f32 %v3178, %v3303
    %v3342 = vadd.f32 %v3340, %v3312
    %v3343 = vadd.f32 %v3341, %v3312
    %3346 = vrot.lane.b32.xlu0 %v3318, 6
    %v3347 = vpop.permute.xlu0 %3346
    %3348 = vrot.lane.b32.xlu0 %v3319, 6
    %v3349 = vpop.permute.xlu0 %3348
    %3354 = vrot.lane.b32.xlu0 %v3322, 12
    %v3355 = vpop.permute.xlu0 %3354
    %3356 = vrot.lane.b32.xlu0 %v3323, 12
    %v3357 = vpop.permute.xlu0 %3356
    %3362 = vrot.lane.b32.xlu0 %v3326, 18
    %v3363 = vpop.permute.xlu0 %3362
    %3364 = vrot.lane.b32.xlu0 %v3327, 18
    %v3365 = vpop.permute.xlu0 %3364
    %3370 = vrot.lane.b32.xlu0 %v3330, 24
    %v3371 = vpop.permute.xlu0 %3370
    %3372 = vrot.lane.b32.xlu0 %v3331, 24
    %v3373 = vpop.permute.xlu0 %3372
    %3378 = vrot.lane.b32.xlu0 %v3334, 30
    %v3379 = vpop.permute.xlu0 %3378
    %3380 = vrot.lane.b32.xlu0 %v3335, 30
    %v3381 = vpop.permute.xlu0 %3380
    %3386 = vrot.lane.b32.xlu0 %v3338, 36
    %v3387 = vpop.permute.xlu0 %3386
    %3388 = vrot.lane.b32.xlu0 %v3339, 36
    %v3389 = vpop.permute.xlu0 %3388
    %3394 = vrot.lane.b32.xlu0 %v3342, 42
    %v3395 = vpop.permute.xlu0 %3394
    %3396 = vrot.lane.b32.xlu0 %v3343, 42
    %v3397 = vpop.permute.xlu0 %3396
    %v3400 = vsel %vm3223, %v3314, %v3347
    %v3401 = vsel %vm3223, %v3315, %v3349
    %vm3402 = vcmask 97280
    %v3403 = vsel %vm3402, %v3400, %v3355
    %v3404 = vsel %vm3402, %v3401, %v3357
    %vm3405 = vcmask 146432
    %v3406 = vsel %vm3405, %v3403, %v3363
    %v3407 = vsel %vm3405, %v3404, %v3365
    %vm3408 = vcmask 195584
    %v3409 = vsel %vm3408, %v3406, %v3371
    %v3410 = vsel %vm3408, %v3407, %v3373
    %vm3411 = vcmask 244736
    %v3412 = vsel %vm3411, %v3409, %v3379
    %v3413 = vsel %vm3411, %v3410, %v3381
    %vm3414 = vcmask 293888
    %v3415 = vsel %vm3414, %v3412, %v3387
    %v3416 = vsel %vm3414, %v3413, %v3389
    %vm3417 = vcmask 343040
    %v3418 = vsel %vm3417, %v3415, %v3395
    %v3419 = vsel %vm3417, %v3416, %v3397
    %vm3420 = vcmask 392192
    %3421 = vst.msk [vmem:[#allocation2] sm:$0xff] %vm3420, %v3418
    %3422 = vst.msk [vmem:[#allocation2 + $0x8] sm:$0xff] %vm3420, %v3419
    %3423 = vrot.lane.b32.xlu0 %v595, 124
    %v3424 = vpop.permute.xlu0 %3423
    %3425 = vrot.lane.b32.xlu0 %v1135, 124
    %v3426 = vpop.permute.xlu0 %3425
    %vm3429 = vcmask 15360
    %3430 = vst.msk [vmem:[%s5] sm:$0xff] %vm3429, %v3424
    %3431 = vst.msk [vmem:[%s5 + $0x8] sm:$0xff] %vm3429, %v3426
    // Predicated region
    $region22: #{tpu_custom_call.1} parent=1 // pred_check
      _
    $region23: #{tpu_custom_call.1} parent=1 // pred_check_branch
      %3433 = sbr.rel (0) target = $region25
    $region24: #{tpu_custom_call.1} parent=1 // pred_region
      _
    $region25: #{tpu_custom_call.1} parent=1 // pred_fallthru
      _
    // Predicated region
    $region26: #{tpu_custom_call.1} parent=1 // pred_check
      _
    $region27: #{tpu_custom_call.1} parent=1 // pred_check_branch
      %3435 = sbr.rel (0) target = $region29
    $region28: #{tpu_custom_call.1} parent=1 // pred_region
      %s3437 = ssub.s32 256, 256
      %3438 = vsyncadd [#allocation3], %s3437
      %s3439 = sshll.u32 [#allocation2], 4
      %s3440 = int_to_ptr.vmem [resolvable:$true] %s3439
      %3445 = dma.vmem_to_hbm [thread:$0]  %s3440, 256, %s6, [#allocation3], 128, 128, 8
    $region29: #{tpu_custom_call.1} parent=1 // pred_fallthru
      _
    // Predicated region
    $region30: #{tpu_custom_call.1} parent=1 // pred_check
      _
    $region31: #{tpu_custom_call.1} parent=1 // pred_check_branch
      %3447 = sbr.rel (0) target = $region33
    $region32: #{tpu_custom_call.1} parent=1 // pred_region
      _
    $region33: #{tpu_custom_call.1} parent=1 // pred_fallthru
      _
    // Predicated region
    $region34: #{tpu_custom_call.1} parent=1 // pred_check
      _
    $region35: #{tpu_custom_call.1} parent=1 // pred_check_branch
      %3449 = sbr.rel (0) target = $region37
    $region36: #{tpu_custom_call.1} parent=1 // pred_region
      %3450 = dma.done [#allocation3], 256
    $region37: #{tpu_custom_call.1} parent=1 // pred_fallthru
      _
    %3451 = vsyncpa [#allocation3], 1

</llo_original>
